<compile_context>
chip_gen: v7x
topology: tpu7x:2x2x1
jax: 0.10.0
libtpu: 0.0.40
codegen_flags: <defaults>
</compile_context>

<pallas_src>
import functools

import jax
import jax.numpy as jnp
from jax.experimental import pallas as pl
from jax.experimental.pallas import tpu as pltpu

LANE = 128


def _round_up(x, m):
    return (x + m - 1) // m * m


def _pick_row_tile(m):
    """Largest row tile (multiple of 8, <= 512) that still gives >= 2 grid steps."""
    for t in (512, 256, 128, 64, 32, 16, 8):
        if m >= 2 * t:
            return t
    return 8


def _vmem_limit(need_bytes):
    """Scoped-VMEM limit derived from tile residency (+ headroom), v7x-safe cap."""
    return int(min(max(need_bytes + (16 << 20), 24 << 20), 48 << 20))


# ---------------------------------------------------------------------------
# Pallas kernels
# ---------------------------------------------------------------------------

def _conv_relu_pool_kernel(p_ref, w_ref, b_ref, o_ref):
    """Fused im2col-GEMM conv + bias + ReLU + 2x2 max-pool.

    p_ref: (4, tm, Kp) bf16 - one patch slab per 2x2 pool-window position.
    w_ref: (Kp, Cp) bf16;  b_ref: (1, Cp) f32;  o_ref: (tm, Cp) bf16 pooled act.
    max_i relu(a_i + b) == relu(max_i(a_i) + b)  (both monotone), so pool first.
    The window max is interleaved with the 4 matmuls -> 2 live f32 accumulators.
    """
    w = w_ref[...]
    a = jnp.dot(p_ref[0], w, preferred_element_type=jnp.float32)
    a = jnp.maximum(a, jnp.dot(p_ref[1], w, preferred_element_type=jnp.float32))
    a = jnp.maximum(a, jnp.dot(p_ref[2], w, preferred_element_type=jnp.float32))
    a = jnp.maximum(a, jnp.dot(p_ref[3], w, preferred_element_type=jnp.float32))
    o_ref[...] = jnp.maximum(a + b_ref[...], 0.0).astype(o_ref.dtype)


def _fc_tail_kernel(x_ref, w1_ref, b1_ref, w2_ref, b2_ref, logp_ref, logits_ref):
    """Fused fc1 + ReLU + fc + log_softmax. Hidden h stays on-chip, f32 epilogue."""
    h = jnp.dot(x_ref[...], w1_ref[...], preferred_element_type=jnp.float32)
    h = jnp.maximum(h + b1_ref[...], 0.0)
    logits = jnp.dot(h.astype(jnp.bfloat16), w2_ref[...],
                     preferred_element_type=jnp.float32) + b2_ref[...]
    m = jnp.max(logits, axis=-1, keepdims=True)
    shifted = logits - m
    lse = jnp.log(jnp.sum(jnp.exp(shifted), axis=-1, keepdims=True))
    logits_ref[...] = logits
    logp_ref[...] = shifted - lse


# ---------------------------------------------------------------------------
# Layer wrappers
# ---------------------------------------------------------------------------

def conv_relu_pool(x_nhwc, w_gemm, b_row, kh=5, kw=5):
    """x: (N, H, W, C) NHWC with C = REAL input channels (no lane padding).

    Returns pooled activations (N, PH, PW, Cp) bf16 with Cp = 128-padded channels.
    """
    n, h, w, c = x_nhwc.shape
    k_pad, c_pad = w_gemm.shape
    oh, ow = h - kh + 1, w - kw + 1
    ph, pw = oh // 2, ow // 2
    m = n * ph * pw
    k = kh * kw * c
    tm = _pick_row_tile(m)
    m_pad = _round_up(m, tm)

    # im2col patches, one slab per 2x2 pool-window position; K order (kh, kw, c)
    # matches the pre-permuted GEMM weight rows.
    # TODO(synk): move patch assembly in-kernel at training batch sizes to avoid
    # the ~25x activation HBM duplication built here by XLA.
    slabs = []
    for dy in range(2):
        for dx in range(2):
            cols = [x_nhwc[:, i + dy:i + dy + 2 * ph:2, j + dx:j + dx + 2 * pw:2, :]
                    for i in range(kh) for j in range(kw)]
            slabs.append(jnp.stack(cols, axis=3).reshape(m, k))
    patches = jnp.stack(slabs, axis=0).astype(jnp.bfloat16)          # (4, m, k)
    patches = jnp.pad(patches, ((0, 0), (0, m_pad - m), (0, k_pad - k)))

    need = (2 * 4 * tm * k_pad * 2      # double-buffered patch tiles (bf16)
            + 2 * k_pad * c_pad * 2     # resident weight (conservatively x2)
            + 2 * tm * c_pad * 2        # double-buffered output tile
            + 2 * c_pad * 4)            # bias
    out = pl.pallas_call(
        _conv_relu_pool_kernel,
        out_shape=jax.ShapeDtypeStruct((m_pad, c_pad), jnp.bfloat16),
        grid=(m_pad // tm,),
        in_specs=[pl.BlockSpec((4, tm, k_pad), lambda i: (0, i, 0)),
                  pl.BlockSpec((k_pad, c_pad), lambda i: (0, 0)),
                  pl.BlockSpec((1, c_pad), lambda i: (0, 0))],
        out_specs=pl.BlockSpec((tm, c_pad), lambda i: (i, 0)),
        compiler_params=pltpu.CompilerParams(
            dimension_semantics=("parallel",),
            vmem_limit_bytes=_vmem_limit(need)),
    )(patches, w_gemm, b_row)
    return out[:m].reshape(n, ph, pw, c_pad)


def fc_tail(feat, w1, b1, w2, b2):
    """Fused Linear(K,512)+ReLU -> Linear(512, Ncls_pad) -> log_softmax, row-tiled."""
    b_sz, k = feat.shape
    hidden = w1.shape[1]
    ncls = w2.shape[1]
    tb = _pick_row_tile(b_sz)
    bp = _round_up(b_sz, tb)
    if bp > b_sz:
        feat = jnp.pad(feat, ((0, bp - b_sz), (0, 0)))

    need = (2 * tb * k * 2              # double-buffered activation tile (bf16)
            + 2 * k * hidden * 2        # resident fc1 weight (conservatively x2)
            + 2 * hidden * ncls * 2     # resident fc weight
            + 2 * 2 * tb * ncls * 4     # two f32 output tiles, double-buffered
            + 2 * (hidden + ncls) * 4)  # biases
    log_probs, logits = pl.pallas_call(
        _fc_tail_kernel,
        out_shape=(jax.ShapeDtypeStruct((bp, ncls), jnp.float32),
                   jax.ShapeDtypeStruct((bp, ncls), jnp.float32)),
        grid=(bp // tb,),
        in_specs=[pl.BlockSpec((tb, k), lambda i: (i, 0)),
                  pl.BlockSpec((k, hidden), lambda i: (0, 0)),
                  pl.BlockSpec((1, hidden), lambda i: (0, 0)),
                  pl.BlockSpec((hidden, ncls), lambda i: (0, 0)),
                  pl.BlockSpec((1, ncls), lambda i: (0, 0))],
        out_specs=(pl.BlockSpec((tb, ncls), lambda i: (i, 0)),
                   pl.BlockSpec((tb, ncls), lambda i: (i, 0))),
        compiler_params=pltpu.CompilerParams(
            dimension_semantics=("parallel",),
            vmem_limit_bytes=_vmem_limit(need)),
    )(feat, w1, b1, w2, b2)
    return log_probs[:b_sz], logits[:b_sz]


# ---------------------------------------------------------------------------
# One-time parameter preparation (GEMM layout, lane padding, bf16 cast)
# ---------------------------------------------------------------------------

def prepare_params(params, num_classes):
    c1w, c1b, c2w, c2b, f1w, f1b, fw, fb = params

    # conv1: (O, I, KH, KW) -> (KH*KW*I, O); K and O padded to 128 lanes.
    cin, c1 = c1w.shape[1], c1w.shape[0]
    c1p = _round_up(c1, LANE)
    k1 = 25 * cin
    k1p = _round_up(k1, LANE)
    w1 = jnp.transpose(c1w, (2, 3, 1, 0)).reshape(k1, c1)
    w1 = jnp.pad(w1, ((0, k1p - k1), (0, c1p - c1))).astype(jnp.bfloat16)
    b1 = jnp.pad(c1b, (0, c1p - c1)).astype(jnp.float32).reshape(1, c1p)

    # conv2: K built from the 32 REAL conv1 channels only (no channel padding):
    # K2 = 25*32 = 800, padded to 896 (was 3200 when padded channels were fed).
    c2, c2in = c2w.shape[0], c2w.shape[1]
    c2p = _round_up(c2, LANE)
    k2 = 25 * c2in
    k2p = _round_up(k2, LANE)
    w2 = jnp.transpose(c2w, (2, 3, 1, 0)).reshape(k2, c2)
    w2 = jnp.pad(w2, ((0, k2p - k2), (0, c2p - c2))).astype(jnp.bfloat16)
    b2 = jnp.pad(c2b, (0, c2p - c2)).astype(jnp.float32).reshape(1, c2p)

    # fc1: torch flatten is NCHW order (c, h, w); we feed the NHWC flatten of the
    # 64 REAL conv2 channels, so permute the weight rows once and pad K to a lane
    # multiple (1600 -> 1664, was 3200 with padded channels).
    hidden = f1w.shape[0]
    hw = f1w.shape[1] // c2
    side = int(round(hw ** 0.5))
    kf = side * side * c2
    kfp = _round_up(kf, LANE)
    wf1 = f1w.reshape(hidden, c2, side, side)
    wf1 = jnp.transpose(wf1, (2, 3, 1, 0)).reshape(kf, hidden)     # rows in (h, w, c)
    wf1 = jnp.pad(wf1, ((0, kfp - kf), (0, 0))).astype(jnp.bfloat16)
    bf1 = f1b.astype(jnp.float32).reshape(1, hidden)

    # final fc: classes padded to 128 lanes; padded classes get -1e30 bias so they
    # contribute zero softmax mass (only valid while the kernel epilogue is f32).
    ncp = _round_up(num_classes, LANE)
    wfc = jnp.pad(fw.T, ((0, 0), (0, ncp - num_classes))).astype(jnp.bfloat16)
    bfc = jnp.concatenate(
        [fb.astype(jnp.float32),
         jnp.full((ncp - num_classes,), -1e30, jnp.float32)]).reshape(1, ncp)

    return (w1, b1, w2, b2, wf1, bf1, wfc, bfc)


@functools.partial(jax.jit, static_argnames=("num_classes",))
def fedavg_cnn_forward(x_nchw, prepared, *, num_classes=10):
    w1, b1, w2, b2, wf1, bf1, wfc, bfc = prepared
    x = jnp.transpose(x_nchw, (0, 2, 3, 1)).astype(jnp.bfloat16)   # NCHW -> NHWC
    n = x.shape[0]
    # FedAvgCNN fixes conv widths at 32 / 64; slice the lane-padded pallas outputs
    # back to the REAL channels before they feed the next GEMM (K dedup).
    y = conv_relu_pool(x, w1, b1)              # conv1+ReLU+pool -> (n, 14, 14, 128)
    y = conv_relu_pool(y[..., :32], w2, b2)    # conv2+ReLU+pool -> (n, 5, 5, 128)
    feat = y[..., :64].reshape(n, -1)          # NHWC flatten of the 64 real channels
    feat = jnp.pad(feat, ((0, 0), (0, wf1.shape[0] - feat.shape[1])))
    log_probs, logits = fc_tail(feat, wf1, bf1, wfc, bfc)
    return log_probs[:, :num_classes], logits[:, :num_classes]


# ---------------------------------------------------------------------------
# Pure-JAX reference (PyTorch semantics) for validation
# ---------------------------------------------------------------------------

def reference_forward(x, params):
    c1w, c1b, c2w, c2b, f1w, f1b, fw, fb = params
    dn = ("NCHW", "OIHW", "NCHW")
    y = jax.lax.conv_general_dilated(x, c1w, (1, 1), "VALID", dimension_numbers=dn)
    y = jax.nn.relu(y + c1b[None, :, None, None])
    y = jax.lax.reduce_window(y, -jnp.inf, jax.lax.max, (1, 1, 2, 2), (1, 1, 2, 2), "VALID")
    y = jax.lax.conv_general_dilated(y, c2w, (1, 1), "VALID", dimension_numbers=dn)
    y = jax.nn.relu(y + c2b[None, :, None, None])
    y = jax.lax.reduce_window(y, -jnp.inf, jax.lax.max, (1, 1, 2, 2), (1, 1, 2, 2), "VALID")
    feat = y.reshape(y.shape[0], -1)
    h = jax.nn.relu(feat @ f1w.T + f1b)
    logits = h @ fw.T + fb
    return jax.nn.log_softmax(logits, axis=-1), logits


# ---------------------------------------------------------------------------
# Driver
# ---------------------------------------------------------------------------

if __name__ == "__main__":
    key = jax.random.PRNGKey(0)
    ks = jax.random.split(key, 9)

    # CIFAR-style input: (N, C, H, W) = (2, 3, 32, 32) -> flatten dim = 1600
    N, Cin, H, W = 2, 3, 32, 32
    num_classes = 10
    dim = 1600

    x = jax.random.normal(ks[0], (N, Cin, H, W), jnp.float32)

    def init(k, shape, fan_in):
        bound = 1.0 / (fan_in ** 0.5)
        return jax.random.uniform(k, shape, jnp.float32, -bound, bound)

    params = (
        init(ks[1], (32, Cin, 5, 5), Cin * 25),   # conv1 weight (OIHW)
        init(ks[2], (32,), Cin * 25),             # conv1 bias
        init(ks[3], (64, 32, 5, 5), 32 * 25),     # conv2 weight
        init(ks[4], (64,), 32 * 25),              # conv2 bias
        init(ks[5], (512, dim), dim),             # fc1 weight (out, in)
        init(ks[6], (512,), dim),                 # fc1 bias
        init(ks[7], (num_classes, 512), 512),     # fc weight
        init(ks[8], (num_classes,), 512),         # fc bias
    )

    prepared = prepare_params(params, num_classes)
    log_probs, logits = fedavg_cnn_forward(x, prepared, num_classes=num_classes)
    jax.block_until_ready((log_probs, logits))

    assert log_probs.shape == (N, num_classes)
    assert logits.shape == (N, num_classes)
    # log_softmax sanity: rows of exp(log_probs) sum to 1
    assert jnp.allclose(jnp.exp(log_probs).sum(-1), 1.0, atol=1e-4)

    # Compare against pure-JAX f32 reference (bf16 MXU inputs -> loose tolerance).
    ref_logp, ref_logits = reference_forward(x, params)
    assert jnp.allclose(logits, ref_logits, atol=5e-2)
    assert jnp.allclose(log_probs, ref_logp, atol=5e-2)

    print("KERNEL_OK")
</pallas_src>

<mosaic_0001>
module attributes {stable_mosaic.version = 11 : i64} {
  func.func @_conv_relu_pool_kernel(%arg0: i32, %arg1: memref<4x128x128xbf16, #tpu.memory_space<vmem>>, %arg2: memref<128x128xbf16, #tpu.memory_space<vmem>>, %arg3: memref<1x128xf32, #tpu.memory_space<vmem>>, %arg4: memref<128x128xbf16, #tpu.memory_space<vmem>>) attributes {dimension_semantics = [#tpu.dimension_semantics<parallel>], iteration_bounds = array<i64: 4>, scalar_prefetch = 0 : i64, scratch_operands = 0 : i64, tpu.core_type = #tpu.core_type<tc>, window_params = [{transform_indices = @transform_0, window_bounds = array<i64: 4, 128, 128>}, {pipeline_mode = #tpu.pipeline_mode<synchronous>, transform_indices = @transform_1, window_bounds = array<i64: 128, 128>}, {pipeline_mode = #tpu.pipeline_mode<synchronous>, transform_indices = @transform_2, window_bounds = array<i64: 1, 128>}, {transform_indices = @transform_3, window_bounds = array<i64: 128, 128>}]} {
    %c0 = arith.constant 0 : index
    %c0_0 = arith.constant 0 : index
    %0 = vector.load %arg2[%c0, %c0_0] : memref<128x128xbf16, #tpu.memory_space<vmem>>, vector<128x128xbf16>
    %c0_1 = arith.constant 0 : index
    %c0_2 = arith.constant 0 : index
    %c0_3 = arith.constant 0 : index
    %1 = vector.load %arg1[%c0_1, %c0_2, %c0_3] : memref<4x128x128xbf16, #tpu.memory_space<vmem>>, vector<1x128x128xbf16>
    %2 = vector.shape_cast %1 : vector<1x128x128xbf16> to vector<128x128xbf16>
    %cst = arith.constant dense<0.000000e+00> : vector<128x128xf32>
    %3 = tpu.matmul %2, %0, %cst {dimension_numbers = #tpu.dot_dimension_numbers<[1], [0], [0], [1], [0, 0, 1, 1], [], []>} : vector<128x128xbf16>, vector<128x128xbf16>, vector<128x128xf32> -> vector<128x128xf32>
    %c1 = arith.constant 1 : index
    %c0_4 = arith.constant 0 : index
    %c0_5 = arith.constant 0 : index
    %4 = vector.load %arg1[%c1, %c0_4, %c0_5] : memref<4x128x128xbf16, #tpu.memory_space<vmem>>, vector<1x128x128xbf16>
    %5 = vector.shape_cast %4 : vector<1x128x128xbf16> to vector<128x128xbf16>
    %cst_6 = arith.constant dense<0.000000e+00> : vector<128x128xf32>
    %6 = tpu.matmul %5, %0, %cst_6 {dimension_numbers = #tpu.dot_dimension_numbers<[1], [0], [0], [1], [0, 0, 1, 1], [], []>} : vector<128x128xbf16>, vector<128x128xbf16>, vector<128x128xf32> -> vector<128x128xf32>
    %7 = arith.maximumf %3, %6 : vector<128x128xf32>
    %c2 = arith.constant 2 : index
    %c0_7 = arith.constant 0 : index
    %c0_8 = arith.constant 0 : index
    %8 = vector.load %arg1[%c2, %c0_7, %c0_8] : memref<4x128x128xbf16, #tpu.memory_space<vmem>>, vector<1x128x128xbf16>
    %9 = vector.shape_cast %8 : vector<1x128x128xbf16> to vector<128x128xbf16>
    %cst_9 = arith.constant dense<0.000000e+00> : vector<128x128xf32>
    %10 = tpu.matmul %9, %0, %cst_9 {dimension_numbers = #tpu.dot_dimension_numbers<[1], [0], [0], [1], [0, 0, 1, 1], [], []>} : vector<128x128xbf16>, vector<128x128xbf16>, vector<128x128xf32> -> vector<128x128xf32>
    %11 = arith.maximumf %7, %10 : vector<128x128xf32>
    %c3 = arith.constant 3 : index
    %c0_10 = arith.constant 0 : index
    %c0_11 = arith.constant 0 : index
    %12 = vector.load %arg1[%c3, %c0_10, %c0_11] : memref<4x128x128xbf16, #tpu.memory_space<vmem>>, vector<1x128x128xbf16>
    %13 = vector.shape_cast %12 : vector<1x128x128xbf16> to vector<128x128xbf16>
    %cst_12 = arith.constant dense<0.000000e+00> : vector<128x128xf32>
    %14 = tpu.matmul %13, %0, %cst_12 {dimension_numbers = #tpu.dot_dimension_numbers<[1], [0], [0], [1], [0, 0, 1, 1], [], []>} : vector<128x128xbf16>, vector<128x128xbf16>, vector<128x128xf32> -> vector<128x128xf32>
    %15 = arith.maximumf %11, %14 : vector<128x128xf32>
    %c0_13 = arith.constant 0 : index
    %c0_14 = arith.constant 0 : index
    %16 = vector.load %arg3[%c0_13, %c0_14] : memref<1x128xf32, #tpu.memory_space<vmem>>, vector<1x128xf32>
    %17 = vector.broadcast %16 : vector<1x128xf32> to vector<128x128xf32>
    %18 = arith.addf %15, %17 : vector<128x128xf32>
    %cst_15 = arith.constant 0.000000e+00 : f32
    %19 = vector.broadcast %cst_15 : f32 to vector<128x128xf32>
    %20 = arith.maximumf %18, %19 : vector<128x128xf32>
    %21 = arith.truncf %20 : vector<128x128xf32> to vector<128x128xbf16>
    %c0_16 = arith.constant 0 : index
    %c0_17 = arith.constant 0 : index
    %22 = vector.load %arg4[%c0_16, %c0_17] : memref<128x128xbf16, #tpu.memory_space<vmem>>, vector<128x128xbf16>
    tpu.vector_store %arg4[%c0_16, %c0_17], %21 {strides = array<i32>} : memref<128x128xbf16, #tpu.memory_space<vmem>>, vector<128x128xbf16>,
    return
  }
  func.func @transform_0(%arg0: i32) -> (i32, i32, i32) {
    %c0_i32 = arith.constant 0 : i32
    %c0_i32_0 = arith.constant 0 : i32
    %c0_i32_1 = arith.constant 0 : i32
    return %c0_i32, %arg0, %c0_i32_0 : i32, i32, i32
  }
  func.func @transform_1(%arg0: i32) -> (i32, i32) {
    %c0_i32 = arith.constant 0 : i32
    %c0_i32_0 = arith.constant 0 : i32
    %c0_i32_1 = arith.constant 0 : i32
    return %c0_i32, %c0_i32_0 : i32, i32
  }
  func.func @transform_2(%arg0: i32) -> (i32, i32) {
    %c0_i32 = arith.constant 0 : i32
    %c0_i32_0 = arith.constant 0 : i32
    %c0_i32_1 = arith.constant 0 : i32
    return %c0_i32, %c0_i32_0 : i32, i32
  }
  func.func @transform_3(%arg0: i32) -> (i32, i32) {
    %c0_i32 = arith.constant 0 : i32
    %c0_i32_0 = arith.constant 0 : i32
    return %arg0, %c0_i32 : i32, i32
  }
}

module attributes {stable_mosaic.version = 11 : i64} {
  func.func @_conv_relu_pool_kernel(%arg0: i32, %arg1: memref<4x16x896xbf16, #tpu.memory_space<vmem>>, %arg2: memref<896x128xbf16, #tpu.memory_space<vmem>>, %arg3: memref<1x128xf32, #tpu.memory_space<vmem>>, %arg4: memref<16x128xbf16, #tpu.memory_space<vmem>>) attributes {dimension_semantics = [#tpu.dimension_semantics<parallel>], iteration_bounds = array<i64: 4>, scalar_prefetch = 0 : i64, scratch_operands = 0 : i64, tpu.core_type = #tpu.core_type<tc>, window_params = [{transform_indices = @transform_0, window_bounds = array<i64: 4, 16, 896>}, {pipeline_mode = #tpu.pipeline_mode<synchronous>, transform_indices = @transform_1, window_bounds = array<i64: 896, 128>}, {pipeline_mode = #tpu.pipeline_mode<synchronous>, transform_indices = @transform_2, window_bounds = array<i64: 1, 128>}, {transform_indices = @transform_3, window_bounds = array<i64: 16, 128>}]} {
    %c0 = arith.constant 0 : index
    %c0_0 = arith.constant 0 : index
    %0 = vector.load %arg2[%c0, %c0_0] : memref<896x128xbf16, #tpu.memory_space<vmem>>, vector<896x128xbf16>
    %c0_1 = arith.constant 0 : index
    %c0_2 = arith.constant 0 : index
    %c0_3 = arith.constant 0 : index
    %1 = vector.load %arg1[%c0_1, %c0_2, %c0_3] : memref<4x16x896xbf16, #tpu.memory_space<vmem>>, vector<1x16x896xbf16>
    %2 = vector.shape_cast %1 : vector<1x16x896xbf16> to vector<16x896xbf16>
    %cst = arith.constant dense<0.000000e+00> : vector<16x128xf32>
    %3 = tpu.matmul %2, %0, %cst {dimension_numbers = #tpu.dot_dimension_numbers<[1], [0], [0], [1], [0, 0, 1, 1], [], []>} : vector<16x896xbf16>, vector<896x128xbf16>, vector<16x128xf32> -> vector<16x128xf32>
    %c1 = arith.constant 1 : index
    %c0_4 = arith.constant 0 : index
    %c0_5 = arith.constant 0 : index
    %4 = vector.load %arg1[%c1, %c0_4, %c0_5] : memref<4x16x896xbf16, #tpu.memory_space<vmem>>, vector<1x16x896xbf16>
    %5 = vector.shape_cast %4 : vector<1x16x896xbf16> to vector<16x896xbf16>
    %cst_6 = arith.constant dense<0.000000e+00> : vector<16x128xf32>
    %6 = tpu.matmul %5, %0, %cst_6 {dimension_numbers = #tpu.dot_dimension_numbers<[1], [0], [0], [1], [0, 0, 1, 1], [], []>} : vector<16x896xbf16>, vector<896x128xbf16>, vector<16x128xf32> -> vector<16x128xf32>
    %7 = arith.maximumf %3, %6 : vector<16x128xf32>
    %c2 = arith.constant 2 : index
    %c0_7 = arith.constant 0 : index
    %c0_8 = arith.constant 0 : index
    %8 = vector.load %arg1[%c2, %c0_7, %c0_8] : memref<4x16x896xbf16, #tpu.memory_space<vmem>>, vector<1x16x896xbf16>
    %9 = vector.shape_cast %8 : vector<1x16x896xbf16> to vector<16x896xbf16>
    %cst_9 = arith.constant dense<0.000000e+00> : vector<16x128xf32>
    %10 = tpu.matmul %9, %0, %cst_9 {dimension_numbers = #tpu.dot_dimension_numbers<[1], [0], [0], [1], [0, 0, 1, 1], [], []>} : vector<16x896xbf16>, vector<896x128xbf16>, vector<16x128xf32> -> vector<16x128xf32>
    %11 = arith.maximumf %7, %10 : vector<16x128xf32>
    %c3 = arith.constant 3 : index
    %c0_10 = arith.constant 0 : index
    %c0_11 = arith.constant 0 : index
    %12 = vector.load %arg1[%c3, %c0_10, %c0_11] : memref<4x16x896xbf16, #tpu.memory_space<vmem>>, vector<1x16x896xbf16>
    %13 = vector.shape_cast %12 : vector<1x16x896xbf16> to vector<16x896xbf16>
    %cst_12 = arith.constant dense<0.000000e+00> : vector<16x128xf32>
    %14 = tpu.matmul %13, %0, %cst_12 {dimension_numbers = #tpu.dot_dimension_numbers<[1], [0], [0], [1], [0, 0, 1, 1], [], []>} : vector<16x896xbf16>, vector<896x128xbf16>, vector<16x128xf32> -> vector<16x128xf32>
    %15 = arith.maximumf %11, %14 : vector<16x128xf32>
    %c0_13 = arith.constant 0 : index
    %c0_14 = arith.constant 0 : index
    %16 = vector.load %arg3[%c0_13, %c0_14] : memref<1x128xf32, #tpu.memory_space<vmem>>, vector<1x128xf32>
    %17 = vector.broadcast %16 : vector<1x128xf32> to vector<16x128xf32>
    %18 = arith.addf %15, %17 : vector<16x128xf32>
    %cst_15 = arith.constant 0.000000e+00 : f32
    %19 = vector.broadcast %cst_15 : f32 to vector<16x128xf32>
    %20 = arith.maximumf %18, %19 : vector<16x128xf32>
    %21 = arith.truncf %20 : vector<16x128xf32> to vector<16x128xbf16>
    %c0_16 = arith.constant 0 : index
    %c0_17 = arith.constant 0 : index
    %22 = vector.load %arg4[%c0_16, %c0_17] : memref<16x128xbf16, #tpu.memory_space<vmem>>, vector<16x128xbf16>
    tpu.vector_store %arg4[%c0_16, %c0_17], %21 {strides = array<i32>} : memref<16x128xbf16, #tpu.memory_space<vmem>>, vector<16x128xbf16>,
    return
  }
  func.func @transform_0(%arg0: i32) -> (i32, i32, i32) {
    %c0_i32 = arith.constant 0 : i32
    %c0_i32_0 = arith.constant 0 : i32
    %c0_i32_1 = arith.constant 0 : i32
    return %c0_i32, %arg0, %c0_i32_0 : i32, i32, i32
  }
  func.func @transform_1(%arg0: i32) -> (i32, i32) {
    %c0_i32 = arith.constant 0 : i32
    %c0_i32_0 = arith.constant 0 : i32
    %c0_i32_1 = arith.constant 0 : i32
    return %c0_i32, %c0_i32_0 : i32, i32
  }
  func.func @transform_2(%arg0: i32) -> (i32, i32) {
    %c0_i32 = arith.constant 0 : i32
    %c0_i32_0 = arith.constant 0 : i32
    %c0_i32_1 = arith.constant 0 : i32
    return %c0_i32, %c0_i32_0 : i32, i32
  }
  func.func @transform_3(%arg0: i32) -> (i32, i32) {
    %c0_i32 = arith.constant 0 : i32
    %c0_i32_0 = arith.constant 0 : i32
    return %arg0, %c0_i32 : i32, i32
  }
}

module attributes {stable_mosaic.version = 11 : i64} {
  func.func @_fc_tail_kernel(%arg0: i32, %arg1: memref<8x1664xbf16, #tpu.memory_space<vmem>>, %arg2: memref<1664x512xbf16, #tpu.memory_space<vmem>>, %arg3: memref<1x512xf32, #tpu.memory_space<vmem>>, %arg4: memref<512x128xbf16, #tpu.memory_space<vmem>>, %arg5: memref<1x128xf32, #tpu.memory_space<vmem>>, %arg6: memref<8x128xf32, #tpu.memory_space<vmem>>, %arg7: memref<8x128xf32, #tpu.memory_space<vmem>>) attributes {dimension_semantics = [#tpu.dimension_semantics<parallel>], iteration_bounds = array<i64: 1>, scalar_prefetch = 0 : i64, scratch_operands = 0 : i64, tpu.core_type = #tpu.core_type<tc>, window_params = [{transform_indices = @transform_0, window_bounds = array<i64: 8, 1664>}, {pipeline_mode = #tpu.pipeline_mode<synchronous>, transform_indices = @transform_1, window_bounds = array<i64: 1664, 512>}, {pipeline_mode = #tpu.pipeline_mode<synchronous>, transform_indices = @transform_2, window_bounds = array<i64: 1, 512>}, {pipeline_mode = #tpu.pipeline_mode<synchronous>, transform_indices = @transform_3, window_bounds = array<i64: 512, 128>}, {pipeline_mode = #tpu.pipeline_mode<synchronous>, transform_indices = @transform_4, window_bounds = array<i64: 1, 128>}, {transform_indices = @transform_5, window_bounds = array<i64: 8, 128>}, {transform_indices = @transform_6, window_bounds = array<i64: 8, 128>}]} {
    %c0 = arith.constant 0 : index
    %c0_0 = arith.constant 0 : index
    %0 = vector.load %arg1[%c0, %c0_0] : memref<8x1664xbf16, #tpu.memory_space<vmem>>, vector<8x1664xbf16>
    %c0_1 = arith.constant 0 : index
    %c0_2 = arith.constant 0 : index
    %1 = vector.load %arg2[%c0_1, %c0_2] : memref<1664x512xbf16, #tpu.memory_space<vmem>>, vector<1664x512xbf16>
    %cst = arith.constant dense<0.000000e+00> : vector<8x512xf32>
    %2 = tpu.matmul %0, %1, %cst {dimension_numbers = #tpu.dot_dimension_numbers<[1], [0], [0], [1], [0, 0, 1, 1], [], []>} : vector<8x1664xbf16>, vector<1664x512xbf16>, vector<8x512xf32> -> vector<8x512xf32>
    %c0_3 = arith.constant 0 : index
    %c0_4 = arith.constant 0 : index
    %3 = vector.load %arg3[%c0_3, %c0_4] : memref<1x512xf32, #tpu.memory_space<vmem>>, vector<1x512xf32>
    %4 = vector.broadcast %3 : vector<1x512xf32> to vector<8x512xf32>
    %5 = arith.addf %2, %4 : vector<8x512xf32>
    %cst_5 = arith.constant 0.000000e+00 : f32
    %6 = vector.broadcast %cst_5 : f32 to vector<8x512xf32>
    %7 = arith.maximumf %5, %6 : vector<8x512xf32>
    %8 = arith.truncf %7 : vector<8x512xf32> to vector<8x512xbf16>
    %c0_6 = arith.constant 0 : index
    %c0_7 = arith.constant 0 : index
    %9 = vector.load %arg4[%c0_6, %c0_7] : memref<512x128xbf16, #tpu.memory_space<vmem>>, vector<512x128xbf16>
    %cst_8 = arith.constant dense<0.000000e+00> : vector<8x128xf32>
    %10 = tpu.matmul %8, %9, %cst_8 {dimension_numbers = #tpu.dot_dimension_numbers<[1], [0], [0], [1], [0, 0, 1, 1], [], []>} : vector<8x512xbf16>, vector<512x128xbf16>, vector<8x128xf32> -> vector<8x128xf32>
    %c0_9 = arith.constant 0 : index
    %c0_10 = arith.constant 0 : index
    %11 = vector.load %arg5[%c0_9, %c0_10] : memref<1x128xf32, #tpu.memory_space<vmem>>, vector<1x128xf32>
    %12 = vector.broadcast %11 : vector<1x128xf32> to vector<8x128xf32>
    %13 = arith.addf %10, %12 : vector<8x128xf32>
    %cst_11 = arith.constant dense<0xFF800000> : vector<8xf32>
    %14 = vector.multi_reduction <maximumf>, %13, %cst_11 [1] : vector<8x128xf32> to vector<8xf32>
    %15 = vector.shape_cast %14 : vector<8xf32> to vector<8x1xf32>
    %16 = vector.broadcast %15 : vector<8x1xf32> to vector<8x128xf32>
    %17 = arith.subf %13, %16 : vector<8x128xf32>
    %18 = math.exp %17 : vector<8x128xf32>
    %cst_12 = arith.constant dense<0.000000e+00> : vector<8xf32>
    %19 = vector.multi_reduction <add>, %18, %cst_12 [1] : vector<8x128xf32> to vector<8xf32>
    %20 = vector.shape_cast %19 : vector<8xf32> to vector<8x1xf32>
    %21 = math.log %20 : vector<8x1xf32>
    %c0_13 = arith.constant 0 : index
    %c0_14 = arith.constant 0 : index
    %22 = vector.load %arg7[%c0_13, %c0_14] : memref<8x128xf32, #tpu.memory_space<vmem>>, vector<8x128xf32>
    tpu.vector_store %arg7[%c0_13, %c0_14], %13 {strides = array<i32>} : memref<8x128xf32, #tpu.memory_space<vmem>>, vector<8x128xf32>,
    %23 = vector.broadcast %21 : vector<8x1xf32> to vector<8x128xf32>
    %24 = arith.subf %17, %23 : vector<8x128xf32>
    %c0_15 = arith.constant 0 : index
    %c0_16 = arith.constant 0 : index
    %25 = vector.load %arg6[%c0_15, %c0_16] : memref<8x128xf32, #tpu.memory_space<vmem>>, vector<8x128xf32>
    tpu.vector_store %arg6[%c0_15, %c0_16], %24 {strides = array<i32>} : memref<8x128xf32, #tpu.memory_space<vmem>>, vector<8x128xf32>,
    return
  }
  func.func @transform_0(%arg0: i32) -> (i32, i32) {
    %c0_i32 = arith.constant 0 : i32
    %c0_i32_0 = arith.constant 0 : i32
    return %arg0, %c0_i32 : i32, i32
  }
  func.func @transform_1(%arg0: i32) -> (i32, i32) {
    %c0_i32 = arith.constant 0 : i32
    %c0_i32_0 = arith.constant 0 : i32
    %c0_i32_1 = arith.constant 0 : i32
    return %c0_i32, %c0_i32_0 : i32, i32
  }
  func.func @transform_2(%arg0: i32) -> (i32, i32) {
    %c0_i32 = arith.constant 0 : i32
    %c0_i32_0 = arith.constant 0 : i32
    %c0_i32_1 = arith.constant 0 : i32
    return %c0_i32, %c0_i32_0 : i32, i32
  }
  func.func @transform_3(%arg0: i32) -> (i32, i32) {
    %c0_i32 = arith.constant 0 : i32
    %c0_i32_0 = arith.constant 0 : i32
    %c0_i32_1 = arith.constant 0 : i32
    return %c0_i32, %c0_i32_0 : i32, i32
  }
  func.func @transform_4(%arg0: i32) -> (i32, i32) {
    %c0_i32 = arith.constant 0 : i32
    %c0_i32_0 = arith.constant 0 : i32
    %c0_i32_1 = arith.constant 0 : i32
    return %c0_i32, %c0_i32_0 : i32, i32
  }
  func.func @transform_5(%arg0: i32) -> (i32, i32) {
    %c0_i32 = arith.constant 0 : i32
    %c0_i32_0 = arith.constant 0 : i32
    return %arg0, %c0_i32 : i32, i32
  }
  func.func @transform_6(%arg0: i32) -> (i32, i32) {
    %c0_i32 = arith.constant 0 : i32
    %c0_i32_0 = arith.constant 0 : i32
    return %arg0, %c0_i32 : i32, i32
  }
}

</mosaic_0001>

<llo_original>
// kernel: fedavg_cnn_forward.3
$region0: #{fedavg_cnn_forward.3}
  #allocation0 [shape = 'u32[]', space=smem, size = 0x4, offset = 0x4, fixed_abs, tag = 'smem constant byte address 0x4 - core index']
  #allocation1 [shape = 'u32[144,128]{1,0:T(1,128)}', space=vmem, size = 0x12000, scoped, tag = 'internal scratch']
  %s0 = inlined_call_operand.vmem [shape: bf16[4,512,128], index: 0, kind: input, shape index: {}]
  %s1 = inlined_call_operand.vmem [shape: bf16[128,128], index: 1, kind: input, shape index: {}]
  %s2 = inlined_call_operand.vmem [shape: f32[1,128], index: 2, kind: input, shape index: {}]
  %s3 = inlined_call_operand.vmem [shape: bf16[512,128], index: 3, kind: output, shape index: {}]
  %s4 = sld [smem:[#allocation0]]
  $region86: #{fedavg_cnn_forward.3} parent=0
    _
  %s6 = ssub.s32 1, %s4
  %s7 = scalar_select 0, %s6, %s4
  $region1: #{fedavg_cnn_forward.3} parent=0
    #allocation2 [shape = 'u8[262144]{0}', space=vmem, size = 0x40000, scoped, tag = 'input window, operand 0']
    loop: start=0, step=1, limit=6
    $region2: #{fedavg_cnn_forward.3} parent=1 // loop_pre_header
      _
    $region3: #{fedavg_cnn_forward.3} parent=1 // loop_header
      %s9 = sphi 0, %s13
      %p10 = scmp.ge.s32.totalorder %s9, 6
      %s19 = sphi 0, %s21
      %s22 = sphi 0, %s19
      %s23 = sphi 0, %s22
      %s39 = sphi 0, %s23
      %s43 = sphi 0, %s43
      %s45 = sphi 0, %s43
      %s46 = sphi 0, %s45
      %s60 = sphi 0, %s46
      %s64 = sphi 0, %s64
      %s66 = sphi 0, %s64
      %s67 = sphi 0, %s66
      %s81 = sphi 0, %s67
      %s87 = sphi 0, %s89
      %s90 = sphi 0, %s87
      %s91 = sphi 0, %s90
      %s107 = sphi 0, %s91
    $region4: #{fedavg_cnn_forward.3} parent=1 // loop_header_branch
      %12 = sbr.rel (%p10) target = $region8
    $region5: #{fedavg_cnn_forward.3} parent=1 // loop_body
      %s14 = ssub.s32 %s9, 1
      %s15 = ssub.s32 %s9, 2
      %s16 = sadd.s32 %s9, 1
      %s17 = ssub.s32 %s9, %s16
      %p18 = scmp.eq.s32.totalorder %s17, 0
      %s20 = sadd.s32 %s19, 1
      %s21 = scalar_select %p18, %s19, %s20
      %p24 = pneg %p18
      %p25 = scmp.eq.s32.totalorder %s9, 3
      %p26 = por %p24, %p25
      %p27 = scmp.ne.s32.totalorder %s19, %s22
      %p28 = scmp.eq.s32.totalorder %s9, 0
      %p29 = por %p27, %p28
      %p30 = scmp.ne.s32.totalorder %s19, %s22
      %p31 = scmp.eq.s32.totalorder %s14, 3
      %p32 = por %p30, %p31
      %p33 = scmp.ne.s32.totalorder %s22, %s23
      %p34 = scmp.eq.s32.totalorder %s14, 0
      %p35 = por %p33, %p34
      %p36 = scmp.ne.s32.totalorder %s22, %s23
      %p37 = scmp.eq.s32.totalorder %s15, 3
      %p38 = por %p36, %p37
      %p40 = scmp.ne.s32.totalorder %s23, %s39
      %p41 = scmp.eq.s32.totalorder %s15, 0
      %p42 = por %p40, %p41
      %s44 = sadd.s32 %s43, 1
      %p47 = scmp.eq.s32.totalorder %s9, 3
      %p48 = scmp.ne.s32.totalorder %s43, %s45
      %p49 = scmp.eq.s32.totalorder %s9, 0
      %p50 = por %p48, %p49
      %p51 = scmp.ne.s32.totalorder %s43, %s45
      %p52 = scmp.eq.s32.totalorder %s14, 3
      %p53 = por %p51, %p52
      %p54 = scmp.ne.s32.totalorder %s45, %s46
      %p55 = scmp.eq.s32.totalorder %s14, 0
      %p56 = por %p54, %p55
      %p57 = scmp.ne.s32.totalorder %s45, %s46
      %p58 = scmp.eq.s32.totalorder %s15, 3
      %p59 = por %p57, %p58
      %p61 = scmp.ne.s32.totalorder %s46, %s60
      %p62 = scmp.eq.s32.totalorder %s15, 0
      %p63 = por %p61, %p62
      %s65 = sadd.s32 %s64, 1
      %p68 = scmp.eq.s32.totalorder %s9, 3
      %p69 = scmp.ne.s32.totalorder %s64, %s66
      %p70 = scmp.eq.s32.totalorder %s9, 0
      %p71 = por %p69, %p70
      %p72 = scmp.ne.s32.totalorder %s64, %s66
      %p73 = scmp.eq.s32.totalorder %s14, 3
      %p74 = por %p72, %p73
      %p75 = scmp.ne.s32.totalorder %s66, %s67
      %p76 = scmp.eq.s32.totalorder %s14, 0
      %p77 = por %p75, %p76
      %p78 = scmp.ne.s32.totalorder %s66, %s67
      %p79 = scmp.eq.s32.totalorder %s15, 3
      %p80 = por %p78, %p79
      %p82 = scmp.ne.s32.totalorder %s67, %s81
      %p83 = scmp.eq.s32.totalorder %s15, 0
      %p84 = por %p82, %p83
      %s85 = ssub.s32 %s9, %s16
      %p86 = scmp.eq.s32.totalorder %s85, 0
      %s88 = sadd.s32 %s87, 1
      %s89 = scalar_select %p86, %s87, %s88
      %p92 = pneg %p86
      %p93 = scmp.eq.s32.totalorder %s9, 3
      %p94 = por %p92, %p93
      %p95 = scmp.ne.s32.totalorder %s87, %s90
      %p96 = scmp.eq.s32.totalorder %s9, 0
      %p97 = por %p95, %p96
      %p98 = scmp.ne.s32.totalorder %s87, %s90
      %p99 = scmp.eq.s32.totalorder %s14, 3
      %p100 = por %p98, %p99
      %p101 = scmp.ne.s32.totalorder %s90, %s91
      %p102 = scmp.eq.s32.totalorder %s14, 0
      %p103 = por %p101, %p102
      %p104 = scmp.ne.s32.totalorder %s90, %s91
      %p105 = scmp.eq.s32.totalorder %s15, 3
      %p106 = por %p104, %p105
      %p108 = scmp.ne.s32.totalorder %s91, %s107
      %p109 = scmp.eq.s32.totalorder %s15, 0
      %p110 = por %p108, %p109
      %p111 = scmp.le.s32.totalorder 1, %s9
      %p112 = scmp.lt.s32.totalorder %s9, 5
      %p113 = pnand %p111, %p112
      %p114 = pneg %p113
      // Predicated region
      $region9: #{fedavg_cnn_forward.3} parent=5 // pred_check
        _
      $region10: #{fedavg_cnn_forward.3} parent=5 // pred_check_branch
        %116 = sbr.rel (%p113) target = $region12
      $region11: #{fedavg_cnn_forward.3} parent=5 // pred_region
        %s117 = ssub.s32 %s9, 1
        // Predicated region
        $region13: #{fedavg_cnn_forward.3} parent=11 // pred_check
          %p118 = pneg %p56
        $region14: #{fedavg_cnn_forward.3} parent=11 // pred_check_branch
          %120 = sbr.rel (%p118) target = $region16
        $region15: #{fedavg_cnn_forward.3} parent=11 // pred_region
          _
        $region16: #{fedavg_cnn_forward.3} parent=11 // pred_fallthru
          _
        // Predicated region
        $region17: #{fedavg_cnn_forward.3} parent=11 // pred_check
          %p121 = pneg %p77
        $region18: #{fedavg_cnn_forward.3} parent=11 // pred_check_branch
          %123 = sbr.rel (%p121) target = $region20
        $region19: #{fedavg_cnn_forward.3} parent=11 // pred_region
          _
        $region20: #{fedavg_cnn_forward.3} parent=11 // pred_fallthru
          _
      $region12: #{fedavg_cnn_forward.3} parent=5 // pred_fallthru
        _
      %p124 = scmp.lt.s32.totalorder %s9, 4
      // Predicated region
      $region21: #{fedavg_cnn_forward.3} parent=5 // pred_check
        %p125 = pneg %p124
      $region22: #{fedavg_cnn_forward.3} parent=5 // pred_check_branch
        %127 = sbr.rel (%p125) target = $region24
      $region23: #{fedavg_cnn_forward.3} parent=5 // pred_region
        // Predicated region
        $region25: #{fedavg_cnn_forward.3} parent=23 // pred_check
          %p128 = pneg %p29
        $region26: #{fedavg_cnn_forward.3} parent=23 // pred_check_branch
          %130 = sbr.rel (%p128) target = $region28
        $region27: #{fedavg_cnn_forward.3} parent=23 // pred_region
          %s131 = sand.u32 %s19, 1
          %s132 = sand.u32 %s19, 1
          %s133 = smul.addr %s132, 256
          %s134 = scalar_lea.vmem [#allocation2], %s133
          %s135 = smul.u32 16, %s9
          %s136 = smul.addr %s135, 4
          %s137 = scalar_lea.vmem %s0, %s136
          // Predicated region
          $region29: #{fedavg_cnn_forward.3} parent=27 // pred_check
            _
          $region30: #{fedavg_cnn_forward.3} parent=27 // pred_check_branch
            %139 = sbr.rel (0) target = $region32
          $region31: #{fedavg_cnn_forward.3} parent=27 // pred_region
            // Predicated region
            $region33: #{fedavg_cnn_forward.3} parent=31 // pred_check
              _
            $region34: #{fedavg_cnn_forward.3} parent=31 // pred_check_branch
              %141 = sbr.rel target = $region36
            $region35: #{fedavg_cnn_forward.3} parent=31 // pred_region
              // Predicated region
              $region48: #{fedavg_cnn_forward.3} parent=35 // pred_check
                _
              $region49: #{fedavg_cnn_forward.3} parent=35 // pred_check_branch
                %282 = sbr.rel (0) target = $region51
              $region50: #{fedavg_cnn_forward.3} parent=35 // pred_region
                loop: start=0, step=1, limit=1
                $region52: #{fedavg_cnn_forward.3} parent=50 // loop_pre_header
                  _
                $region53: #{fedavg_cnn_forward.3} parent=50 // loop_header
                  %s284 = sphi 0, %s288
                  %p285 = scmp.ge.s32.totalorder %s284, 1
                  %s289 = sphi %s137, %s137
                  %s290 = sphi %s134, %s134
                $region54: #{fedavg_cnn_forward.3} parent=50 // loop_header_branch
                  %287 = sbr.rel (%p285) target = $region58
                $region55: #{fedavg_cnn_forward.3} parent=50 // loop_body
                  _
                $region56: #{fedavg_cnn_forward.3} parent=50 // loop_footer
                  %s288 = sadd.s32 1, %s284
                $region57: #{fedavg_cnn_forward.3} parent=50 // loop_footer_branch
                  %283 = sbr.rel target = $region53
                $region58: #{fedavg_cnn_forward.3} parent=50 // loop_exit
                  _
                loop: start=0, step=1, limit=1
                $region59: #{fedavg_cnn_forward.3} parent=50 // loop_pre_header
                  _
                $region60: #{fedavg_cnn_forward.3} parent=50 // loop_header
                  %s293 = sphi 0, %s297
                  %p294 = scmp.ge.s32.totalorder %s293, 1
                  %s298 = sphi %s137, %s137
                  %s299 = sphi %s134, %s134
                $region61: #{fedavg_cnn_forward.3} parent=50 // loop_header_branch
                  %296 = sbr.rel (%p294) target = $region65
                $region62: #{fedavg_cnn_forward.3} parent=50 // loop_body
                  %v300 = vld [vmem:[%s298] sm:$0xf]
                  %301 = vst [vmem:[%s299] sm:$0xf] %v300
                  %v302 = vld [vmem:[%s298 + $0x4] sm:$0xf]
                  %303 = vst [vmem:[%s299 + $0x4] sm:$0xf] %v302
                  %v304 = vld [vmem:[%s298 + $0x8] sm:$0xf]
                  %305 = vst [vmem:[%s299 + $0x8] sm:$0xf] %v304
                  %v306 = vld [vmem:[%s298 + $0xc] sm:$0xf]
                  %307 = vst [vmem:[%s299 + $0xc] sm:$0xf] %v306
                  %v308 = vld [vmem:[%s298 + $0x10] sm:$0xf]
                  %309 = vst [vmem:[%s299 + $0x10] sm:$0xf] %v308
                  %v310 = vld [vmem:[%s298 + $0x14] sm:$0xf]
                  %311 = vst [vmem:[%s299 + $0x14] sm:$0xf] %v310
                  %v312 = vld [vmem:[%s298 + $0x18] sm:$0xf]
                  %313 = vst [vmem:[%s299 + $0x18] sm:$0xf] %v312
                  %v314 = vld [vmem:[%s298 + $0x1c] sm:$0xf]
                  %315 = vst [vmem:[%s299 + $0x1c] sm:$0xf] %v314
                  %v316 = vld [vmem:[%s298 + $0x20] sm:$0xf]
                  %317 = vst [vmem:[%s299 + $0x20] sm:$0xf] %v316
                  %v318 = vld [vmem:[%s298 + $0x24] sm:$0xf]
                  %319 = vst [vmem:[%s299 + $0x24] sm:$0xf] %v318
                  %v320 = vld [vmem:[%s298 + $0x28] sm:$0xf]
                  %321 = vst [vmem:[%s299 + $0x28] sm:$0xf] %v320
                  %v322 = vld [vmem:[%s298 + $0x2c] sm:$0xf]
                  %323 = vst [vmem:[%s299 + $0x2c] sm:$0xf] %v322
                  %v324 = vld [vmem:[%s298 + $0x30] sm:$0xf]
                  %325 = vst [vmem:[%s299 + $0x30] sm:$0xf] %v324
                  %v326 = vld [vmem:[%s298 + $0x34] sm:$0xf]
                  %327 = vst [vmem:[%s299 + $0x34] sm:$0xf] %v326
                  %v328 = vld [vmem:[%s298 + $0x38] sm:$0xf]
                  %329 = vst [vmem:[%s299 + $0x38] sm:$0xf] %v328
                  %v330 = vld [vmem:[%s298 + $0x3c] sm:$0xf]
                  %331 = vst [vmem:[%s299 + $0x3c] sm:$0xf] %v330
                  %v332 = vld [vmem:[%s298 + $0x100] sm:$0xf]
                  %333 = vst [vmem:[%s299 + $0x40] sm:$0xf] %v332
                  %v334 = vld [vmem:[%s298 + $0x104] sm:$0xf]
                  %335 = vst [vmem:[%s299 + $0x44] sm:$0xf] %v334
                  %v336 = vld [vmem:[%s298 + $0x108] sm:$0xf]
                  %337 = vst [vmem:[%s299 + $0x48] sm:$0xf] %v336
                  %v338 = vld [vmem:[%s298 + $0x10c] sm:$0xf]
                  %339 = vst [vmem:[%s299 + $0x4c] sm:$0xf] %v338
                  %v340 = vld [vmem:[%s298 + $0x110] sm:$0xf]
                  %341 = vst [vmem:[%s299 + $0x50] sm:$0xf] %v340
                  %v342 = vld [vmem:[%s298 + $0x114] sm:$0xf]
                  %343 = vst [vmem:[%s299 + $0x54] sm:$0xf] %v342
                  %v344 = vld [vmem:[%s298 + $0x118] sm:$0xf]
                  %345 = vst [vmem:[%s299 + $0x58] sm:$0xf] %v344
                  %v346 = vld [vmem:[%s298 + $0x11c] sm:$0xf]
                  %347 = vst [vmem:[%s299 + $0x5c] sm:$0xf] %v346
                  %v348 = vld [vmem:[%s298 + $0x120] sm:$0xf]
                  %349 = vst [vmem:[%s299 + $0x60] sm:$0xf] %v348
                  %v350 = vld [vmem:[%s298 + $0x124] sm:$0xf]
                  %351 = vst [vmem:[%s299 + $0x64] sm:$0xf] %v350
                  %v352 = vld [vmem:[%s298 + $0x128] sm:$0xf]
                  %353 = vst [vmem:[%s299 + $0x68] sm:$0xf] %v352
                  %v354 = vld [vmem:[%s298 + $0x12c] sm:$0xf]
                  %355 = vst [vmem:[%s299 + $0x6c] sm:$0xf] %v354
                  %v356 = vld [vmem:[%s298 + $0x130] sm:$0xf]
                  %357 = vst [vmem:[%s299 + $0x70] sm:$0xf] %v356
                  %v358 = vld [vmem:[%s298 + $0x134] sm:$0xf]
                  %359 = vst [vmem:[%s299 + $0x74] sm:$0xf] %v358
                  %v360 = vld [vmem:[%s298 + $0x138] sm:$0xf]
                  %361 = vst [vmem:[%s299 + $0x78] sm:$0xf] %v360
                  %v362 = vld [vmem:[%s298 + $0x13c] sm:$0xf]
                  %363 = vst [vmem:[%s299 + $0x7c] sm:$0xf] %v362
                  %v364 = vld [vmem:[%s298 + $0x200] sm:$0xf]
                  %365 = vst [vmem:[%s299 + $0x80] sm:$0xf] %v364
                  %v366 = vld [vmem:[%s298 + $0x204] sm:$0xf]
                  %367 = vst [vmem:[%s299 + $0x84] sm:$0xf] %v366
                  %v368 = vld [vmem:[%s298 + $0x208] sm:$0xf]
                  %369 = vst [vmem:[%s299 + $0x88] sm:$0xf] %v368
                  %v370 = vld [vmem:[%s298 + $0x20c] sm:$0xf]
                  %371 = vst [vmem:[%s299 + $0x8c] sm:$0xf] %v370
                  %v372 = vld [vmem:[%s298 + $0x210] sm:$0xf]
                  %373 = vst [vmem:[%s299 + $0x90] sm:$0xf] %v372
                  %v374 = vld [vmem:[%s298 + $0x214] sm:$0xf]
                  %375 = vst [vmem:[%s299 + $0x94] sm:$0xf] %v374
                  %v376 = vld [vmem:[%s298 + $0x218] sm:$0xf]
                  %377 = vst [vmem:[%s299 + $0x98] sm:$0xf] %v376
                  %v378 = vld [vmem:[%s298 + $0x21c] sm:$0xf]
                  %379 = vst [vmem:[%s299 + $0x9c] sm:$0xf] %v378
                  %v380 = vld [vmem:[%s298 + $0x220] sm:$0xf]
                  %381 = vst [vmem:[%s299 + $0xa0] sm:$0xf] %v380
                  %v382 = vld [vmem:[%s298 + $0x224] sm:$0xf]
                  %383 = vst [vmem:[%s299 + $0xa4] sm:$0xf] %v382
                  %v384 = vld [vmem:[%s298 + $0x228] sm:$0xf]
                  %385 = vst [vmem:[%s299 + $0xa8] sm:$0xf] %v384
                  %v386 = vld [vmem:[%s298 + $0x22c] sm:$0xf]
                  %387 = vst [vmem:[%s299 + $0xac] sm:$0xf] %v386
                  %v388 = vld [vmem:[%s298 + $0x230] sm:$0xf]
                  %389 = vst [vmem:[%s299 + $0xb0] sm:$0xf] %v388
                  %v390 = vld [vmem:[%s298 + $0x234] sm:$0xf]
                  %391 = vst [vmem:[%s299 + $0xb4] sm:$0xf] %v390
                  %v392 = vld [vmem:[%s298 + $0x238] sm:$0xf]
                  %393 = vst [vmem:[%s299 + $0xb8] sm:$0xf] %v392
                  %v394 = vld [vmem:[%s298 + $0x23c] sm:$0xf]
                  %395 = vst [vmem:[%s299 + $0xbc] sm:$0xf] %v394
                  %v396 = vld [vmem:[%s298 + $0x300] sm:$0xf]
                  %397 = vst [vmem:[%s299 + $0xc0] sm:$0xf] %v396
                  %v398 = vld [vmem:[%s298 + $0x304] sm:$0xf]
                  %399 = vst [vmem:[%s299 + $0xc4] sm:$0xf] %v398
                  %v400 = vld [vmem:[%s298 + $0x308] sm:$0xf]
                  %401 = vst [vmem:[%s299 + $0xc8] sm:$0xf] %v400
                  %v402 = vld [vmem:[%s298 + $0x30c] sm:$0xf]
                  %403 = vst [vmem:[%s299 + $0xcc] sm:$0xf] %v402
                  %v404 = vld [vmem:[%s298 + $0x310] sm:$0xf]
                  %405 = vst [vmem:[%s299 + $0xd0] sm:$0xf] %v404
                  %v406 = vld [vmem:[%s298 + $0x314] sm:$0xf]
                  %407 = vst [vmem:[%s299 + $0xd4] sm:$0xf] %v406
                  %v408 = vld [vmem:[%s298 + $0x318] sm:$0xf]
                  %409 = vst [vmem:[%s299 + $0xd8] sm:$0xf] %v408
                  %v410 = vld [vmem:[%s298 + $0x31c] sm:$0xf]
                  %411 = vst [vmem:[%s299 + $0xdc] sm:$0xf] %v410
                  %v412 = vld [vmem:[%s298 + $0x320] sm:$0xf]
                  %413 = vst [vmem:[%s299 + $0xe0] sm:$0xf] %v412
                  %v414 = vld [vmem:[%s298 + $0x324] sm:$0xf]
                  %415 = vst [vmem:[%s299 + $0xe4] sm:$0xf] %v414
                  %v416 = vld [vmem:[%s298 + $0x328] sm:$0xf]
                  %417 = vst [vmem:[%s299 + $0xe8] sm:$0xf] %v416
                  %v418 = vld [vmem:[%s298 + $0x32c] sm:$0xf]
                  %419 = vst [vmem:[%s299 + $0xec] sm:$0xf] %v418
                  %v420 = vld [vmem:[%s298 + $0x330] sm:$0xf]
                  %421 = vst [vmem:[%s299 + $0xf0] sm:$0xf] %v420
                  %v422 = vld [vmem:[%s298 + $0x334] sm:$0xf]
                  %423 = vst [vmem:[%s299 + $0xf4] sm:$0xf] %v422
                  %v424 = vld [vmem:[%s298 + $0x338] sm:$0xf]
                  %425 = vst [vmem:[%s299 + $0xf8] sm:$0xf] %v424
                  %v426 = vld [vmem:[%s298 + $0x33c] sm:$0xf]
                  %427 = vst [vmem:[%s299 + $0xfc] sm:$0xf] %v426
                $region63: #{fedavg_cnn_forward.3} parent=50 // loop_footer
                  %s297 = sadd.s32 1, %s293
                $region64: #{fedavg_cnn_forward.3} parent=50 // loop_footer_branch
                  %292 = sbr.rel target = $region60
                $region65: #{fedavg_cnn_forward.3} parent=50 // loop_exit
                  _
              $region51: #{fedavg_cnn_forward.3} parent=35 // pred_fallthru
                _
            $region36: #{fedavg_cnn_forward.3} parent=31 // pred_fallthru
              _
            // Predicated region
            $region37: #{fedavg_cnn_forward.3} parent=31 // pred_check
              _
            $region38: #{fedavg_cnn_forward.3} parent=31 // pred_check_branch
              %143 = sbr.rel (0) target = $region40
            $region39: #{fedavg_cnn_forward.3} parent=31 // pred_region
              loop: start=0, step=1, limit=1
              $region41: #{fedavg_cnn_forward.3} parent=39 // loop_pre_header
                _
              $region42: #{fedavg_cnn_forward.3} parent=39 // loop_header
                %s146 = sphi 0, %s150
                %p147 = scmp.ge.s32.totalorder %s146, 1
                %s151 = sphi %s137, %s137
                %s152 = sphi %s134, %s134
              $region43: #{fedavg_cnn_forward.3} parent=39 // loop_header_branch
                %149 = sbr.rel (%p147) target = $region47
              $region44: #{fedavg_cnn_forward.3} parent=39 // loop_body
                %v153 = vld [vmem:[%s151] sm:$0xf]
                %154 = vst [vmem:[%s152] sm:$0xf] %v153
                %v155 = vld [vmem:[%s151 + $0x4] sm:$0xf]
                %156 = vst [vmem:[%s152 + $0x4] sm:$0xf] %v155
                %v157 = vld [vmem:[%s151 + $0x8] sm:$0xf]
                %158 = vst [vmem:[%s152 + $0x8] sm:$0xf] %v157
                %v159 = vld [vmem:[%s151 + $0xc] sm:$0xf]
                %160 = vst [vmem:[%s152 + $0xc] sm:$0xf] %v159
                %v161 = vld [vmem:[%s151 + $0x10] sm:$0xf]
                %162 = vst [vmem:[%s152 + $0x10] sm:$0xf] %v161
                %v163 = vld [vmem:[%s151 + $0x14] sm:$0xf]
                %164 = vst [vmem:[%s152 + $0x14] sm:$0xf] %v163
                %v165 = vld [vmem:[%s151 + $0x18] sm:$0xf]
                %166 = vst [vmem:[%s152 + $0x18] sm:$0xf] %v165
                %v167 = vld [vmem:[%s151 + $0x1c] sm:$0xf]
                %168 = vst [vmem:[%s152 + $0x1c] sm:$0xf] %v167
                %v169 = vld [vmem:[%s151 + $0x20] sm:$0xf]
                %170 = vst [vmem:[%s152 + $0x20] sm:$0xf] %v169
                %v171 = vld [vmem:[%s151 + $0x24] sm:$0xf]
                %172 = vst [vmem:[%s152 + $0x24] sm:$0xf] %v171
                %v173 = vld [vmem:[%s151 + $0x28] sm:$0xf]
                %174 = vst [vmem:[%s152 + $0x28] sm:$0xf] %v173
                %v175 = vld [vmem:[%s151 + $0x2c] sm:$0xf]
                %176 = vst [vmem:[%s152 + $0x2c] sm:$0xf] %v175
                %v177 = vld [vmem:[%s151 + $0x30] sm:$0xf]
                %178 = vst [vmem:[%s152 + $0x30] sm:$0xf] %v177
                %v179 = vld [vmem:[%s151 + $0x34] sm:$0xf]
                %180 = vst [vmem:[%s152 + $0x34] sm:$0xf] %v179
                %v181 = vld [vmem:[%s151 + $0x38] sm:$0xf]
                %182 = vst [vmem:[%s152 + $0x38] sm:$0xf] %v181
                %v183 = vld [vmem:[%s151 + $0x3c] sm:$0xf]
                %184 = vst [vmem:[%s152 + $0x3c] sm:$0xf] %v183
                %v185 = vld [vmem:[%s151 + $0x100] sm:$0xf]
                %186 = vst [vmem:[%s152 + $0x40] sm:$0xf] %v185
                %v187 = vld [vmem:[%s151 + $0x104] sm:$0xf]
                %188 = vst [vmem:[%s152 + $0x44] sm:$0xf] %v187
                %v189 = vld [vmem:[%s151 + $0x108] sm:$0xf]
                %190 = vst [vmem:[%s152 + $0x48] sm:$0xf] %v189
                %v191 = vld [vmem:[%s151 + $0x10c] sm:$0xf]
                %192 = vst [vmem:[%s152 + $0x4c] sm:$0xf] %v191
                %v193 = vld [vmem:[%s151 + $0x110] sm:$0xf]
                %194 = vst [vmem:[%s152 + $0x50] sm:$0xf] %v193
                %v195 = vld [vmem:[%s151 + $0x114] sm:$0xf]
                %196 = vst [vmem:[%s152 + $0x54] sm:$0xf] %v195
                %v197 = vld [vmem:[%s151 + $0x118] sm:$0xf]
                %198 = vst [vmem:[%s152 + $0x58] sm:$0xf] %v197
                %v199 = vld [vmem:[%s151 + $0x11c] sm:$0xf]
                %200 = vst [vmem:[%s152 + $0x5c] sm:$0xf] %v199
                %v201 = vld [vmem:[%s151 + $0x120] sm:$0xf]
                %202 = vst [vmem:[%s152 + $0x60] sm:$0xf] %v201
                %v203 = vld [vmem:[%s151 + $0x124] sm:$0xf]
                %204 = vst [vmem:[%s152 + $0x64] sm:$0xf] %v203
                %v205 = vld [vmem:[%s151 + $0x128] sm:$0xf]
                %206 = vst [vmem:[%s152 + $0x68] sm:$0xf] %v205
                %v207 = vld [vmem:[%s151 + $0x12c] sm:$0xf]
                %208 = vst [vmem:[%s152 + $0x6c] sm:$0xf] %v207
                %v209 = vld [vmem:[%s151 + $0x130] sm:$0xf]
                %210 = vst [vmem:[%s152 + $0x70] sm:$0xf] %v209
                %v211 = vld [vmem:[%s151 + $0x134] sm:$0xf]
                %212 = vst [vmem:[%s152 + $0x74] sm:$0xf] %v211
                %v213 = vld [vmem:[%s151 + $0x138] sm:$0xf]
                %214 = vst [vmem:[%s152 + $0x78] sm:$0xf] %v213
                %v215 = vld [vmem:[%s151 + $0x13c] sm:$0xf]
                %216 = vst [vmem:[%s152 + $0x7c] sm:$0xf] %v215
                %v217 = vld [vmem:[%s151 + $0x200] sm:$0xf]
                %218 = vst [vmem:[%s152 + $0x80] sm:$0xf] %v217
                %v219 = vld [vmem:[%s151 + $0x204] sm:$0xf]
                %220 = vst [vmem:[%s152 + $0x84] sm:$0xf] %v219
                %v221 = vld [vmem:[%s151 + $0x208] sm:$0xf]
                %222 = vst [vmem:[%s152 + $0x88] sm:$0xf] %v221
                %v223 = vld [vmem:[%s151 + $0x20c] sm:$0xf]
                %224 = vst [vmem:[%s152 + $0x8c] sm:$0xf] %v223
                %v225 = vld [vmem:[%s151 + $0x210] sm:$0xf]
                %226 = vst [vmem:[%s152 + $0x90] sm:$0xf] %v225
                %v227 = vld [vmem:[%s151 + $0x214] sm:$0xf]
                %228 = vst [vmem:[%s152 + $0x94] sm:$0xf] %v227
                %v229 = vld [vmem:[%s151 + $0x218] sm:$0xf]
                %230 = vst [vmem:[%s152 + $0x98] sm:$0xf] %v229
                %v231 = vld [vmem:[%s151 + $0x21c] sm:$0xf]
                %232 = vst [vmem:[%s152 + $0x9c] sm:$0xf] %v231
                %v233 = vld [vmem:[%s151 + $0x220] sm:$0xf]
                %234 = vst [vmem:[%s152 + $0xa0] sm:$0xf] %v233
                %v235 = vld [vmem:[%s151 + $0x224] sm:$0xf]
                %236 = vst [vmem:[%s152 + $0xa4] sm:$0xf] %v235
                %v237 = vld [vmem:[%s151 + $0x228] sm:$0xf]
                %238 = vst [vmem:[%s152 + $0xa8] sm:$0xf] %v237
                %v239 = vld [vmem:[%s151 + $0x22c] sm:$0xf]
                %240 = vst [vmem:[%s152 + $0xac] sm:$0xf] %v239
                %v241 = vld [vmem:[%s151 + $0x230] sm:$0xf]
                %242 = vst [vmem:[%s152 + $0xb0] sm:$0xf] %v241
                %v243 = vld [vmem:[%s151 + $0x234] sm:$0xf]
                %244 = vst [vmem:[%s152 + $0xb4] sm:$0xf] %v243
                %v245 = vld [vmem:[%s151 + $0x238] sm:$0xf]
                %246 = vst [vmem:[%s152 + $0xb8] sm:$0xf] %v245
                %v247 = vld [vmem:[%s151 + $0x23c] sm:$0xf]
                %248 = vst [vmem:[%s152 + $0xbc] sm:$0xf] %v247
                %v249 = vld [vmem:[%s151 + $0x300] sm:$0xf]
                %250 = vst [vmem:[%s152 + $0xc0] sm:$0xf] %v249
                %v251 = vld [vmem:[%s151 + $0x304] sm:$0xf]
                %252 = vst [vmem:[%s152 + $0xc4] sm:$0xf] %v251
                %v253 = vld [vmem:[%s151 + $0x308] sm:$0xf]
                %254 = vst [vmem:[%s152 + $0xc8] sm:$0xf] %v253
                %v255 = vld [vmem:[%s151 + $0x30c] sm:$0xf]
                %256 = vst [vmem:[%s152 + $0xcc] sm:$0xf] %v255
                %v257 = vld [vmem:[%s151 + $0x310] sm:$0xf]
                %258 = vst [vmem:[%s152 + $0xd0] sm:$0xf] %v257
                %v259 = vld [vmem:[%s151 + $0x314] sm:$0xf]
                %260 = vst [vmem:[%s152 + $0xd4] sm:$0xf] %v259
                %v261 = vld [vmem:[%s151 + $0x318] sm:$0xf]
                %262 = vst [vmem:[%s152 + $0xd8] sm:$0xf] %v261
                %v263 = vld [vmem:[%s151 + $0x31c] sm:$0xf]
                %264 = vst [vmem:[%s152 + $0xdc] sm:$0xf] %v263
                %v265 = vld [vmem:[%s151 + $0x320] sm:$0xf]
                %266 = vst [vmem:[%s152 + $0xe0] sm:$0xf] %v265
                %v267 = vld [vmem:[%s151 + $0x324] sm:$0xf]
                %268 = vst [vmem:[%s152 + $0xe4] sm:$0xf] %v267
                %v269 = vld [vmem:[%s151 + $0x328] sm:$0xf]
                %270 = vst [vmem:[%s152 + $0xe8] sm:$0xf] %v269
                %v271 = vld [vmem:[%s151 + $0x32c] sm:$0xf]
                %272 = vst [vmem:[%s152 + $0xec] sm:$0xf] %v271
                %v273 = vld [vmem:[%s151 + $0x330] sm:$0xf]
                %274 = vst [vmem:[%s152 + $0xf0] sm:$0xf] %v273
                %v275 = vld [vmem:[%s151 + $0x334] sm:$0xf]
                %276 = vst [vmem:[%s152 + $0xf4] sm:$0xf] %v275
                %v277 = vld [vmem:[%s151 + $0x338] sm:$0xf]
                %278 = vst [vmem:[%s152 + $0xf8] sm:$0xf] %v277
                %v279 = vld [vmem:[%s151 + $0x33c] sm:$0xf]
                %280 = vst [vmem:[%s152 + $0xfc] sm:$0xf] %v279
              $region45: #{fedavg_cnn_forward.3} parent=39 // loop_footer
                %s150 = sadd.s32 1, %s146
              $region46: #{fedavg_cnn_forward.3} parent=39 // loop_footer_branch
                %145 = sbr.rel target = $region42
              $region47: #{fedavg_cnn_forward.3} parent=39 // loop_exit
                _
            $region40: #{fedavg_cnn_forward.3} parent=31 // pred_fallthru
              _
          $region32: #{fedavg_cnn_forward.3} parent=27 // pred_fallthru
            _
          %428 = vnop
        $region28: #{fedavg_cnn_forward.3} parent=23 // pred_fallthru
          _
      $region24: #{fedavg_cnn_forward.3} parent=5 // pred_fallthru
        _
      %p429 = scmp.le.s32.totalorder 1, %s9
      %p430 = scmp.lt.s32.totalorder %s9, 5
      %p431 = pnand %p429, %p430
      %p432 = pneg %p431
      // Predicated region
      $region66: #{fedavg_cnn_forward.3} parent=5 // pred_check
        _
      $region67: #{fedavg_cnn_forward.3} parent=5 // pred_check_branch
        %434 = sbr.rel (%p431) target = $region69
      $region68: #{fedavg_cnn_forward.3} parent=5 // pred_region
        %s435 = ssub.s32 %s9, 1
        %s436 = sand.u32 %s22, 1
        %s437 = sand.u32 %s22, 1
        %s438 = smul.addr %s437, 256
        %s439 = scalar_lea.vmem [#allocation2], %s438
        // Predicated region
        $region70: #{fedavg_cnn_forward.3} parent=68 // pred_check
          %p440 = pneg %p35
        $region71: #{fedavg_cnn_forward.3} parent=68 // pred_check_branch
          %442 = sbr.rel (%p440) target = $region73
        $region72: #{fedavg_cnn_forward.3} parent=68 // pred_region
          _
        $region73: #{fedavg_cnn_forward.3} parent=68 // pred_fallthru
          _
        %s443 = sand.u32 %s22, 1
        %s444 = sand.u32 %s22, 1
        %s445 = smul.addr %s444, 256
        %s446 = scalar_lea.vmem [#allocation2], %s445
        %p447 = pneg %p35
        %p448 = pneg %p32
        %p449 = pneg %p56
        %p450 = pneg %p53
        %p451 = pneg %p77
        %p452 = pneg %p74
        %p453 = pneg %p103
        %p454 = pneg %p100
        %s455 = smul.u32 16, %s14
        %p456 = scmp.lt.s32.totalorder %s455, 63
        %s457 = scalar_select %p456, %s455, 63
        %s458 = smul.addr %s457, 4
        %s459 = scalar_lea.vmem %s3, %s458
        %s460 = smul.u32 16, %s14
        %s461 = smul.u32 16, %s14
        %p462 = scmp.lt.s32.totalorder %s461, 63
        %s463 = scalar_select %p462, %s461, 63
        %s464 = smul.addr %s463, 4
        %s465 = scalar_lea.vmem %s3, %s464
        %s466 = smul.u32 16, %s14
        %v468 = vld [vmem:[%s1] sm:$0xf]
        %v469 = vld [vmem:[%s1 + $0x4] sm:$0xf]
        %v470 = vld [vmem:[%s1 + $0x8] sm:$0xf]
        %v471 = vld [vmem:[%s1 + $0xc] sm:$0xf]
        %v472 = vld [vmem:[%s1 + $0x10] sm:$0xf]
        %v473 = vld [vmem:[%s1 + $0x14] sm:$0xf]
        %v474 = vld [vmem:[%s1 + $0x18] sm:$0xf]
        %v475 = vld [vmem:[%s1 + $0x1c] sm:$0xf]
        %v476 = vld [vmem:[%s1 + $0x20] sm:$0xf]
        %v477 = vld [vmem:[%s1 + $0x24] sm:$0xf]
        %v478 = vld [vmem:[%s1 + $0x28] sm:$0xf]
        %v479 = vld [vmem:[%s1 + $0x2c] sm:$0xf]
        %v480 = vld [vmem:[%s1 + $0x30] sm:$0xf]
        %v481 = vld [vmem:[%s1 + $0x34] sm:$0xf]
        %v482 = vld [vmem:[%s1 + $0x38] sm:$0xf]
        %v483 = vld [vmem:[%s1 + $0x3c] sm:$0xf]
        %v484 = vld [vmem:[%s439] sm:$0xf]
        %v485 = vld [vmem:[%s439 + $0x4] sm:$0xf]
        %v486 = vld [vmem:[%s439 + $0x8] sm:$0xf]
        %v487 = vld [vmem:[%s439 + $0xc] sm:$0xf]
        %v488 = vld [vmem:[%s439 + $0x10] sm:$0xf]
        %v489 = vld [vmem:[%s439 + $0x14] sm:$0xf]
        %v490 = vld [vmem:[%s439 + $0x18] sm:$0xf]
        %v491 = vld [vmem:[%s439 + $0x1c] sm:$0xf]
        %v492 = vld [vmem:[%s439 + $0x20] sm:$0xf]
        %v493 = vld [vmem:[%s439 + $0x24] sm:$0xf]
        %v494 = vld [vmem:[%s439 + $0x28] sm:$0xf]
        %v495 = vld [vmem:[%s439 + $0x2c] sm:$0xf]
        %v496 = vld [vmem:[%s439 + $0x30] sm:$0xf]
        %v497 = vld [vmem:[%s439 + $0x34] sm:$0xf]
        %v498 = vld [vmem:[%s439 + $0x38] sm:$0xf]
        %v499 = vld [vmem:[%s439 + $0x3c] sm:$0xf]
        %v516 = vunpack.c.l.b16 %v484
        %v517 = vunpack.c.l.b16 %v485
        %v518 = vunpack.c.l.b16 %v486
        %v519 = vunpack.c.l.b16 %v487
        %v520 = vunpack.c.l.b16 %v488
        %v521 = vunpack.c.l.b16 %v489
        %v522 = vunpack.c.l.b16 %v490
        %v523 = vunpack.c.l.b16 %v491
        %v524 = vunpack.c.l.b16 %v492
        %v525 = vunpack.c.l.b16 %v493
        %v526 = vunpack.c.l.b16 %v494
        %v527 = vunpack.c.l.b16 %v495
        %v528 = vunpack.c.l.b16 %v496
        %v529 = vunpack.c.l.b16 %v497
        %v530 = vunpack.c.l.b16 %v498
        %v531 = vunpack.c.l.b16 %v499
        %v532 = vpack.c.b16 %v517, %v516
        %v533 = vpack.c.b16 %v519, %v518
        %v534 = vpack.c.b16 %v521, %v520
        %v535 = vpack.c.b16 %v523, %v522
        %v536 = vpack.c.b16 %v525, %v524
        %v537 = vpack.c.b16 %v527, %v526
        %v538 = vpack.c.b16 %v529, %v528
        %v539 = vpack.c.b16 %v531, %v530
        %v564 = vunpack.c.l.b16 %v468
        %v565 = vunpack.c.l.b16 %v469
        %v566 = vunpack.c.l.b16 %v470
        %v567 = vunpack.c.l.b16 %v471
        %v568 = vunpack.c.l.b16 %v472
        %v569 = vunpack.c.l.b16 %v473
        %v570 = vunpack.c.l.b16 %v474
        %v571 = vunpack.c.l.b16 %v475
        %v572 = vunpack.c.l.b16 %v476
        %v573 = vunpack.c.l.b16 %v477
        %v574 = vunpack.c.l.b16 %v478
        %v575 = vunpack.c.l.b16 %v479
        %v576 = vunpack.c.l.b16 %v480
        %v577 = vunpack.c.l.b16 %v481
        %v578 = vunpack.c.l.b16 %v482
        %v579 = vunpack.c.l.b16 %v483
        %v580 = vpack.c.b16 %v565, %v564
        %v581 = vpack.c.b16 %v567, %v566
        %v582 = vpack.c.b16 %v569, %v568
        %v583 = vpack.c.b16 %v571, %v570
        %v584 = vpack.c.b16 %v573, %v572
        %v585 = vpack.c.b16 %v575, %v574
        %v586 = vpack.c.b16 %v577, %v576
        %v587 = vpack.c.b16 %v579, %v578
        %596 = vmatprep.subr.bf16.mxu0 0
        %597 = vmatpush1.bf16.msra.mxu0 %v580
        %598 = vmatprep.subr.bf16.mxu0 0
        %599 = vmatpush1.bf16.msra.mxu0 %v581
        %600 = vmatprep.subr.bf16.mxu0 0
        %601 = vmatpush1.bf16.msra.mxu0 %v582
        %602 = vmatprep.subr.bf16.mxu0 0
        %603 = vmatpush1.bf16.msra.mxu0 %v583
        %604 = vmatprep.subr.bf16.mxu0 0
        %605 = vmatpush1.bf16.msra.mxu0 %v584
        %606 = vmatprep.subr.bf16.mxu0 0
        %607 = vmatpush1.bf16.msra.mxu0 %v585
        %608 = vmatprep.subr.bf16.mxu0 0
        %609 = vmatpush1.bf16.msra.mxu0 %v586
        %610 = vmatprep.subr.bf16.mxu0 0
        %611 = vmatpush1.bf16.msra.mxu0 %v587
        %612 = vmatprep.subr.bf16.mxu0 0
        %613 = vmatpush1.bf16.msra.mxu0 0
        %614 = vmatprep.subr.bf16.mxu0 0
        %615 = vmatpush1.bf16.msra.mxu0 0
        %616 = vmatprep.subr.bf16.mxu0 0
        %617 = vmatpush1.bf16.msra.mxu0 0
        %618 = vmatprep.subr.bf16.mxu0 0
        %619 = vmatpush1.bf16.msra.mxu0 0
        %620 = vmatprep.subr.bf16.mxu0 0
        %621 = vmatpush1.bf16.msra.mxu0 0
        %622 = vmatprep.subr.bf16.mxu0 0
        %623 = vmatpush1.bf16.msra.mxu0 0
        %624 = vmatprep.subr.bf16.mxu0 0
        %625 = vmatpush1.bf16.msra.mxu0 0
        %626 = vmatprep.subr.bf16.mxu0 0
        %627 = vmatpush1.bf16.msra.mxu0 0
        %628 = vmatprep.mubr.bf16.mxu0 0
        %629 = vmatmul.mubr.bf16.gmra.mrb[0].mxu0 %v532
        %v630 = vpop.f32.mrb[0].mxu0
        %v631 = vadd.f32 0.0, %v630
        %v632 = vpop.f32.mrb[0].mxu0
        %v633 = vpop.f32.mrb[0].mxu0
        %v634 = vadd.f32 0.0, %v633
        %v635 = vpop.f32.mrb[0].mxu0
        %636 = vmatprep.mubr.bf16.mxu0 0
        %637 = vmatmul.mubr.bf16.gmra.mrb[0].mxu0 %v533
        %v638 = vpop.f32.mrb[0].mxu0
        %v639 = vadd.f32 0.0, %v638
        %v640 = vpop.f32.mrb[0].mxu0
        %v641 = vpop.f32.mrb[0].mxu0
        %v642 = vadd.f32 0.0, %v641
        %v643 = vpop.f32.mrb[0].mxu0
        %644 = vmatprep.mubr.bf16.mxu0 0
        %645 = vmatmul.mubr.bf16.gmra.mrb[0].mxu0 %v534
        %v646 = vpop.f32.mrb[0].mxu0
        %v647 = vadd.f32 0.0, %v646
        %v648 = vpop.f32.mrb[0].mxu0
        %v649 = vpop.f32.mrb[0].mxu0
        %v650 = vadd.f32 0.0, %v649
        %v651 = vpop.f32.mrb[0].mxu0
        %652 = vmatprep.mubr.bf16.mxu0 0
        %653 = vmatmul.mubr.bf16.gmra.mrb[0].mxu0 %v535
        %v654 = vpop.f32.mrb[0].mxu0
        %v655 = vadd.f32 0.0, %v654
        %v656 = vpop.f32.mrb[0].mxu0
        %v657 = vpop.f32.mrb[0].mxu0
        %v658 = vadd.f32 0.0, %v657
        %v659 = vpop.f32.mrb[0].mxu0
        %660 = vmatprep.mubr.bf16.mxu0 0
        %661 = vmatmul.mubr.bf16.gmra.mrb[0].mxu0 %v536
        %v662 = vpop.f32.mrb[0].mxu0
        %v663 = vadd.f32 0.0, %v662
        %v664 = vpop.f32.mrb[0].mxu0
        %v665 = vpop.f32.mrb[0].mxu0
        %v666 = vadd.f32 0.0, %v665
        %v667 = vpop.f32.mrb[0].mxu0
        %668 = vmatprep.mubr.bf16.mxu0 0
        %669 = vmatmul.mubr.bf16.gmra.mrb[0].mxu0 %v537
        %v670 = vpop.f32.mrb[0].mxu0
        %v671 = vadd.f32 0.0, %v670
        %v672 = vpop.f32.mrb[0].mxu0
        %v673 = vpop.f32.mrb[0].mxu0
        %v674 = vadd.f32 0.0, %v673
        %v675 = vpop.f32.mrb[0].mxu0
        %676 = vmatprep.mubr.bf16.mxu0 0
        %677 = vmatmul.mubr.bf16.gmra.mrb[0].mxu0 %v538
        %v678 = vpop.f32.mrb[0].mxu0
        %v679 = vadd.f32 0.0, %v678
        %v680 = vpop.f32.mrb[0].mxu0
        %v681 = vpop.f32.mrb[0].mxu0
        %v682 = vadd.f32 0.0, %v681
        %v683 = vpop.f32.mrb[0].mxu0
        %684 = vmatprep.mubr.bf16.mxu0 0
        %685 = vmatmul.mubr.bf16.gmra.mrb[0].mxu0 %v539
        %v686 = vpop.f32.mrb[0].mxu0
        %v687 = vadd.f32 0.0, %v686
        %v688 = vpop.f32.mrb[0].mxu0
        %v689 = vpop.f32.mrb[0].mxu0
        %v690 = vadd.f32 0.0, %v689
        %v691 = vpop.f32.mrb[0].mxu0
        %692 = vdwg.mxu0
        %s693 = scalar_lea.vmem %s439, 64 [#allocation2]
        %v694 = vld [vmem:[%s693] sm:$0xf]
        %v695 = vld [vmem:[%s693 + $0x4] sm:$0xf]
        %v696 = vld [vmem:[%s693 + $0x8] sm:$0xf]
        %v697 = vld [vmem:[%s693 + $0xc] sm:$0xf]
        %v698 = vld [vmem:[%s693 + $0x10] sm:$0xf]
        %v699 = vld [vmem:[%s693 + $0x14] sm:$0xf]
        %v700 = vld [vmem:[%s693 + $0x18] sm:$0xf]
        %v701 = vld [vmem:[%s693 + $0x1c] sm:$0xf]
        %v702 = vld [vmem:[%s693 + $0x20] sm:$0xf]
        %v703 = vld [vmem:[%s693 + $0x24] sm:$0xf]
        %v704 = vld [vmem:[%s693 + $0x28] sm:$0xf]
        %v705 = vld [vmem:[%s693 + $0x2c] sm:$0xf]
        %v706 = vld [vmem:[%s693 + $0x30] sm:$0xf]
        %v707 = vld [vmem:[%s693 + $0x34] sm:$0xf]
        %v708 = vld [vmem:[%s693 + $0x38] sm:$0xf]
        %v709 = vld [vmem:[%s693 + $0x3c] sm:$0xf]
        %v726 = vunpack.c.l.b16 %v694
        %v727 = vunpack.c.l.b16 %v695
        %v728 = vunpack.c.l.b16 %v696
        %v729 = vunpack.c.l.b16 %v697
        %v730 = vunpack.c.l.b16 %v698
        %v731 = vunpack.c.l.b16 %v699
        %v732 = vunpack.c.l.b16 %v700
        %v733 = vunpack.c.l.b16 %v701
        %v734 = vunpack.c.l.b16 %v702
        %v735 = vunpack.c.l.b16 %v703
        %v736 = vunpack.c.l.b16 %v704
        %v737 = vunpack.c.l.b16 %v705
        %v738 = vunpack.c.l.b16 %v706
        %v739 = vunpack.c.l.b16 %v707
        %v740 = vunpack.c.l.b16 %v708
        %v741 = vunpack.c.l.b16 %v709
        %v742 = vpack.c.b16 %v727, %v726
        %v743 = vpack.c.b16 %v729, %v728
        %v744 = vpack.c.b16 %v731, %v730
        %v745 = vpack.c.b16 %v733, %v732
        %v746 = vpack.c.b16 %v735, %v734
        %v747 = vpack.c.b16 %v737, %v736
        %v748 = vpack.c.b16 %v739, %v738
        %v749 = vpack.c.b16 %v741, %v740
        %758 = vmatprep.subr.bf16.mxu0 0
        %759 = vmatpush1.bf16.msra.mxu0 %v580
        %760 = vmatprep.subr.bf16.mxu0 0
        %761 = vmatpush1.bf16.msra.mxu0 %v581
        %762 = vmatprep.subr.bf16.mxu0 0
        %763 = vmatpush1.bf16.msra.mxu0 %v582
        %764 = vmatprep.subr.bf16.mxu0 0
        %765 = vmatpush1.bf16.msra.mxu0 %v583
        %766 = vmatprep.subr.bf16.mxu0 0
        %767 = vmatpush1.bf16.msra.mxu0 %v584
        %768 = vmatprep.subr.bf16.mxu0 0
        %769 = vmatpush1.bf16.msra.mxu0 %v585
        %770 = vmatprep.subr.bf16.mxu0 0
        %771 = vmatpush1.bf16.msra.mxu0 %v586
        %772 = vmatprep.subr.bf16.mxu0 0
        %773 = vmatpush1.bf16.msra.mxu0 %v587
        %774 = vmatprep.subr.bf16.mxu0 0
        %775 = vmatpush1.bf16.msra.mxu0 0
        %776 = vmatprep.subr.bf16.mxu0 0
        %777 = vmatpush1.bf16.msra.mxu0 0
        %778 = vmatprep.subr.bf16.mxu0 0
        %779 = vmatpush1.bf16.msra.mxu0 0
        %780 = vmatprep.subr.bf16.mxu0 0
        %781 = vmatpush1.bf16.msra.mxu0 0
        %782 = vmatprep.subr.bf16.mxu0 0
        %783 = vmatpush1.bf16.msra.mxu0 0
        %784 = vmatprep.subr.bf16.mxu0 0
        %785 = vmatpush1.bf16.msra.mxu0 0
        %786 = vmatprep.subr.bf16.mxu0 0
        %787 = vmatpush1.bf16.msra.mxu0 0
        %788 = vmatprep.subr.bf16.mxu0 0
        %789 = vmatpush1.bf16.msra.mxu0 0
        %790 = vmatprep.mubr.bf16.mxu0 0
        %791 = vmatmul.mubr.bf16.gmra.mrb[0].mxu0 %v742
        %v792 = vpop.f32.mrb[0].mxu0
        %v793 = vadd.f32 0.0, %v792
        %v794 = vpop.f32.mrb[0].mxu0
        %v795 = vpop.f32.mrb[0].mxu0
        %v796 = vadd.f32 0.0, %v795
        %v797 = vpop.f32.mrb[0].mxu0
        %798 = vmatprep.mubr.bf16.mxu0 0
        %799 = vmatmul.mubr.bf16.gmra.mrb[0].mxu0 %v743
        %v800 = vpop.f32.mrb[0].mxu0
        %v801 = vadd.f32 0.0, %v800
        %v802 = vpop.f32.mrb[0].mxu0
        %v803 = vpop.f32.mrb[0].mxu0
        %v804 = vadd.f32 0.0, %v803
        %v805 = vpop.f32.mrb[0].mxu0
        %806 = vmatprep.mubr.bf16.mxu0 0
        %807 = vmatmul.mubr.bf16.gmra.mrb[0].mxu0 %v744
        %v808 = vpop.f32.mrb[0].mxu0
        %v809 = vadd.f32 0.0, %v808
        %v810 = vpop.f32.mrb[0].mxu0
        %v811 = vpop.f32.mrb[0].mxu0
        %v812 = vadd.f32 0.0, %v811
        %v813 = vpop.f32.mrb[0].mxu0
        %814 = vmatprep.mubr.bf16.mxu0 0
        %815 = vmatmul.mubr.bf16.gmra.mrb[0].mxu0 %v745
        %v816 = vpop.f32.mrb[0].mxu0
        %v817 = vadd.f32 0.0, %v816
        %v818 = vpop.f32.mrb[0].mxu0
        %v819 = vpop.f32.mrb[0].mxu0
        %v820 = vadd.f32 0.0, %v819
        %v821 = vpop.f32.mrb[0].mxu0
        %822 = vmatprep.mubr.bf16.mxu0 0
        %823 = vmatmul.mubr.bf16.gmra.mrb[0].mxu0 %v746
        %v824 = vpop.f32.mrb[0].mxu0
        %v825 = vadd.f32 0.0, %v824
        %v826 = vpop.f32.mrb[0].mxu0
        %v827 = vpop.f32.mrb[0].mxu0
        %v828 = vadd.f32 0.0, %v827
        %v829 = vpop.f32.mrb[0].mxu0
        %830 = vmatprep.mubr.bf16.mxu0 0
        %831 = vmatmul.mubr.bf16.gmra.mrb[0].mxu0 %v747
        %v832 = vpop.f32.mrb[0].mxu0
        %v833 = vadd.f32 0.0, %v832
        %v834 = vpop.f32.mrb[0].mxu0
        %v835 = vpop.f32.mrb[0].mxu0
        %v836 = vadd.f32 0.0, %v835
        %v837 = vpop.f32.mrb[0].mxu0
        %838 = vmatprep.mubr.bf16.mxu0 0
        %839 = vmatmul.mubr.bf16.gmra.mrb[0].mxu0 %v748
        %v840 = vpop.f32.mrb[0].mxu0
        %v841 = vadd.f32 0.0, %v840
        %v842 = vpop.f32.mrb[0].mxu0
        %v843 = vpop.f32.mrb[0].mxu0
        %v844 = vadd.f32 0.0, %v843
        %v845 = vpop.f32.mrb[0].mxu0
        %846 = vmatprep.mubr.bf16.mxu0 0
        %847 = vmatmul.mubr.bf16.gmra.mrb[0].mxu0 %v749
        %v848 = vpop.f32.mrb[0].mxu0
        %v849 = vadd.f32 0.0, %v848
        %v850 = vpop.f32.mrb[0].mxu0
        %v851 = vpop.f32.mrb[0].mxu0
        %v852 = vadd.f32 0.0, %v851
        %v853 = vpop.f32.mrb[0].mxu0
        %854 = vdwg.mxu0
        %v855 = vmax.f32 %v631, %v793
        %v856 = vmax.f32 %v634, %v796
        %v857 = vmax.f32 %v639, %v801
        %v858 = vmax.f32 %v642, %v804
        %v859 = vmax.f32 %v647, %v809
        %v860 = vmax.f32 %v650, %v812
        %v861 = vmax.f32 %v655, %v817
        %v862 = vmax.f32 %v658, %v820
        %v863 = vmax.f32 %v663, %v825
        %v864 = vmax.f32 %v666, %v828
        %v865 = vmax.f32 %v671, %v833
        %v866 = vmax.f32 %v674, %v836
        %v867 = vmax.f32 %v679, %v841
        %v868 = vmax.f32 %v682, %v844
        %v869 = vmax.f32 %v687, %v849
        %v870 = vmax.f32 %v690, %v852
        %s871 = scalar_lea.vmem %s439, 128 [#allocation2]
        %v872 = vld [vmem:[%s871] sm:$0xf]
        %v873 = vld [vmem:[%s871 + $0x4] sm:$0xf]
        %v874 = vld [vmem:[%s871 + $0x8] sm:$0xf]
        %v875 = vld [vmem:[%s871 + $0xc] sm:$0xf]
        %v876 = vld [vmem:[%s871 + $0x10] sm:$0xf]
        %v877 = vld [vmem:[%s871 + $0x14] sm:$0xf]
        %v878 = vld [vmem:[%s871 + $0x18] sm:$0xf]
        %v879 = vld [vmem:[%s871 + $0x1c] sm:$0xf]
        %v880 = vld [vmem:[%s871 + $0x20] sm:$0xf]
        %v881 = vld [vmem:[%s871 + $0x24] sm:$0xf]
        %v882 = vld [vmem:[%s871 + $0x28] sm:$0xf]
        %v883 = vld [vmem:[%s871 + $0x2c] sm:$0xf]
        %v884 = vld [vmem:[%s871 + $0x30] sm:$0xf]
        %v885 = vld [vmem:[%s871 + $0x34] sm:$0xf]
        %v886 = vld [vmem:[%s871 + $0x38] sm:$0xf]
        %v887 = vld [vmem:[%s871 + $0x3c] sm:$0xf]
        %v904 = vunpack.c.l.b16 %v872
        %v905 = vunpack.c.l.b16 %v873
        %v906 = vunpack.c.l.b16 %v874
        %v907 = vunpack.c.l.b16 %v875
        %v908 = vunpack.c.l.b16 %v876
        %v909 = vunpack.c.l.b16 %v877
        %v910 = vunpack.c.l.b16 %v878
        %v911 = vunpack.c.l.b16 %v879
        %v912 = vunpack.c.l.b16 %v880
        %v913 = vunpack.c.l.b16 %v881
        %v914 = vunpack.c.l.b16 %v882
        %v915 = vunpack.c.l.b16 %v883
        %v916 = vunpack.c.l.b16 %v884
        %v917 = vunpack.c.l.b16 %v885
        %v918 = vunpack.c.l.b16 %v886
        %v919 = vunpack.c.l.b16 %v887
        %v920 = vpack.c.b16 %v905, %v904
        %v921 = vpack.c.b16 %v907, %v906
        %v922 = vpack.c.b16 %v909, %v908
        %v923 = vpack.c.b16 %v911, %v910
        %v924 = vpack.c.b16 %v913, %v912
        %v925 = vpack.c.b16 %v915, %v914
        %v926 = vpack.c.b16 %v917, %v916
        %v927 = vpack.c.b16 %v919, %v918
        %936 = vmatprep.subr.bf16.mxu0 0
        %937 = vmatpush1.bf16.msra.mxu0 %v580
        %938 = vmatprep.subr.bf16.mxu0 0
        %939 = vmatpush1.bf16.msra.mxu0 %v581
        %940 = vmatprep.subr.bf16.mxu0 0
        %941 = vmatpush1.bf16.msra.mxu0 %v582
        %942 = vmatprep.subr.bf16.mxu0 0
        %943 = vmatpush1.bf16.msra.mxu0 %v583
        %944 = vmatprep.subr.bf16.mxu0 0
        %945 = vmatpush1.bf16.msra.mxu0 %v584
        %946 = vmatprep.subr.bf16.mxu0 0
        %947 = vmatpush1.bf16.msra.mxu0 %v585
        %948 = vmatprep.subr.bf16.mxu0 0
        %949 = vmatpush1.bf16.msra.mxu0 %v586
        %950 = vmatprep.subr.bf16.mxu0 0
        %951 = vmatpush1.bf16.msra.mxu0 %v587
        %952 = vmatprep.subr.bf16.mxu0 0
        %953 = vmatpush1.bf16.msra.mxu0 0
        %954 = vmatprep.subr.bf16.mxu0 0
        %955 = vmatpush1.bf16.msra.mxu0 0
        %956 = vmatprep.subr.bf16.mxu0 0
        %957 = vmatpush1.bf16.msra.mxu0 0
        %958 = vmatprep.subr.bf16.mxu0 0
        %959 = vmatpush1.bf16.msra.mxu0 0
        %960 = vmatprep.subr.bf16.mxu0 0
        %961 = vmatpush1.bf16.msra.mxu0 0
        %962 = vmatprep.subr.bf16.mxu0 0
        %963 = vmatpush1.bf16.msra.mxu0 0
        %964 = vmatprep.subr.bf16.mxu0 0
        %965 = vmatpush1.bf16.msra.mxu0 0
        %966 = vmatprep.subr.bf16.mxu0 0
        %967 = vmatpush1.bf16.msra.mxu0 0
        %968 = vmatprep.mubr.bf16.mxu0 0
        %969 = vmatmul.mubr.bf16.gmra.mrb[0].mxu0 %v920
        %v970 = vpop.f32.mrb[0].mxu0
        %v971 = vadd.f32 0.0, %v970
        %v972 = vpop.f32.mrb[0].mxu0
        %v973 = vpop.f32.mrb[0].mxu0
        %v974 = vadd.f32 0.0, %v973
        %v975 = vpop.f32.mrb[0].mxu0
        %976 = vmatprep.mubr.bf16.mxu0 0
        %977 = vmatmul.mubr.bf16.gmra.mrb[0].mxu0 %v921
        %v978 = vpop.f32.mrb[0].mxu0
        %v979 = vadd.f32 0.0, %v978
        %v980 = vpop.f32.mrb[0].mxu0
        %v981 = vpop.f32.mrb[0].mxu0
        %v982 = vadd.f32 0.0, %v981
        %v983 = vpop.f32.mrb[0].mxu0
        %984 = vmatprep.mubr.bf16.mxu0 0
        %985 = vmatmul.mubr.bf16.gmra.mrb[0].mxu0 %v922
        %v986 = vpop.f32.mrb[0].mxu0
        %v987 = vadd.f32 0.0, %v986
        %v988 = vpop.f32.mrb[0].mxu0
        %v989 = vpop.f32.mrb[0].mxu0
        %v990 = vadd.f32 0.0, %v989
        %v991 = vpop.f32.mrb[0].mxu0
        %992 = vmatprep.mubr.bf16.mxu0 0
        %993 = vmatmul.mubr.bf16.gmra.mrb[0].mxu0 %v923
        %v994 = vpop.f32.mrb[0].mxu0
        %v995 = vadd.f32 0.0, %v994
        %v996 = vpop.f32.mrb[0].mxu0
        %v997 = vpop.f32.mrb[0].mxu0
        %v998 = vadd.f32 0.0, %v997
        %v999 = vpop.f32.mrb[0].mxu0
        %1000 = vmatprep.mubr.bf16.mxu0 0
        %1001 = vmatmul.mubr.bf16.gmra.mrb[0].mxu0 %v924
        %v1002 = vpop.f32.mrb[0].mxu0
        %v1003 = vadd.f32 0.0, %v1002
        %v1004 = vpop.f32.mrb[0].mxu0
        %v1005 = vpop.f32.mrb[0].mxu0
        %v1006 = vadd.f32 0.0, %v1005
        %v1007 = vpop.f32.mrb[0].mxu0
        %1008 = vmatprep.mubr.bf16.mxu0 0
        %1009 = vmatmul.mubr.bf16.gmra.mrb[0].mxu0 %v925
        %v1010 = vpop.f32.mrb[0].mxu0
        %v1011 = vadd.f32 0.0, %v1010
        %v1012 = vpop.f32.mrb[0].mxu0
        %v1013 = vpop.f32.mrb[0].mxu0
        %v1014 = vadd.f32 0.0, %v1013
        %v1015 = vpop.f32.mrb[0].mxu0
        %1016 = vmatprep.mubr.bf16.mxu0 0
        %1017 = vmatmul.mubr.bf16.gmra.mrb[0].mxu0 %v926
        %v1018 = vpop.f32.mrb[0].mxu0
        %v1019 = vadd.f32 0.0, %v1018
        %v1020 = vpop.f32.mrb[0].mxu0
        %v1021 = vpop.f32.mrb[0].mxu0
        %v1022 = vadd.f32 0.0, %v1021
        %v1023 = vpop.f32.mrb[0].mxu0
        %1024 = vmatprep.mubr.bf16.mxu0 0
        %1025 = vmatmul.mubr.bf16.gmra.mrb[0].mxu0 %v927
        %v1026 = vpop.f32.mrb[0].mxu0
        %v1027 = vadd.f32 0.0, %v1026
        %v1028 = vpop.f32.mrb[0].mxu0
        %v1029 = vpop.f32.mrb[0].mxu0
        %v1030 = vadd.f32 0.0, %v1029
        %v1031 = vpop.f32.mrb[0].mxu0
        %1032 = vdwg.mxu0
        %v1033 = vmax.f32 %v855, %v971
        %v1034 = vmax.f32 %v856, %v974
        %v1035 = vmax.f32 %v857, %v979
        %v1036 = vmax.f32 %v858, %v982
        %v1037 = vmax.f32 %v859, %v987
        %v1038 = vmax.f32 %v860, %v990
        %v1039 = vmax.f32 %v861, %v995
        %v1040 = vmax.f32 %v862, %v998
        %v1041 = vmax.f32 %v863, %v1003
        %v1042 = vmax.f32 %v864, %v1006
        %v1043 = vmax.f32 %v865, %v1011
        %v1044 = vmax.f32 %v866, %v1014
        %v1045 = vmax.f32 %v867, %v1019
        %v1046 = vmax.f32 %v868, %v1022
        %v1047 = vmax.f32 %v869, %v1027
        %v1048 = vmax.f32 %v870, %v1030
        %s1049 = scalar_lea.vmem %s439, 192 [#allocation2]
        %v1050 = vld [vmem:[%s1049] sm:$0xf]
        %v1051 = vld [vmem:[%s1049 + $0x4] sm:$0xf]
        %v1052 = vld [vmem:[%s1049 + $0x8] sm:$0xf]
        %v1053 = vld [vmem:[%s1049 + $0xc] sm:$0xf]
        %v1054 = vld [vmem:[%s1049 + $0x10] sm:$0xf]
        %v1055 = vld [vmem:[%s1049 + $0x14] sm:$0xf]
        %v1056 = vld [vmem:[%s1049 + $0x18] sm:$0xf]
        %v1057 = vld [vmem:[%s1049 + $0x1c] sm:$0xf]
        %v1058 = vld [vmem:[%s1049 + $0x20] sm:$0xf]
        %v1059 = vld [vmem:[%s1049 + $0x24] sm:$0xf]
        %v1060 = vld [vmem:[%s1049 + $0x28] sm:$0xf]
        %v1061 = vld [vmem:[%s1049 + $0x2c] sm:$0xf]
        %v1062 = vld [vmem:[%s1049 + $0x30] sm:$0xf]
        %v1063 = vld [vmem:[%s1049 + $0x34] sm:$0xf]
        %v1064 = vld [vmem:[%s1049 + $0x38] sm:$0xf]
        %v1065 = vld [vmem:[%s1049 + $0x3c] sm:$0xf]
        %v1082 = vunpack.c.l.b16 %v1050
        %v1083 = vunpack.c.l.b16 %v1051
        %v1084 = vunpack.c.l.b16 %v1052
        %v1085 = vunpack.c.l.b16 %v1053
        %v1086 = vunpack.c.l.b16 %v1054
        %v1087 = vunpack.c.l.b16 %v1055
        %v1088 = vunpack.c.l.b16 %v1056
        %v1089 = vunpack.c.l.b16 %v1057
        %v1090 = vunpack.c.l.b16 %v1058
        %v1091 = vunpack.c.l.b16 %v1059
        %v1092 = vunpack.c.l.b16 %v1060
        %v1093 = vunpack.c.l.b16 %v1061
        %v1094 = vunpack.c.l.b16 %v1062
        %v1095 = vunpack.c.l.b16 %v1063
        %v1096 = vunpack.c.l.b16 %v1064
        %v1097 = vunpack.c.l.b16 %v1065
        %v1098 = vpack.c.b16 %v1083, %v1082
        %v1099 = vpack.c.b16 %v1085, %v1084
        %v1100 = vpack.c.b16 %v1087, %v1086
        %v1101 = vpack.c.b16 %v1089, %v1088
        %v1102 = vpack.c.b16 %v1091, %v1090
        %v1103 = vpack.c.b16 %v1093, %v1092
        %v1104 = vpack.c.b16 %v1095, %v1094
        %v1105 = vpack.c.b16 %v1097, %v1096
        %1114 = vmatprep.subr.bf16.mxu0 0
        %1115 = vmatpush1.bf16.msra.mxu0 %v580
        %1116 = vmatprep.subr.bf16.mxu0 0
        %1117 = vmatpush1.bf16.msra.mxu0 %v581
        %1118 = vmatprep.subr.bf16.mxu0 0
        %1119 = vmatpush1.bf16.msra.mxu0 %v582
        %1120 = vmatprep.subr.bf16.mxu0 0
        %1121 = vmatpush1.bf16.msra.mxu0 %v583
        %1122 = vmatprep.subr.bf16.mxu0 0
        %1123 = vmatpush1.bf16.msra.mxu0 %v584
        %1124 = vmatprep.subr.bf16.mxu0 0
        %1125 = vmatpush1.bf16.msra.mxu0 %v585
        %1126 = vmatprep.subr.bf16.mxu0 0
        %1127 = vmatpush1.bf16.msra.mxu0 %v586
        %1128 = vmatprep.subr.bf16.mxu0 0
        %1129 = vmatpush1.bf16.msra.mxu0 %v587
        %1130 = vmatprep.subr.bf16.mxu0 0
        %1131 = vmatpush1.bf16.msra.mxu0 0
        %1132 = vmatprep.subr.bf16.mxu0 0
        %1133 = vmatpush1.bf16.msra.mxu0 0
        %1134 = vmatprep.subr.bf16.mxu0 0
        %1135 = vmatpush1.bf16.msra.mxu0 0
        %1136 = vmatprep.subr.bf16.mxu0 0
        %1137 = vmatpush1.bf16.msra.mxu0 0
        %1138 = vmatprep.subr.bf16.mxu0 0
        %1139 = vmatpush1.bf16.msra.mxu0 0
        %1140 = vmatprep.subr.bf16.mxu0 0
        %1141 = vmatpush1.bf16.msra.mxu0 0
        %1142 = vmatprep.subr.bf16.mxu0 0
        %1143 = vmatpush1.bf16.msra.mxu0 0
        %1144 = vmatprep.subr.bf16.mxu0 0
        %1145 = vmatpush1.bf16.msra.mxu0 0
        %1146 = vmatprep.mubr.bf16.mxu0 0
        %1147 = vmatmul.mubr.bf16.gmra.mrb[0].mxu0 %v1098
        %v1148 = vpop.f32.mrb[0].mxu0
        %v1149 = vadd.f32 0.0, %v1148
        %v1150 = vpop.f32.mrb[0].mxu0
        %v1151 = vpop.f32.mrb[0].mxu0
        %v1152 = vadd.f32 0.0, %v1151
        %v1153 = vpop.f32.mrb[0].mxu0
        %1154 = vmatprep.mubr.bf16.mxu0 0
        %1155 = vmatmul.mubr.bf16.gmra.mrb[0].mxu0 %v1099
        %v1156 = vpop.f32.mrb[0].mxu0
        %v1157 = vadd.f32 0.0, %v1156
        %v1158 = vpop.f32.mrb[0].mxu0
        %v1159 = vpop.f32.mrb[0].mxu0
        %v1160 = vadd.f32 0.0, %v1159
        %v1161 = vpop.f32.mrb[0].mxu0
        %1162 = vmatprep.mubr.bf16.mxu0 0
        %1163 = vmatmul.mubr.bf16.gmra.mrb[0].mxu0 %v1100
        %v1164 = vpop.f32.mrb[0].mxu0
        %v1165 = vadd.f32 0.0, %v1164
        %v1166 = vpop.f32.mrb[0].mxu0
        %v1167 = vpop.f32.mrb[0].mxu0
        %v1168 = vadd.f32 0.0, %v1167
        %v1169 = vpop.f32.mrb[0].mxu0
        %1170 = vmatprep.mubr.bf16.mxu0 0
        %1171 = vmatmul.mubr.bf16.gmra.mrb[0].mxu0 %v1101
        %v1172 = vpop.f32.mrb[0].mxu0
        %v1173 = vadd.f32 0.0, %v1172
        %v1174 = vpop.f32.mrb[0].mxu0
        %v1175 = vpop.f32.mrb[0].mxu0
        %v1176 = vadd.f32 0.0, %v1175
        %v1177 = vpop.f32.mrb[0].mxu0
        %1178 = vmatprep.mubr.bf16.mxu0 0
        %1179 = vmatmul.mubr.bf16.gmra.mrb[0].mxu0 %v1102
        %v1180 = vpop.f32.mrb[0].mxu0
        %v1181 = vadd.f32 0.0, %v1180
        %v1182 = vpop.f32.mrb[0].mxu0
        %v1183 = vpop.f32.mrb[0].mxu0
        %v1184 = vadd.f32 0.0, %v1183
        %v1185 = vpop.f32.mrb[0].mxu0
        %1186 = vmatprep.mubr.bf16.mxu0 0
        %1187 = vmatmul.mubr.bf16.gmra.mrb[0].mxu0 %v1103
        %v1188 = vpop.f32.mrb[0].mxu0
        %v1189 = vadd.f32 0.0, %v1188
        %v1190 = vpop.f32.mrb[0].mxu0
        %v1191 = vpop.f32.mrb[0].mxu0
        %v1192 = vadd.f32 0.0, %v1191
        %v1193 = vpop.f32.mrb[0].mxu0
        %1194 = vmatprep.mubr.bf16.mxu0 0
        %1195 = vmatmul.mubr.bf16.gmra.mrb[0].mxu0 %v1104
        %v1196 = vpop.f32.mrb[0].mxu0
        %v1197 = vadd.f32 0.0, %v1196
        %v1198 = vpop.f32.mrb[0].mxu0
        %v1199 = vpop.f32.mrb[0].mxu0
        %v1200 = vadd.f32 0.0, %v1199
        %v1201 = vpop.f32.mrb[0].mxu0
        %1202 = vmatprep.mubr.bf16.mxu0 0
        %1203 = vmatmul.mubr.bf16.gmra.mrb[0].mxu0 %v1105
        %v1204 = vpop.f32.mrb[0].mxu0
        %v1205 = vadd.f32 0.0, %v1204
        %v1206 = vpop.f32.mrb[0].mxu0
        %v1207 = vpop.f32.mrb[0].mxu0
        %v1208 = vadd.f32 0.0, %v1207
        %v1209 = vpop.f32.mrb[0].mxu0
        %1210 = vdwg.mxu0
        %v1211 = vmax.f32 %v1033, %v1149
        %v1212 = vmax.f32 %v1034, %v1152
        %v1213 = vmax.f32 %v1035, %v1157
        %v1214 = vmax.f32 %v1036, %v1160
        %v1215 = vmax.f32 %v1037, %v1165
        %v1216 = vmax.f32 %v1038, %v1168
        %v1217 = vmax.f32 %v1039, %v1173
        %v1218 = vmax.f32 %v1040, %v1176
        %v1219 = vmax.f32 %v1041, %v1181
        %v1220 = vmax.f32 %v1042, %v1184
        %v1221 = vmax.f32 %v1043, %v1189
        %v1222 = vmax.f32 %v1044, %v1192
        %v1223 = vmax.f32 %v1045, %v1197
        %v1224 = vmax.f32 %v1046, %v1200
        %v1225 = vmax.f32 %v1047, %v1205
        %v1226 = vmax.f32 %v1048, %v1208
        %v1227 = vld [vmem:[%s2] sm:$0x1]
        %v1229 = vlaneseq
        %v1230 = vshrl.u32 %v1229, 7
        %v1231 = vsub.s32 0, %v1230
        %v1232 = vrot.slane %v1227, %v1231
        %v1234 = vadd.f32 %v1211, %v1232
        %v1235 = vadd.f32 %v1212, %v1232
        %v1236 = vadd.f32 %v1213, %v1232
        %v1237 = vadd.f32 %v1214, %v1232
        %v1238 = vadd.f32 %v1215, %v1232
        %v1239 = vadd.f32 %v1216, %v1232
        %v1240 = vadd.f32 %v1217, %v1232
        %v1241 = vadd.f32 %v1218, %v1232
        %v1242 = vadd.f32 %v1219, %v1232
        %v1243 = vadd.f32 %v1220, %v1232
        %v1244 = vadd.f32 %v1221, %v1232
        %v1245 = vadd.f32 %v1222, %v1232
        %v1246 = vadd.f32 %v1223, %v1232
        %v1247 = vadd.f32 %v1224, %v1232
        %v1248 = vadd.f32 %v1225, %v1232
        %v1249 = vadd.f32 %v1226, %v1232
        %v1250 = vmax.f32 %v1234, 0.0
        %v1251 = vmax.f32 %v1235, 0.0
        %v1252 = vmax.f32 %v1236, 0.0
        %v1253 = vmax.f32 %v1237, 0.0
        %v1254 = vmax.f32 %v1238, 0.0
        %v1255 = vmax.f32 %v1239, 0.0
        %v1256 = vmax.f32 %v1240, 0.0
        %v1257 = vmax.f32 %v1241, 0.0
        %v1258 = vmax.f32 %v1242, 0.0
        %v1259 = vmax.f32 %v1243, 0.0
        %v1260 = vmax.f32 %v1244, 0.0
        %v1261 = vmax.f32 %v1245, 0.0
        %v1262 = vmax.f32 %v1246, 0.0
        %v1263 = vmax.f32 %v1247, 0.0
        %v1264 = vmax.f32 %v1248, 0.0
        %v1265 = vmax.f32 %v1249, 0.0
        %v1266 = vpack.c.bf16 %v1251, %v1250
        %v1267 = vpack.c.bf16 %v1253, %v1252
        %v1268 = vpack.c.bf16 %v1255, %v1254
        %v1269 = vpack.c.bf16 %v1257, %v1256
        %v1270 = vpack.c.bf16 %v1259, %v1258
        %v1271 = vpack.c.bf16 %v1261, %v1260
        %v1272 = vpack.c.bf16 %v1263, %v1262
        %v1273 = vpack.c.bf16 %v1265, %v1264
        %v1282 = vunpack.c.l.b16 %v1266
        %v1283 = vunpack.c.h.b16 %v1266
        %v1284 = vunpack.c.l.b16 %v1267
        %v1285 = vunpack.c.h.b16 %v1267
        %v1286 = vunpack.c.l.b16 %v1268
        %v1287 = vunpack.c.h.b16 %v1268
        %v1288 = vunpack.c.l.b16 %v1269
        %v1289 = vunpack.c.h.b16 %v1269
        %v1290 = vunpack.c.l.b16 %v1270
        %v1291 = vunpack.c.h.b16 %v1270
        %v1292 = vunpack.c.l.b16 %v1271
        %v1293 = vunpack.c.h.b16 %v1271
        %v1294 = vunpack.c.l.b16 %v1272
        %v1295 = vunpack.c.h.b16 %v1272
        %v1296 = vunpack.c.l.b16 %v1273
        %v1297 = vunpack.c.h.b16 %v1273
        %v1298 = vpack.c.b16 %v1282, %v1282
        %v1299 = vpack.c.b16 %v1283, %v1283
        %v1300 = vpack.c.b16 %v1284, %v1284
        %v1301 = vpack.c.b16 %v1285, %v1285
        %v1302 = vpack.c.b16 %v1286, %v1286
        %v1303 = vpack.c.b16 %v1287, %v1287
        %v1304 = vpack.c.b16 %v1288, %v1288
        %v1305 = vpack.c.b16 %v1289, %v1289
        %v1306 = vpack.c.b16 %v1290, %v1290
        %v1307 = vpack.c.b16 %v1291, %v1291
        %v1308 = vpack.c.b16 %v1292, %v1292
        %v1309 = vpack.c.b16 %v1293, %v1293
        %v1310 = vpack.c.b16 %v1294, %v1294
        %v1311 = vpack.c.b16 %v1295, %v1295
        %v1312 = vpack.c.b16 %v1296, %v1296
        %v1313 = vpack.c.b16 %v1297, %v1297
        %1330 = vst [vmem:[%s465] sm:$0xf] %v1298
        %1331 = vst [vmem:[%s465 + $0x4] sm:$0xf] %v1299
        %1332 = vst [vmem:[%s465 + $0x8] sm:$0xf] %v1300
        %1333 = vst [vmem:[%s465 + $0xc] sm:$0xf] %v1301
        %1334 = vst [vmem:[%s465 + $0x10] sm:$0xf] %v1302
        %1335 = vst [vmem:[%s465 + $0x14] sm:$0xf] %v1303
        %1336 = vst [vmem:[%s465 + $0x18] sm:$0xf] %v1304
        %1337 = vst [vmem:[%s465 + $0x1c] sm:$0xf] %v1305
        %1338 = vst [vmem:[%s465 + $0x20] sm:$0xf] %v1306
        %1339 = vst [vmem:[%s465 + $0x24] sm:$0xf] %v1307
        %1340 = vst [vmem:[%s465 + $0x28] sm:$0xf] %v1308
        %1341 = vst [vmem:[%s465 + $0x2c] sm:$0xf] %v1309
        %1342 = vst [vmem:[%s465 + $0x30] sm:$0xf] %v1310
        %1343 = vst [vmem:[%s465 + $0x34] sm:$0xf] %v1311
        %1344 = vst [vmem:[%s465 + $0x38] sm:$0xf] %v1312
        %1345 = vst [vmem:[%s465 + $0x3c] sm:$0xf] %v1313
        %s1346 = smul.u32 16, %s14
        %p1347 = scmp.lt.s32.totalorder %s1346, 63
        %s1348 = scalar_select %p1347, %s1346, 63
        %s1349 = smul.addr %s1348, 4
        %s1350 = scalar_lea.vmem %s3, %s1349
        // Predicated region
        $region74: #{fedavg_cnn_forward.3} parent=68 // pred_check
          %p1351 = pneg %p100
        $region75: #{fedavg_cnn_forward.3} parent=68 // pred_check_branch
          %1353 = sbr.rel (%p1351) target = $region77
        $region76: #{fedavg_cnn_forward.3} parent=68 // pred_region
          %s1354 = smul.u32 16, %s14
        $region77: #{fedavg_cnn_forward.3} parent=68 // pred_fallthru
          _
      $region69: #{fedavg_cnn_forward.3} parent=5 // pred_fallthru
        _
      %p1355 = scmp.le.s32.totalorder 2, %s9
      // Predicated region
      $region78: #{fedavg_cnn_forward.3} parent=5 // pred_check
        %p1356 = pneg %p1355
      $region79: #{fedavg_cnn_forward.3} parent=5 // pred_check_branch
        %1358 = sbr.rel (%p1356) target = $region81
      $region80: #{fedavg_cnn_forward.3} parent=5 // pred_region
        %s1359 = ssub.s32 %s9, 2
        // Predicated region
        $region82: #{fedavg_cnn_forward.3} parent=80 // pred_check
          %p1360 = pneg %p106
        $region83: #{fedavg_cnn_forward.3} parent=80 // pred_check_branch
          %1362 = sbr.rel (%p1360) target = $region85
        $region84: #{fedavg_cnn_forward.3} parent=80 // pred_region
          %s1363 = smul.u32 16, %s15
          %p1364 = scmp.lt.s32.totalorder %s1363, 63
          %s1365 = scalar_select %p1364, %s1363, 63
          %s1366 = smul.addr %s1365, 4
          %s1367 = scalar_lea.vmem %s3, %s1366
        $region85: #{fedavg_cnn_forward.3} parent=80 // pred_fallthru
          _
      $region81: #{fedavg_cnn_forward.3} parent=5 // pred_fallthru
        _
    $region6: #{fedavg_cnn_forward.3} parent=1 // loop_footer
      %s13 = sadd.s32 1, %s9
    $region7: #{fedavg_cnn_forward.3} parent=1 // loop_footer_branch
      %8 = sbr.rel target = $region3
    $region8: #{fedavg_cnn_forward.3} parent=1 // loop_exit
      _

// kernel: fedavg_cnn_forward.4
$region0: #{fedavg_cnn_forward.4}
  #allocation0 [shape = 'u32[]', space=smem, size = 0x4, offset = 0x4, fixed_abs, tag = 'smem constant byte address 0x4 - core index']
  #allocation1 [shape = 'u32[144,128]{1,0:T(1,128)}', space=vmem, size = 0x12000, scoped, tag = 'internal scratch']
  %s0 = inlined_call_operand.vmem [shape: bf16[4,64,896], index: 0, kind: input, shape index: {}]
  %s1 = inlined_call_operand.vmem [shape: bf16[896,128], index: 1, kind: input, shape index: {}]
  %s2 = inlined_call_operand.vmem [shape: f32[1,128], index: 2, kind: input, shape index: {}]
  %s3 = inlined_call_operand.vmem [shape: bf16[64,128], index: 3, kind: output, shape index: {}]
  %s4 = sld [smem:[#allocation0]]
  $region71: #{fedavg_cnn_forward.4} parent=0
    _
  %s6 = ssub.s32 1, %s4
  %s7 = scalar_select 0, %s6, %s4
  $region1: #{fedavg_cnn_forward.4} parent=0
    #allocation2 [shape = 'u8[229376]{0}', space=vmem, size = 0x38000, scoped, tag = 'input window, operand 0']
    loop: start=0, step=1, limit=6
    $region2: #{fedavg_cnn_forward.4} parent=1 // loop_pre_header
      _
    $region3: #{fedavg_cnn_forward.4} parent=1 // loop_header
      %s9 = sphi 0, %s13
      %p10 = scmp.ge.s32.totalorder %s9, 6
      %s19 = sphi 0, %s21
      %s22 = sphi 0, %s19
      %s23 = sphi 0, %s22
      %s39 = sphi 0, %s23
      %s43 = sphi 0, %s43
      %s45 = sphi 0, %s43
      %s46 = sphi 0, %s45
      %s60 = sphi 0, %s46
      %s64 = sphi 0, %s64
      %s66 = sphi 0, %s64
      %s67 = sphi 0, %s66
      %s81 = sphi 0, %s67
      %s87 = sphi 0, %s89
      %s90 = sphi 0, %s87
      %s91 = sphi 0, %s90
      %s107 = sphi 0, %s91
    $region4: #{fedavg_cnn_forward.4} parent=1 // loop_header_branch
      %12 = sbr.rel (%p10) target = $region8
    $region5: #{fedavg_cnn_forward.4} parent=1 // loop_body
      %s14 = ssub.s32 %s9, 1
      %s15 = ssub.s32 %s9, 2
      %s16 = sadd.s32 %s9, 1
      %s17 = ssub.s32 %s9, %s16
      %p18 = scmp.eq.s32.totalorder %s17, 0
      %s20 = sadd.s32 %s19, 1
      %s21 = scalar_select %p18, %s19, %s20
      %p24 = pneg %p18
      %p25 = scmp.eq.s32.totalorder %s9, 3
      %p26 = por %p24, %p25
      %p27 = scmp.ne.s32.totalorder %s19, %s22
      %p28 = scmp.eq.s32.totalorder %s9, 0
      %p29 = por %p27, %p28
      %p30 = scmp.ne.s32.totalorder %s19, %s22
      %p31 = scmp.eq.s32.totalorder %s14, 3
      %p32 = por %p30, %p31
      %p33 = scmp.ne.s32.totalorder %s22, %s23
      %p34 = scmp.eq.s32.totalorder %s14, 0
      %p35 = por %p33, %p34
      %p36 = scmp.ne.s32.totalorder %s22, %s23
      %p37 = scmp.eq.s32.totalorder %s15, 3
      %p38 = por %p36, %p37
      %p40 = scmp.ne.s32.totalorder %s23, %s39
      %p41 = scmp.eq.s32.totalorder %s15, 0
      %p42 = por %p40, %p41
      %s44 = sadd.s32 %s43, 1
      %p47 = scmp.eq.s32.totalorder %s9, 3
      %p48 = scmp.ne.s32.totalorder %s43, %s45
      %p49 = scmp.eq.s32.totalorder %s9, 0
      %p50 = por %p48, %p49
      %p51 = scmp.ne.s32.totalorder %s43, %s45
      %p52 = scmp.eq.s32.totalorder %s14, 3
      %p53 = por %p51, %p52
      %p54 = scmp.ne.s32.totalorder %s45, %s46
      %p55 = scmp.eq.s32.totalorder %s14, 0
      %p56 = por %p54, %p55
      %p57 = scmp.ne.s32.totalorder %s45, %s46
      %p58 = scmp.eq.s32.totalorder %s15, 3
      %p59 = por %p57, %p58
      %p61 = scmp.ne.s32.totalorder %s46, %s60
      %p62 = scmp.eq.s32.totalorder %s15, 0
      %p63 = por %p61, %p62
      %s65 = sadd.s32 %s64, 1
      %p68 = scmp.eq.s32.totalorder %s9, 3
      %p69 = scmp.ne.s32.totalorder %s64, %s66
      %p70 = scmp.eq.s32.totalorder %s9, 0
      %p71 = por %p69, %p70
      %p72 = scmp.ne.s32.totalorder %s64, %s66
      %p73 = scmp.eq.s32.totalorder %s14, 3
      %p74 = por %p72, %p73
      %p75 = scmp.ne.s32.totalorder %s66, %s67
      %p76 = scmp.eq.s32.totalorder %s14, 0
      %p77 = por %p75, %p76
      %p78 = scmp.ne.s32.totalorder %s66, %s67
      %p79 = scmp.eq.s32.totalorder %s15, 3
      %p80 = por %p78, %p79
      %p82 = scmp.ne.s32.totalorder %s67, %s81
      %p83 = scmp.eq.s32.totalorder %s15, 0
      %p84 = por %p82, %p83
      %s85 = ssub.s32 %s9, %s16
      %p86 = scmp.eq.s32.totalorder %s85, 0
      %s88 = sadd.s32 %s87, 1
      %s89 = scalar_select %p86, %s87, %s88
      %p92 = pneg %p86
      %p93 = scmp.eq.s32.totalorder %s9, 3
      %p94 = por %p92, %p93
      %p95 = scmp.ne.s32.totalorder %s87, %s90
      %p96 = scmp.eq.s32.totalorder %s9, 0
      %p97 = por %p95, %p96
      %p98 = scmp.ne.s32.totalorder %s87, %s90
      %p99 = scmp.eq.s32.totalorder %s14, 3
      %p100 = por %p98, %p99
      %p101 = scmp.ne.s32.totalorder %s90, %s91
      %p102 = scmp.eq.s32.totalorder %s14, 0
      %p103 = por %p101, %p102
      %p104 = scmp.ne.s32.totalorder %s90, %s91
      %p105 = scmp.eq.s32.totalorder %s15, 3
      %p106 = por %p104, %p105
      %p108 = scmp.ne.s32.totalorder %s91, %s107
      %p109 = scmp.eq.s32.totalorder %s15, 0
      %p110 = por %p108, %p109
      %p111 = scmp.le.s32.totalorder 1, %s9
      %p112 = scmp.lt.s32.totalorder %s9, 5
      %p113 = pnand %p111, %p112
      %p114 = pneg %p113
      // Predicated region
      $region9: #{fedavg_cnn_forward.4} parent=5 // pred_check
        _
      $region10: #{fedavg_cnn_forward.4} parent=5 // pred_check_branch
        %116 = sbr.rel (%p113) target = $region12
      $region11: #{fedavg_cnn_forward.4} parent=5 // pred_region
        %s117 = ssub.s32 %s9, 1
        // Predicated region
        $region13: #{fedavg_cnn_forward.4} parent=11 // pred_check
          %p118 = pneg %p56
        $region14: #{fedavg_cnn_forward.4} parent=11 // pred_check_branch
          %120 = sbr.rel (%p118) target = $region16
        $region15: #{fedavg_cnn_forward.4} parent=11 // pred_region
          _
        $region16: #{fedavg_cnn_forward.4} parent=11 // pred_fallthru
          _
        // Predicated region
        $region17: #{fedavg_cnn_forward.4} parent=11 // pred_check
          %p121 = pneg %p77
        $region18: #{fedavg_cnn_forward.4} parent=11 // pred_check_branch
          %123 = sbr.rel (%p121) target = $region20
        $region19: #{fedavg_cnn_forward.4} parent=11 // pred_region
          _
        $region20: #{fedavg_cnn_forward.4} parent=11 // pred_fallthru
          _
      $region12: #{fedavg_cnn_forward.4} parent=5 // pred_fallthru
        _
      %p124 = scmp.lt.s32.totalorder %s9, 4
      // Predicated region
      $region21: #{fedavg_cnn_forward.4} parent=5 // pred_check
        %p125 = pneg %p124
      $region22: #{fedavg_cnn_forward.4} parent=5 // pred_check_branch
        %127 = sbr.rel (%p125) target = $region24
      $region23: #{fedavg_cnn_forward.4} parent=5 // pred_region
        // Predicated region
        $region25: #{fedavg_cnn_forward.4} parent=23 // pred_check
          %p128 = pneg %p29
        $region26: #{fedavg_cnn_forward.4} parent=23 // pred_check_branch
          %130 = sbr.rel (%p128) target = $region28
        $region27: #{fedavg_cnn_forward.4} parent=23 // pred_region
          %s131 = sand.u32 %s19, 1
          %s132 = sand.u32 %s19, 1
          %s133 = smul.addr %s132, 224
          %s134 = scalar_lea.vmem [#allocation2], %s133
          %s135 = smul.u32 2, %s9
          %s136 = smul.addr %s135, 7
          %s137 = smul.addr %s136, 4
          %s138 = scalar_lea.vmem %s0, %s137
          // Predicated region
          $region29: #{fedavg_cnn_forward.4} parent=27 // pred_check
            _
          $region30: #{fedavg_cnn_forward.4} parent=27 // pred_check_branch
            %140 = sbr.rel (0) target = $region32
          $region31: #{fedavg_cnn_forward.4} parent=27 // pred_region
            // Predicated region
            $region33: #{fedavg_cnn_forward.4} parent=31 // pred_check
              _
            $region34: #{fedavg_cnn_forward.4} parent=31 // pred_check_branch
              %142 = sbr.rel (0) target = $region36
            $region35: #{fedavg_cnn_forward.4} parent=31 // pred_region
              %s143 = scalar_lea.vmem %s138, 24
              %s144 = scalar_lea.vmem %s134, 24 [#allocation2]
              loop: start=0, step=1, limit=1
              $region37: #{fedavg_cnn_forward.4} parent=35 // loop_pre_header
                _
              $region38: #{fedavg_cnn_forward.4} parent=35 // loop_header
                %s146 = sphi 0, %s150
                %p147 = scmp.ge.s32.totalorder %s146, 1
                %s151 = sphi %s138, %s138
                %s152 = sphi %s134, %s134
              $region39: #{fedavg_cnn_forward.4} parent=35 // loop_header_branch
                %149 = sbr.rel (%p147) target = $region43
              $region40: #{fedavg_cnn_forward.4} parent=35 // loop_body
                %v153 = vld [vmem:[%s151] sm:$0xff]
                %154 = vst [vmem:[%s152] sm:$0xff] %v153
                %v155 = vld [vmem:[%s151 + $0x8] sm:$0xff]
                %156 = vst [vmem:[%s152 + $0x8] sm:$0xff] %v155
                %v157 = vld [vmem:[%s151 + $0x10] sm:$0xff]
                %158 = vst [vmem:[%s152 + $0x10] sm:$0xff] %v157
                %v159 = vld [vmem:[%s151 + $0x1c] sm:$0xff]
                %160 = vst [vmem:[%s152 + $0x1c] sm:$0xff] %v159
                %v161 = vld [vmem:[%s151 + $0x24] sm:$0xff]
                %162 = vst [vmem:[%s152 + $0x24] sm:$0xff] %v161
                %v163 = vld [vmem:[%s151 + $0x2c] sm:$0xff]
                %164 = vst [vmem:[%s152 + $0x2c] sm:$0xff] %v163
                %v165 = vld [vmem:[%s151 + $0xe0] sm:$0xff]
                %166 = vst [vmem:[%s152 + $0x38] sm:$0xff] %v165
                %v167 = vld [vmem:[%s151 + $0xe8] sm:$0xff]
                %168 = vst [vmem:[%s152 + $0x40] sm:$0xff] %v167
                %v169 = vld [vmem:[%s151 + $0xf0] sm:$0xff]
                %170 = vst [vmem:[%s152 + $0x48] sm:$0xff] %v169
                %v171 = vld [vmem:[%s151 + $0xfc] sm:$0xff]
                %172 = vst [vmem:[%s152 + $0x54] sm:$0xff] %v171
                %v173 = vld [vmem:[%s151 + $0x104] sm:$0xff]
                %174 = vst [vmem:[%s152 + $0x5c] sm:$0xff] %v173
                %v175 = vld [vmem:[%s151 + $0x10c] sm:$0xff]
                %176 = vst [vmem:[%s152 + $0x64] sm:$0xff] %v175
                %v177 = vld [vmem:[%s151 + $0x1c0] sm:$0xff]
                %178 = vst [vmem:[%s152 + $0x70] sm:$0xff] %v177
                %v179 = vld [vmem:[%s151 + $0x1c8] sm:$0xff]
                %180 = vst [vmem:[%s152 + $0x78] sm:$0xff] %v179
                %v181 = vld [vmem:[%s151 + $0x1d0] sm:$0xff]
                %182 = vst [vmem:[%s152 + $0x80] sm:$0xff] %v181
                %v183 = vld [vmem:[%s151 + $0x1dc] sm:$0xff]
                %184 = vst [vmem:[%s152 + $0x8c] sm:$0xff] %v183
                %v185 = vld [vmem:[%s151 + $0x1e4] sm:$0xff]
                %186 = vst [vmem:[%s152 + $0x94] sm:$0xff] %v185
                %v187 = vld [vmem:[%s151 + $0x1ec] sm:$0xff]
                %188 = vst [vmem:[%s152 + $0x9c] sm:$0xff] %v187
                %v189 = vld [vmem:[%s151 + $0x2a0] sm:$0xff]
                %190 = vst [vmem:[%s152 + $0xa8] sm:$0xff] %v189
                %v191 = vld [vmem:[%s151 + $0x2a8] sm:$0xff]
                %192 = vst [vmem:[%s152 + $0xb0] sm:$0xff] %v191
                %v193 = vld [vmem:[%s151 + $0x2b0] sm:$0xff]
                %194 = vst [vmem:[%s152 + $0xb8] sm:$0xff] %v193
                %v195 = vld [vmem:[%s151 + $0x2bc] sm:$0xff]
                %196 = vst [vmem:[%s152 + $0xc4] sm:$0xff] %v195
                %v197 = vld [vmem:[%s151 + $0x2c4] sm:$0xff]
                %198 = vst [vmem:[%s152 + $0xcc] sm:$0xff] %v197
                %v199 = vld [vmem:[%s151 + $0x2cc] sm:$0xff]
                %200 = vst [vmem:[%s152 + $0xd4] sm:$0xff] %v199
              $region41: #{fedavg_cnn_forward.4} parent=35 // loop_footer
                %s150 = sadd.s32 1, %s146
              $region42: #{fedavg_cnn_forward.4} parent=35 // loop_footer_branch
                %145 = sbr.rel target = $region38
              $region43: #{fedavg_cnn_forward.4} parent=35 // loop_exit
                _
              loop: start=0, step=1, limit=1
              $region44: #{fedavg_cnn_forward.4} parent=35 // loop_pre_header
                _
              $region45: #{fedavg_cnn_forward.4} parent=35 // loop_header
                %s203 = sphi 0, %s207
                %p204 = scmp.ge.s32.totalorder %s203, 1
                %s208 = sphi %s143, %s143
                %s209 = sphi %s144, %s144
              $region46: #{fedavg_cnn_forward.4} parent=35 // loop_header_branch
                %206 = sbr.rel (%p204) target = $region50
              $region47: #{fedavg_cnn_forward.4} parent=35 // loop_body
                %v210 = vld [vmem:[%s208] sm:$0xf]
                %211 = vst [vmem:[%s209] sm:$0xf] %v210
                %v212 = vld [vmem:[%s208 + $0x1c] sm:$0xf]
                %213 = vst [vmem:[%s209 + $0x1c] sm:$0xf] %v212
                %v214 = vld [vmem:[%s208 + $0xe0] sm:$0xf]
                %215 = vst [vmem:[%s209 + $0x38] sm:$0xf] %v214
                %v216 = vld [vmem:[%s208 + $0xfc] sm:$0xf]
                %217 = vst [vmem:[%s209 + $0x54] sm:$0xf] %v216
                %v218 = vld [vmem:[%s208 + $0x1c0] sm:$0xf]
                %219 = vst [vmem:[%s209 + $0x70] sm:$0xf] %v218
                %v220 = vld [vmem:[%s208 + $0x1dc] sm:$0xf]
                %221 = vst [vmem:[%s209 + $0x8c] sm:$0xf] %v220
                %v222 = vld [vmem:[%s208 + $0x2a0] sm:$0xf]
                %223 = vst [vmem:[%s209 + $0xa8] sm:$0xf] %v222
                %v224 = vld [vmem:[%s208 + $0x2bc] sm:$0xf]
                %225 = vst [vmem:[%s209 + $0xc4] sm:$0xf] %v224
              $region48: #{fedavg_cnn_forward.4} parent=35 // loop_footer
                %s207 = sadd.s32 1, %s203
              $region49: #{fedavg_cnn_forward.4} parent=35 // loop_footer_branch
                %202 = sbr.rel target = $region45
              $region50: #{fedavg_cnn_forward.4} parent=35 // loop_exit
                _
            $region36: #{fedavg_cnn_forward.4} parent=31 // pred_fallthru
              _
          $region32: #{fedavg_cnn_forward.4} parent=27 // pred_fallthru
            _
          %226 = vnop
        $region28: #{fedavg_cnn_forward.4} parent=23 // pred_fallthru
          _
      $region24: #{fedavg_cnn_forward.4} parent=5 // pred_fallthru
        _
      %p227 = scmp.le.s32.totalorder 1, %s9
      %p228 = scmp.lt.s32.totalorder %s9, 5
      %p229 = pnand %p227, %p228
      %p230 = pneg %p229
      // Predicated region
      $region51: #{fedavg_cnn_forward.4} parent=5 // pred_check
        _
      $region52: #{fedavg_cnn_forward.4} parent=5 // pred_check_branch
        %232 = sbr.rel (%p229) target = $region54
      $region53: #{fedavg_cnn_forward.4} parent=5 // pred_region
        %s233 = ssub.s32 %s9, 1
        %s234 = sand.u32 %s22, 1
        %s235 = sand.u32 %s22, 1
        %s236 = smul.addr %s235, 224
        %s237 = scalar_lea.vmem [#allocation2], %s236
        // Predicated region
        $region55: #{fedavg_cnn_forward.4} parent=53 // pred_check
          %p238 = pneg %p35
        $region56: #{fedavg_cnn_forward.4} parent=53 // pred_check_branch
          %240 = sbr.rel (%p238) target = $region58
        $region57: #{fedavg_cnn_forward.4} parent=53 // pred_region
          _
        $region58: #{fedavg_cnn_forward.4} parent=53 // pred_fallthru
          _
        %s241 = sand.u32 %s22, 1
        %s242 = sand.u32 %s22, 1
        %s243 = smul.addr %s242, 224
        %s244 = scalar_lea.vmem [#allocation2], %s243
        %p245 = pneg %p35
        %p246 = pneg %p32
        %p247 = pneg %p56
        %p248 = pneg %p53
        %p249 = pneg %p77
        %p250 = pneg %p74
        %p251 = pneg %p103
        %p252 = pneg %p100
        %s253 = smul.u32 2, %s14
        %p254 = scmp.lt.s32.totalorder %s253, 7
        %s255 = scalar_select %p254, %s253, 7
        %s256 = smul.addr %s255, 4
        %s257 = scalar_lea.vmem %s3, %s256
        %s258 = smul.u32 2, %s14
        %s259 = smul.u32 2, %s14
        %p260 = scmp.lt.s32.totalorder %s259, 7
        %s261 = scalar_select %p260, %s259, 7
        %s262 = smul.addr %s261, 4
        %s263 = scalar_lea.vmem %s3, %s262
        %s264 = smul.u32 2, %s14
        %v266 = vld [vmem:[%s1] sm:$0xf]
        %v267 = vld [vmem:[%s1 + $0x4] sm:$0xf]
        %v268 = vld [vmem:[%s1 + $0x8] sm:$0xf]
        %v269 = vld [vmem:[%s1 + $0xc] sm:$0xf]
        %v270 = vld [vmem:[%s1 + $0x10] sm:$0xf]
        %v271 = vld [vmem:[%s1 + $0x14] sm:$0xf]
        %v272 = vld [vmem:[%s1 + $0x18] sm:$0xf]
        %v273 = vld [vmem:[%s1 + $0x1c] sm:$0xf]
        %v274 = vld [vmem:[%s1 + $0x20] sm:$0xf]
        %v275 = vld [vmem:[%s1 + $0x24] sm:$0xf]
        %v276 = vld [vmem:[%s1 + $0x28] sm:$0xf]
        %v277 = vld [vmem:[%s1 + $0x2c] sm:$0xf]
        %v278 = vld [vmem:[%s1 + $0x30] sm:$0xf]
        %v279 = vld [vmem:[%s1 + $0x34] sm:$0xf]
        %v280 = vld [vmem:[%s1 + $0x38] sm:$0xf]
        %v281 = vld [vmem:[%s1 + $0x3c] sm:$0xf]
        %v282 = vld [vmem:[%s1 + $0x40] sm:$0xf]
        %v283 = vld [vmem:[%s1 + $0x44] sm:$0xf]
        %v284 = vld [vmem:[%s1 + $0x48] sm:$0xf]
        %v285 = vld [vmem:[%s1 + $0x4c] sm:$0xf]
        %v286 = vld [vmem:[%s1 + $0x50] sm:$0xf]
        %v287 = vld [vmem:[%s1 + $0x54] sm:$0xf]
        %v288 = vld [vmem:[%s1 + $0x58] sm:$0xf]
        %v289 = vld [vmem:[%s1 + $0x5c] sm:$0xf]
        %v290 = vld [vmem:[%s1 + $0x60] sm:$0xf]
        %v291 = vld [vmem:[%s1 + $0x64] sm:$0xf]
        %v292 = vld [vmem:[%s1 + $0x68] sm:$0xf]
        %v293 = vld [vmem:[%s1 + $0x6c] sm:$0xf]
        %v294 = vld [vmem:[%s1 + $0x70] sm:$0xf]
        %v295 = vld [vmem:[%s1 + $0x74] sm:$0xf]
        %v296 = vld [vmem:[%s1 + $0x78] sm:$0xf]
        %v297 = vld [vmem:[%s1 + $0x7c] sm:$0xf]
        %v298 = vld [vmem:[%s1 + $0x80] sm:$0xf]
        %v299 = vld [vmem:[%s1 + $0x84] sm:$0xf]
        %v300 = vld [vmem:[%s1 + $0x88] sm:$0xf]
        %v301 = vld [vmem:[%s1 + $0x8c] sm:$0xf]
        %v302 = vld [vmem:[%s1 + $0x90] sm:$0xf]
        %v303 = vld [vmem:[%s1 + $0x94] sm:$0xf]
        %v304 = vld [vmem:[%s1 + $0x98] sm:$0xf]
        %v305 = vld [vmem:[%s1 + $0x9c] sm:$0xf]
        %v306 = vld [vmem:[%s1 + $0xa0] sm:$0xf]
        %v307 = vld [vmem:[%s1 + $0xa4] sm:$0xf]
        %v308 = vld [vmem:[%s1 + $0xa8] sm:$0xf]
        %v309 = vld [vmem:[%s1 + $0xac] sm:$0xf]
        %v310 = vld [vmem:[%s1 + $0xb0] sm:$0xf]
        %v311 = vld [vmem:[%s1 + $0xb4] sm:$0xf]
        %v312 = vld [vmem:[%s1 + $0xb8] sm:$0xf]
        %v313 = vld [vmem:[%s1 + $0xbc] sm:$0xf]
        %v314 = vld [vmem:[%s1 + $0xc0] sm:$0xf]
        %v315 = vld [vmem:[%s1 + $0xc4] sm:$0xf]
        %v316 = vld [vmem:[%s1 + $0xc8] sm:$0xf]
        %v317 = vld [vmem:[%s1 + $0xcc] sm:$0xf]
        %v318 = vld [vmem:[%s1 + $0xd0] sm:$0xf]
        %v319 = vld [vmem:[%s1 + $0xd4] sm:$0xf]
        %v320 = vld [vmem:[%s1 + $0xd8] sm:$0xf]
        %v321 = vld [vmem:[%s1 + $0xdc] sm:$0xf]
        %v322 = vld [vmem:[%s1 + $0xe0] sm:$0xf]
        %v323 = vld [vmem:[%s1 + $0xe4] sm:$0xf]
        %v324 = vld [vmem:[%s1 + $0xe8] sm:$0xf]
        %v325 = vld [vmem:[%s1 + $0xec] sm:$0xf]
        %v326 = vld [vmem:[%s1 + $0xf0] sm:$0xf]
        %v327 = vld [vmem:[%s1 + $0xf4] sm:$0xf]
        %v328 = vld [vmem:[%s1 + $0xf8] sm:$0xf]
        %v329 = vld [vmem:[%s1 + $0xfc] sm:$0xf]
        %v330 = vld [vmem:[%s1 + $0x100] sm:$0xf]
        %v331 = vld [vmem:[%s1 + $0x104] sm:$0xf]
        %v332 = vld [vmem:[%s1 + $0x108] sm:$0xf]
        %v333 = vld [vmem:[%s1 + $0x10c] sm:$0xf]
        %v334 = vld [vmem:[%s1 + $0x110] sm:$0xf]
        %v335 = vld [vmem:[%s1 + $0x114] sm:$0xf]
        %v336 = vld [vmem:[%s1 + $0x118] sm:$0xf]
        %v337 = vld [vmem:[%s1 + $0x11c] sm:$0xf]
        %v338 = vld [vmem:[%s1 + $0x120] sm:$0xf]
        %v339 = vld [vmem:[%s1 + $0x124] sm:$0xf]
        %v340 = vld [vmem:[%s1 + $0x128] sm:$0xf]
        %v341 = vld [vmem:[%s1 + $0x12c] sm:$0xf]
        %v342 = vld [vmem:[%s1 + $0x130] sm:$0xf]
        %v343 = vld [vmem:[%s1 + $0x134] sm:$0xf]
        %v344 = vld [vmem:[%s1 + $0x138] sm:$0xf]
        %v345 = vld [vmem:[%s1 + $0x13c] sm:$0xf]
        %v346 = vld [vmem:[%s1 + $0x140] sm:$0xf]
        %v347 = vld [vmem:[%s1 + $0x144] sm:$0xf]
        %v348 = vld [vmem:[%s1 + $0x148] sm:$0xf]
        %v349 = vld [vmem:[%s1 + $0x14c] sm:$0xf]
        %v350 = vld [vmem:[%s1 + $0x150] sm:$0xf]
        %v351 = vld [vmem:[%s1 + $0x154] sm:$0xf]
        %v352 = vld [vmem:[%s1 + $0x158] sm:$0xf]
        %v353 = vld [vmem:[%s1 + $0x15c] sm:$0xf]
        %v354 = vld [vmem:[%s1 + $0x160] sm:$0xf]
        %v355 = vld [vmem:[%s1 + $0x164] sm:$0xf]
        %v356 = vld [vmem:[%s1 + $0x168] sm:$0xf]
        %v357 = vld [vmem:[%s1 + $0x16c] sm:$0xf]
        %v358 = vld [vmem:[%s1 + $0x170] sm:$0xf]
        %v359 = vld [vmem:[%s1 + $0x174] sm:$0xf]
        %v360 = vld [vmem:[%s1 + $0x178] sm:$0xf]
        %v361 = vld [vmem:[%s1 + $0x17c] sm:$0xf]
        %v362 = vld [vmem:[%s1 + $0x180] sm:$0xf]
        %v363 = vld [vmem:[%s1 + $0x184] sm:$0xf]
        %v364 = vld [vmem:[%s1 + $0x188] sm:$0xf]
        %v365 = vld [vmem:[%s1 + $0x18c] sm:$0xf]
        %v366 = vld [vmem:[%s1 + $0x190] sm:$0xf]
        %v367 = vld [vmem:[%s1 + $0x194] sm:$0xf]
        %v368 = vld [vmem:[%s1 + $0x198] sm:$0xf]
        %v369 = vld [vmem:[%s1 + $0x19c] sm:$0xf]
        %v370 = vld [vmem:[%s1 + $0x1a0] sm:$0xf]
        %v371 = vld [vmem:[%s1 + $0x1a4] sm:$0xf]
        %v372 = vld [vmem:[%s1 + $0x1a8] sm:$0xf]
        %v373 = vld [vmem:[%s1 + $0x1ac] sm:$0xf]
        %v374 = vld [vmem:[%s1 + $0x1b0] sm:$0xf]
        %v375 = vld [vmem:[%s1 + $0x1b4] sm:$0xf]
        %v376 = vld [vmem:[%s1 + $0x1b8] sm:$0xf]
        %v377 = vld [vmem:[%s1 + $0x1bc] sm:$0xf]
        %v378 = vld [vmem:[%s237] sm:$0xff]
        %v379 = vld [vmem:[%s237 + $0x8] sm:$0xff]
        %v380 = vld [vmem:[%s237 + $0x10] sm:$0xff]
        %v381 = vld [vmem:[%s237 + $0x18] sm:$0xf]
        %v382 = vld [vmem:[%s237 + $0x1c] sm:$0xff]
        %v383 = vld [vmem:[%s237 + $0x24] sm:$0xff]
        %v384 = vld [vmem:[%s237 + $0x2c] sm:$0xff]
        %v385 = vld [vmem:[%s237 + $0x34] sm:$0xf]
        %v394 = vunpack.c.l.b16 %v378
        %v395 = vunpack.c.h.b16 %v378
        %v396 = vunpack.c.l.b16 %v379
        %v397 = vunpack.c.h.b16 %v379
        %v398 = vunpack.c.l.b16 %v380
        %v399 = vunpack.c.h.b16 %v380
        %v400 = vunpack.c.l.b16 %v381
        %v401 = vunpack.c.l.b16 %v382
        %v402 = vunpack.c.h.b16 %v382
        %v403 = vunpack.c.l.b16 %v383
        %v404 = vunpack.c.h.b16 %v383
        %v405 = vunpack.c.l.b16 %v384
        %v406 = vunpack.c.h.b16 %v384
        %v407 = vunpack.c.l.b16 %v385
        %v408 = vpack.c.b16 %v401, %v394
        %v409 = vpack.c.b16 %v402, %v395
        %v410 = vpack.c.b16 %v403, %v396
        %v411 = vpack.c.b16 %v404, %v397
        %v412 = vpack.c.b16 %v405, %v398
        %v413 = vpack.c.b16 %v406, %v399
        %v414 = vpack.c.b16 %v407, %v400
        %v534 = vunpack.c.l.b16 %v266
        %v535 = vunpack.c.l.b16 %v267
        %v536 = vunpack.c.l.b16 %v268
        %v537 = vunpack.c.l.b16 %v269
        %v538 = vunpack.c.l.b16 %v270
        %v539 = vunpack.c.l.b16 %v271
        %v540 = vunpack.c.l.b16 %v272
        %v541 = vunpack.c.l.b16 %v273
        %v542 = vunpack.c.l.b16 %v274
        %v543 = vunpack.c.l.b16 %v275
        %v544 = vunpack.c.l.b16 %v276
        %v545 = vunpack.c.l.b16 %v277
        %v546 = vunpack.c.l.b16 %v278
        %v547 = vunpack.c.l.b16 %v279
        %v548 = vunpack.c.l.b16 %v280
        %v549 = vunpack.c.l.b16 %v281
        %v550 = vunpack.c.l.b16 %v282
        %v551 = vunpack.c.l.b16 %v283
        %v552 = vunpack.c.l.b16 %v284
        %v553 = vunpack.c.l.b16 %v285
        %v554 = vunpack.c.l.b16 %v286
        %v555 = vunpack.c.l.b16 %v287
        %v556 = vunpack.c.l.b16 %v288
        %v557 = vunpack.c.l.b16 %v289
        %v558 = vunpack.c.l.b16 %v290
        %v559 = vunpack.c.l.b16 %v291
        %v560 = vunpack.c.l.b16 %v292
        %v561 = vunpack.c.l.b16 %v293
        %v562 = vunpack.c.l.b16 %v294
        %v563 = vunpack.c.l.b16 %v295
        %v564 = vunpack.c.l.b16 %v296
        %v565 = vunpack.c.l.b16 %v297
        %v566 = vunpack.c.l.b16 %v298
        %v567 = vunpack.c.l.b16 %v299
        %v568 = vunpack.c.l.b16 %v300
        %v569 = vunpack.c.l.b16 %v301
        %v570 = vunpack.c.l.b16 %v302
        %v571 = vunpack.c.l.b16 %v303
        %v572 = vunpack.c.l.b16 %v304
        %v573 = vunpack.c.l.b16 %v305
        %v574 = vunpack.c.l.b16 %v306
        %v575 = vunpack.c.l.b16 %v307
        %v576 = vunpack.c.l.b16 %v308
        %v577 = vunpack.c.l.b16 %v309
        %v578 = vunpack.c.l.b16 %v310
        %v579 = vunpack.c.l.b16 %v311
        %v580 = vunpack.c.l.b16 %v312
        %v581 = vunpack.c.l.b16 %v313
        %v582 = vunpack.c.l.b16 %v314
        %v583 = vunpack.c.l.b16 %v315
        %v584 = vunpack.c.l.b16 %v316
        %v585 = vunpack.c.l.b16 %v317
        %v586 = vunpack.c.l.b16 %v318
        %v587 = vunpack.c.l.b16 %v319
        %v588 = vunpack.c.l.b16 %v320
        %v589 = vunpack.c.l.b16 %v321
        %v590 = vunpack.c.l.b16 %v322
        %v591 = vunpack.c.l.b16 %v323
        %v592 = vunpack.c.l.b16 %v324
        %v593 = vunpack.c.l.b16 %v325
        %v594 = vunpack.c.l.b16 %v326
        %v595 = vunpack.c.l.b16 %v327
        %v596 = vunpack.c.l.b16 %v328
        %v597 = vunpack.c.l.b16 %v329
        %v598 = vunpack.c.l.b16 %v330
        %v599 = vunpack.c.l.b16 %v331
        %v600 = vunpack.c.l.b16 %v332
        %v601 = vunpack.c.l.b16 %v333
        %v602 = vunpack.c.l.b16 %v334
        %v603 = vunpack.c.l.b16 %v335
        %v604 = vunpack.c.l.b16 %v336
        %v605 = vunpack.c.l.b16 %v337
        %v606 = vunpack.c.l.b16 %v338
        %v607 = vunpack.c.l.b16 %v339
        %v608 = vunpack.c.l.b16 %v340
        %v609 = vunpack.c.l.b16 %v341
        %v610 = vunpack.c.l.b16 %v342
        %v611 = vunpack.c.l.b16 %v343
        %v612 = vunpack.c.l.b16 %v344
        %v613 = vunpack.c.l.b16 %v345
        %v614 = vunpack.c.l.b16 %v346
        %v615 = vunpack.c.l.b16 %v347
        %v616 = vunpack.c.l.b16 %v348
        %v617 = vunpack.c.l.b16 %v349
        %v618 = vunpack.c.l.b16 %v350
        %v619 = vunpack.c.l.b16 %v351
        %v620 = vunpack.c.l.b16 %v352
        %v621 = vunpack.c.l.b16 %v353
        %v622 = vunpack.c.l.b16 %v354
        %v623 = vunpack.c.l.b16 %v355
        %v624 = vunpack.c.l.b16 %v356
        %v625 = vunpack.c.l.b16 %v357
        %v626 = vunpack.c.l.b16 %v358
        %v627 = vunpack.c.l.b16 %v359
        %v628 = vunpack.c.l.b16 %v360
        %v629 = vunpack.c.l.b16 %v361
        %v630 = vunpack.c.l.b16 %v362
        %v631 = vunpack.c.l.b16 %v363
        %v632 = vunpack.c.l.b16 %v364
        %v633 = vunpack.c.l.b16 %v365
        %v634 = vunpack.c.l.b16 %v366
        %v635 = vunpack.c.l.b16 %v367
        %v636 = vunpack.c.l.b16 %v368
        %v637 = vunpack.c.l.b16 %v369
        %v638 = vunpack.c.l.b16 %v370
        %v639 = vunpack.c.l.b16 %v371
        %v640 = vunpack.c.l.b16 %v372
        %v641 = vunpack.c.l.b16 %v373
        %v642 = vunpack.c.l.b16 %v374
        %v643 = vunpack.c.l.b16 %v375
        %v644 = vunpack.c.l.b16 %v376
        %v645 = vunpack.c.l.b16 %v377
        %v646 = vpack.c.b16 %v535, %v534
        %v647 = vpack.c.b16 %v537, %v536
        %v648 = vpack.c.b16 %v539, %v538
        %v649 = vpack.c.b16 %v541, %v540
        %v650 = vpack.c.b16 %v543, %v542
        %v651 = vpack.c.b16 %v545, %v544
        %v652 = vpack.c.b16 %v547, %v546
        %v653 = vpack.c.b16 %v549, %v548
        %v654 = vpack.c.b16 %v551, %v550
        %v655 = vpack.c.b16 %v553, %v552
        %v656 = vpack.c.b16 %v555, %v554
        %v657 = vpack.c.b16 %v557, %v556
        %v658 = vpack.c.b16 %v559, %v558
        %v659 = vpack.c.b16 %v561, %v560
        %v660 = vpack.c.b16 %v563, %v562
        %v661 = vpack.c.b16 %v565, %v564
        %v662 = vpack.c.b16 %v567, %v566
        %v663 = vpack.c.b16 %v569, %v568
        %v664 = vpack.c.b16 %v571, %v570
        %v665 = vpack.c.b16 %v573, %v572
        %v666 = vpack.c.b16 %v575, %v574
        %v667 = vpack.c.b16 %v577, %v576
        %v668 = vpack.c.b16 %v579, %v578
        %v669 = vpack.c.b16 %v581, %v580
        %v670 = vpack.c.b16 %v583, %v582
        %v671 = vpack.c.b16 %v585, %v584
        %v672 = vpack.c.b16 %v587, %v586
        %v673 = vpack.c.b16 %v589, %v588
        %v674 = vpack.c.b16 %v591, %v590
        %v675 = vpack.c.b16 %v593, %v592
        %v676 = vpack.c.b16 %v595, %v594
        %v677 = vpack.c.b16 %v597, %v596
        %v678 = vpack.c.b16 %v599, %v598
        %v679 = vpack.c.b16 %v601, %v600
        %v680 = vpack.c.b16 %v603, %v602
        %v681 = vpack.c.b16 %v605, %v604
        %v682 = vpack.c.b16 %v607, %v606
        %v683 = vpack.c.b16 %v609, %v608
        %v684 = vpack.c.b16 %v611, %v610
        %v685 = vpack.c.b16 %v613, %v612
        %v686 = vpack.c.b16 %v615, %v614
        %v687 = vpack.c.b16 %v617, %v616
        %v688 = vpack.c.b16 %v619, %v618
        %v689 = vpack.c.b16 %v621, %v620
        %v690 = vpack.c.b16 %v623, %v622
        %v691 = vpack.c.b16 %v625, %v624
        %v692 = vpack.c.b16 %v627, %v626
        %v693 = vpack.c.b16 %v629, %v628
        %v694 = vpack.c.b16 %v631, %v630
        %v695 = vpack.c.b16 %v633, %v632
        %v696 = vpack.c.b16 %v635, %v634
        %v697 = vpack.c.b16 %v637, %v636
        %v698 = vpack.c.b16 %v639, %v638
        %v699 = vpack.c.b16 %v641, %v640
        %v700 = vpack.c.b16 %v643, %v642
        %v701 = vpack.c.b16 %v645, %v644
        %758 = vmatprep.subr.bf16.mxu0 0
        %759 = vmatpush1.bf16.msra.mxu0 %v646
        %760 = vmatprep.subr.bf16.mxu0 0
        %761 = vmatpush1.bf16.msra.mxu0 %v647
        %762 = vmatprep.subr.bf16.mxu0 0
        %763 = vmatpush1.bf16.msra.mxu0 %v648
        %764 = vmatprep.subr.bf16.mxu0 0
        %765 = vmatpush1.bf16.msra.mxu0 %v649
        %766 = vmatprep.subr.bf16.mxu0 0
        %767 = vmatpush1.bf16.msra.mxu0 %v650
        %768 = vmatprep.subr.bf16.mxu0 0
        %769 = vmatpush1.bf16.msra.mxu0 %v651
        %770 = vmatprep.subr.bf16.mxu0 0
        %771 = vmatpush1.bf16.msra.mxu0 %v652
        %772 = vmatprep.subr.bf16.mxu0 0
        %773 = vmatpush1.bf16.msra.mxu0 %v653
        %774 = vmatprep.subr.bf16.mxu0 0
        %775 = vmatpush1.bf16.msra.mxu0 %v654
        %776 = vmatprep.subr.bf16.mxu0 0
        %777 = vmatpush1.bf16.msra.mxu0 %v655
        %778 = vmatprep.subr.bf16.mxu0 0
        %779 = vmatpush1.bf16.msra.mxu0 %v656
        %780 = vmatprep.subr.bf16.mxu0 0
        %781 = vmatpush1.bf16.msra.mxu0 %v657
        %782 = vmatprep.subr.bf16.mxu0 0
        %783 = vmatpush1.bf16.msra.mxu0 %v658
        %784 = vmatprep.subr.bf16.mxu0 0
        %785 = vmatpush1.bf16.msra.mxu0 %v659
        %786 = vmatprep.subr.bf16.mxu0 0
        %787 = vmatpush1.bf16.msra.mxu0 %v660
        %788 = vmatprep.subr.bf16.mxu0 0
        %789 = vmatpush1.bf16.msra.mxu0 %v661
        %790 = vmatprep.mubr.bf16.mxu0 %v409
        %791 = vmatmul.mubr.bf16.gmra.mrb[0].mxu0 %v408
        %v792 = vpop.f32.mrb[0].mxu0
        %v793 = vadd.f32 0.0, %v792
        %v794 = vpop.f32.mrb[0].mxu0
        %v795 = vpop.f32.mrb[0].mxu0
        %v796 = vadd.f32 0.0, %v795
        %v797 = vpop.f32.mrb[0].mxu0
        %798 = vdwg.mxu0
        %799 = vmatprep.subr.bf16.mxu0 0
        %800 = vmatpush1.bf16.msra.mxu0 %v662
        %801 = vmatprep.subr.bf16.mxu0 0
        %802 = vmatpush1.bf16.msra.mxu0 %v663
        %803 = vmatprep.subr.bf16.mxu0 0
        %804 = vmatpush1.bf16.msra.mxu0 %v664
        %805 = vmatprep.subr.bf16.mxu0 0
        %806 = vmatpush1.bf16.msra.mxu0 %v665
        %807 = vmatprep.subr.bf16.mxu0 0
        %808 = vmatpush1.bf16.msra.mxu0 %v666
        %809 = vmatprep.subr.bf16.mxu0 0
        %810 = vmatpush1.bf16.msra.mxu0 %v667
        %811 = vmatprep.subr.bf16.mxu0 0
        %812 = vmatpush1.bf16.msra.mxu0 %v668
        %813 = vmatprep.subr.bf16.mxu0 0
        %814 = vmatpush1.bf16.msra.mxu0 %v669
        %815 = vmatprep.subr.bf16.mxu0 0
        %816 = vmatpush1.bf16.msra.mxu0 %v670
        %817 = vmatprep.subr.bf16.mxu0 0
        %818 = vmatpush1.bf16.msra.mxu0 %v671
        %819 = vmatprep.subr.bf16.mxu0 0
        %820 = vmatpush1.bf16.msra.mxu0 %v672
        %821 = vmatprep.subr.bf16.mxu0 0
        %822 = vmatpush1.bf16.msra.mxu0 %v673
        %823 = vmatprep.subr.bf16.mxu0 0
        %824 = vmatpush1.bf16.msra.mxu0 %v674
        %825 = vmatprep.subr.bf16.mxu0 0
        %826 = vmatpush1.bf16.msra.mxu0 %v675
        %827 = vmatprep.subr.bf16.mxu0 0
        %828 = vmatpush1.bf16.msra.mxu0 %v676
        %829 = vmatprep.subr.bf16.mxu0 0
        %830 = vmatpush1.bf16.msra.mxu0 %v677
        %831 = vmatprep.mubr.bf16.mxu0 %v411
        %832 = vmatmul.mubr.bf16.gmra.mrb[0].mxu0 %v410
        %v833 = vpop.f32.mrb[0].mxu0
        %v834 = vadd.f32 %v793, %v833
        %v835 = vpop.f32.mrb[0].mxu0
        %v836 = vpop.f32.mrb[0].mxu0
        %v837 = vadd.f32 %v796, %v836
        %v838 = vpop.f32.mrb[0].mxu0
        %839 = vdwg.mxu0
        %840 = vmatprep.subr.bf16.mxu0 0
        %841 = vmatpush1.bf16.msra.mxu0 %v678
        %842 = vmatprep.subr.bf16.mxu0 0
        %843 = vmatpush1.bf16.msra.mxu0 %v679
        %844 = vmatprep.subr.bf16.mxu0 0
        %845 = vmatpush1.bf16.msra.mxu0 %v680
        %846 = vmatprep.subr.bf16.mxu0 0
        %847 = vmatpush1.bf16.msra.mxu0 %v681
        %848 = vmatprep.subr.bf16.mxu0 0
        %849 = vmatpush1.bf16.msra.mxu0 %v682
        %850 = vmatprep.subr.bf16.mxu0 0
        %851 = vmatpush1.bf16.msra.mxu0 %v683
        %852 = vmatprep.subr.bf16.mxu0 0
        %853 = vmatpush1.bf16.msra.mxu0 %v684
        %854 = vmatprep.subr.bf16.mxu0 0
        %855 = vmatpush1.bf16.msra.mxu0 %v685
        %856 = vmatprep.subr.bf16.mxu0 0
        %857 = vmatpush1.bf16.msra.mxu0 %v686
        %858 = vmatprep.subr.bf16.mxu0 0
        %859 = vmatpush1.bf16.msra.mxu0 %v687
        %860 = vmatprep.subr.bf16.mxu0 0
        %861 = vmatpush1.bf16.msra.mxu0 %v688
        %862 = vmatprep.subr.bf16.mxu0 0
        %863 = vmatpush1.bf16.msra.mxu0 %v689
        %864 = vmatprep.subr.bf16.mxu0 0
        %865 = vmatpush1.bf16.msra.mxu0 %v690
        %866 = vmatprep.subr.bf16.mxu0 0
        %867 = vmatpush1.bf16.msra.mxu0 %v691
        %868 = vmatprep.subr.bf16.mxu0 0
        %869 = vmatpush1.bf16.msra.mxu0 %v692
        %870 = vmatprep.subr.bf16.mxu0 0
        %871 = vmatpush1.bf16.msra.mxu0 %v693
        %872 = vmatprep.mubr.bf16.mxu0 %v413
        %873 = vmatmul.mubr.bf16.gmra.mrb[0].mxu0 %v412
        %v874 = vpop.f32.mrb[0].mxu0
        %v875 = vadd.f32 %v834, %v874
        %v876 = vpop.f32.mrb[0].mxu0
        %v877 = vpop.f32.mrb[0].mxu0
        %v878 = vadd.f32 %v837, %v877
        %v879 = vpop.f32.mrb[0].mxu0
        %880 = vdwg.mxu0
        %881 = vmatprep.subr.bf16.mxu0 0
        %882 = vmatpush1.bf16.msra.mxu0 %v694
        %883 = vmatprep.subr.bf16.mxu0 0
        %884 = vmatpush1.bf16.msra.mxu0 %v695
        %885 = vmatprep.subr.bf16.mxu0 0
        %886 = vmatpush1.bf16.msra.mxu0 %v696
        %887 = vmatprep.subr.bf16.mxu0 0
        %888 = vmatpush1.bf16.msra.mxu0 %v697
        %889 = vmatprep.subr.bf16.mxu0 0
        %890 = vmatpush1.bf16.msra.mxu0 %v698
        %891 = vmatprep.subr.bf16.mxu0 0
        %892 = vmatpush1.bf16.msra.mxu0 %v699
        %893 = vmatprep.subr.bf16.mxu0 0
        %894 = vmatpush1.bf16.msra.mxu0 %v700
        %895 = vmatprep.subr.bf16.mxu0 0
        %896 = vmatpush1.bf16.msra.mxu0 %v701
        %897 = vmatprep.subr.bf16.mxu0 0
        %898 = vmatpush1.bf16.msra.mxu0 0
        %899 = vmatprep.subr.bf16.mxu0 0
        %900 = vmatpush1.bf16.msra.mxu0 0
        %901 = vmatprep.subr.bf16.mxu0 0
        %902 = vmatpush1.bf16.msra.mxu0 0
        %903 = vmatprep.subr.bf16.mxu0 0
        %904 = vmatpush1.bf16.msra.mxu0 0
        %905 = vmatprep.subr.bf16.mxu0 0
        %906 = vmatpush1.bf16.msra.mxu0 0
        %907 = vmatprep.subr.bf16.mxu0 0
        %908 = vmatpush1.bf16.msra.mxu0 0
        %909 = vmatprep.subr.bf16.mxu0 0
        %910 = vmatpush1.bf16.msra.mxu0 0
        %911 = vmatprep.subr.bf16.mxu0 0
        %912 = vmatpush1.bf16.msra.mxu0 0
        %913 = vmatprep.mubr.bf16.mxu0 0
        %914 = vmatmul.mubr.bf16.gmra.mrb[0].mxu0 %v414
        %v915 = vpop.f32.mrb[0].mxu0
        %v916 = vadd.f32 %v875, %v915
        %v917 = vpop.f32.mrb[0].mxu0
        %v918 = vpop.f32.mrb[0].mxu0
        %v919 = vadd.f32 %v878, %v918
        %v920 = vpop.f32.mrb[0].mxu0
        %921 = vdwg.mxu0
        %s922 = scalar_lea.vmem %s237, 56 [#allocation2]
        %v923 = vld [vmem:[%s922] sm:$0xff]
        %v924 = vld [vmem:[%s922 + $0x8] sm:$0xff]
        %v925 = vld [vmem:[%s922 + $0x10] sm:$0xff]
        %v926 = vld [vmem:[%s922 + $0x18] sm:$0xf]
        %v927 = vld [vmem:[%s922 + $0x1c] sm:$0xff]
        %v928 = vld [vmem:[%s922 + $0x24] sm:$0xff]
        %v929 = vld [vmem:[%s922 + $0x2c] sm:$0xff]
        %v930 = vld [vmem:[%s922 + $0x34] sm:$0xf]
        %v939 = vunpack.c.l.b16 %v923
        %v940 = vunpack.c.h.b16 %v923
        %v941 = vunpack.c.l.b16 %v924
        %v942 = vunpack.c.h.b16 %v924
        %v943 = vunpack.c.l.b16 %v925
        %v944 = vunpack.c.h.b16 %v925
        %v945 = vunpack.c.l.b16 %v926
        %v946 = vunpack.c.l.b16 %v927
        %v947 = vunpack.c.h.b16 %v927
        %v948 = vunpack.c.l.b16 %v928
        %v949 = vunpack.c.h.b16 %v928
        %v950 = vunpack.c.l.b16 %v929
        %v951 = vunpack.c.h.b16 %v929
        %v952 = vunpack.c.l.b16 %v930
        %v953 = vpack.c.b16 %v946, %v939
        %v954 = vpack.c.b16 %v947, %v940
        %v955 = vpack.c.b16 %v948, %v941
        %v956 = vpack.c.b16 %v949, %v942
        %v957 = vpack.c.b16 %v950, %v943
        %v958 = vpack.c.b16 %v951, %v944
        %v959 = vpack.c.b16 %v952, %v945
        %967 = vmatprep.subr.bf16.mxu0 0
        %968 = vmatpush1.bf16.msra.mxu0 %v646
        %969 = vmatprep.subr.bf16.mxu0 0
        %970 = vmatpush1.bf16.msra.mxu0 %v647
        %971 = vmatprep.subr.bf16.mxu0 0
        %972 = vmatpush1.bf16.msra.mxu0 %v648
        %973 = vmatprep.subr.bf16.mxu0 0
        %974 = vmatpush1.bf16.msra.mxu0 %v649
        %975 = vmatprep.subr.bf16.mxu0 0
        %976 = vmatpush1.bf16.msra.mxu0 %v650
        %977 = vmatprep.subr.bf16.mxu0 0
        %978 = vmatpush1.bf16.msra.mxu0 %v651
        %979 = vmatprep.subr.bf16.mxu0 0
        %980 = vmatpush1.bf16.msra.mxu0 %v652
        %981 = vmatprep.subr.bf16.mxu0 0
        %982 = vmatpush1.bf16.msra.mxu0 %v653
        %983 = vmatprep.subr.bf16.mxu0 0
        %984 = vmatpush1.bf16.msra.mxu0 %v654
        %985 = vmatprep.subr.bf16.mxu0 0
        %986 = vmatpush1.bf16.msra.mxu0 %v655
        %987 = vmatprep.subr.bf16.mxu0 0
        %988 = vmatpush1.bf16.msra.mxu0 %v656
        %989 = vmatprep.subr.bf16.mxu0 0
        %990 = vmatpush1.bf16.msra.mxu0 %v657
        %991 = vmatprep.subr.bf16.mxu0 0
        %992 = vmatpush1.bf16.msra.mxu0 %v658
        %993 = vmatprep.subr.bf16.mxu0 0
        %994 = vmatpush1.bf16.msra.mxu0 %v659
        %995 = vmatprep.subr.bf16.mxu0 0
        %996 = vmatpush1.bf16.msra.mxu0 %v660
        %997 = vmatprep.subr.bf16.mxu0 0
        %998 = vmatpush1.bf16.msra.mxu0 %v661
        %999 = vmatprep.mubr.bf16.mxu0 %v954
        %1000 = vmatmul.mubr.bf16.gmra.mrb[0].mxu0 %v953
        %v1001 = vpop.f32.mrb[0].mxu0
        %v1002 = vadd.f32 0.0, %v1001
        %v1003 = vpop.f32.mrb[0].mxu0
        %v1004 = vpop.f32.mrb[0].mxu0
        %v1005 = vadd.f32 0.0, %v1004
        %v1006 = vpop.f32.mrb[0].mxu0
        %1007 = vdwg.mxu0
        %1008 = vmatprep.subr.bf16.mxu0 0
        %1009 = vmatpush1.bf16.msra.mxu0 %v662
        %1010 = vmatprep.subr.bf16.mxu0 0
        %1011 = vmatpush1.bf16.msra.mxu0 %v663
        %1012 = vmatprep.subr.bf16.mxu0 0
        %1013 = vmatpush1.bf16.msra.mxu0 %v664
        %1014 = vmatprep.subr.bf16.mxu0 0
        %1015 = vmatpush1.bf16.msra.mxu0 %v665
        %1016 = vmatprep.subr.bf16.mxu0 0
        %1017 = vmatpush1.bf16.msra.mxu0 %v666
        %1018 = vmatprep.subr.bf16.mxu0 0
        %1019 = vmatpush1.bf16.msra.mxu0 %v667
        %1020 = vmatprep.subr.bf16.mxu0 0
        %1021 = vmatpush1.bf16.msra.mxu0 %v668
        %1022 = vmatprep.subr.bf16.mxu0 0
        %1023 = vmatpush1.bf16.msra.mxu0 %v669
        %1024 = vmatprep.subr.bf16.mxu0 0
        %1025 = vmatpush1.bf16.msra.mxu0 %v670
        %1026 = vmatprep.subr.bf16.mxu0 0
        %1027 = vmatpush1.bf16.msra.mxu0 %v671
        %1028 = vmatprep.subr.bf16.mxu0 0
        %1029 = vmatpush1.bf16.msra.mxu0 %v672
        %1030 = vmatprep.subr.bf16.mxu0 0
        %1031 = vmatpush1.bf16.msra.mxu0 %v673
        %1032 = vmatprep.subr.bf16.mxu0 0
        %1033 = vmatpush1.bf16.msra.mxu0 %v674
        %1034 = vmatprep.subr.bf16.mxu0 0
        %1035 = vmatpush1.bf16.msra.mxu0 %v675
        %1036 = vmatprep.subr.bf16.mxu0 0
        %1037 = vmatpush1.bf16.msra.mxu0 %v676
        %1038 = vmatprep.subr.bf16.mxu0 0
        %1039 = vmatpush1.bf16.msra.mxu0 %v677
        %1040 = vmatprep.mubr.bf16.mxu0 %v956
        %1041 = vmatmul.mubr.bf16.gmra.mrb[0].mxu0 %v955
        %v1042 = vpop.f32.mrb[0].mxu0
        %v1043 = vadd.f32 %v1002, %v1042
        %v1044 = vpop.f32.mrb[0].mxu0
        %v1045 = vpop.f32.mrb[0].mxu0
        %v1046 = vadd.f32 %v1005, %v1045
        %v1047 = vpop.f32.mrb[0].mxu0
        %1048 = vdwg.mxu0
        %1049 = vmatprep.subr.bf16.mxu0 0
        %1050 = vmatpush1.bf16.msra.mxu0 %v678
        %1051 = vmatprep.subr.bf16.mxu0 0
        %1052 = vmatpush1.bf16.msra.mxu0 %v679
        %1053 = vmatprep.subr.bf16.mxu0 0
        %1054 = vmatpush1.bf16.msra.mxu0 %v680
        %1055 = vmatprep.subr.bf16.mxu0 0
        %1056 = vmatpush1.bf16.msra.mxu0 %v681
        %1057 = vmatprep.subr.bf16.mxu0 0
        %1058 = vmatpush1.bf16.msra.mxu0 %v682
        %1059 = vmatprep.subr.bf16.mxu0 0
        %1060 = vmatpush1.bf16.msra.mxu0 %v683
        %1061 = vmatprep.subr.bf16.mxu0 0
        %1062 = vmatpush1.bf16.msra.mxu0 %v684
        %1063 = vmatprep.subr.bf16.mxu0 0
        %1064 = vmatpush1.bf16.msra.mxu0 %v685
        %1065 = vmatprep.subr.bf16.mxu0 0
        %1066 = vmatpush1.bf16.msra.mxu0 %v686
        %1067 = vmatprep.subr.bf16.mxu0 0
        %1068 = vmatpush1.bf16.msra.mxu0 %v687
        %1069 = vmatprep.subr.bf16.mxu0 0
        %1070 = vmatpush1.bf16.msra.mxu0 %v688
        %1071 = vmatprep.subr.bf16.mxu0 0
        %1072 = vmatpush1.bf16.msra.mxu0 %v689
        %1073 = vmatprep.subr.bf16.mxu0 0
        %1074 = vmatpush1.bf16.msra.mxu0 %v690
        %1075 = vmatprep.subr.bf16.mxu0 0
        %1076 = vmatpush1.bf16.msra.mxu0 %v691
        %1077 = vmatprep.subr.bf16.mxu0 0
        %1078 = vmatpush1.bf16.msra.mxu0 %v692
        %1079 = vmatprep.subr.bf16.mxu0 0
        %1080 = vmatpush1.bf16.msra.mxu0 %v693
        %1081 = vmatprep.mubr.bf16.mxu0 %v958
        %1082 = vmatmul.mubr.bf16.gmra.mrb[0].mxu0 %v957
        %v1083 = vpop.f32.mrb[0].mxu0
        %v1084 = vadd.f32 %v1043, %v1083
        %v1085 = vpop.f32.mrb[0].mxu0
        %v1086 = vpop.f32.mrb[0].mxu0
        %v1087 = vadd.f32 %v1046, %v1086
        %v1088 = vpop.f32.mrb[0].mxu0
        %1089 = vdwg.mxu0
        %1090 = vmatprep.subr.bf16.mxu0 0
        %1091 = vmatpush1.bf16.msra.mxu0 %v694
        %1092 = vmatprep.subr.bf16.mxu0 0
        %1093 = vmatpush1.bf16.msra.mxu0 %v695
        %1094 = vmatprep.subr.bf16.mxu0 0
        %1095 = vmatpush1.bf16.msra.mxu0 %v696
        %1096 = vmatprep.subr.bf16.mxu0 0
        %1097 = vmatpush1.bf16.msra.mxu0 %v697
        %1098 = vmatprep.subr.bf16.mxu0 0
        %1099 = vmatpush1.bf16.msra.mxu0 %v698
        %1100 = vmatprep.subr.bf16.mxu0 0
        %1101 = vmatpush1.bf16.msra.mxu0 %v699
        %1102 = vmatprep.subr.bf16.mxu0 0
        %1103 = vmatpush1.bf16.msra.mxu0 %v700
        %1104 = vmatprep.subr.bf16.mxu0 0
        %1105 = vmatpush1.bf16.msra.mxu0 %v701
        %1106 = vmatprep.subr.bf16.mxu0 0
        %1107 = vmatpush1.bf16.msra.mxu0 0
        %1108 = vmatprep.subr.bf16.mxu0 0
        %1109 = vmatpush1.bf16.msra.mxu0 0
        %1110 = vmatprep.subr.bf16.mxu0 0
        %1111 = vmatpush1.bf16.msra.mxu0 0
        %1112 = vmatprep.subr.bf16.mxu0 0
        %1113 = vmatpush1.bf16.msra.mxu0 0
        %1114 = vmatprep.subr.bf16.mxu0 0
        %1115 = vmatpush1.bf16.msra.mxu0 0
        %1116 = vmatprep.subr.bf16.mxu0 0
        %1117 = vmatpush1.bf16.msra.mxu0 0
        %1118 = vmatprep.subr.bf16.mxu0 0
        %1119 = vmatpush1.bf16.msra.mxu0 0
        %1120 = vmatprep.subr.bf16.mxu0 0
        %1121 = vmatpush1.bf16.msra.mxu0 0
        %1122 = vmatprep.mubr.bf16.mxu0 0
        %1123 = vmatmul.mubr.bf16.gmra.mrb[0].mxu0 %v959
        %v1124 = vpop.f32.mrb[0].mxu0
        %v1125 = vadd.f32 %v1084, %v1124
        %v1126 = vpop.f32.mrb[0].mxu0
        %v1127 = vpop.f32.mrb[0].mxu0
        %v1128 = vadd.f32 %v1087, %v1127
        %v1129 = vpop.f32.mrb[0].mxu0
        %1130 = vdwg.mxu0
        %v1131 = vmax.f32 %v916, %v1125
        %v1132 = vmax.f32 %v919, %v1128
        %s1133 = scalar_lea.vmem %s237, 112 [#allocation2]
        %v1134 = vld [vmem:[%s1133] sm:$0xff]
        %v1135 = vld [vmem:[%s1133 + $0x8] sm:$0xff]
        %v1136 = vld [vmem:[%s1133 + $0x10] sm:$0xff]
        %v1137 = vld [vmem:[%s1133 + $0x18] sm:$0xf]
        %v1138 = vld [vmem:[%s1133 + $0x1c] sm:$0xff]
        %v1139 = vld [vmem:[%s1133 + $0x24] sm:$0xff]
        %v1140 = vld [vmem:[%s1133 + $0x2c] sm:$0xff]
        %v1141 = vld [vmem:[%s1133 + $0x34] sm:$0xf]
        %v1150 = vunpack.c.l.b16 %v1134
        %v1151 = vunpack.c.h.b16 %v1134
        %v1152 = vunpack.c.l.b16 %v1135
        %v1153 = vunpack.c.h.b16 %v1135
        %v1154 = vunpack.c.l.b16 %v1136
        %v1155 = vunpack.c.h.b16 %v1136
        %v1156 = vunpack.c.l.b16 %v1137
        %v1157 = vunpack.c.l.b16 %v1138
        %v1158 = vunpack.c.h.b16 %v1138
        %v1159 = vunpack.c.l.b16 %v1139
        %v1160 = vunpack.c.h.b16 %v1139
        %v1161 = vunpack.c.l.b16 %v1140
        %v1162 = vunpack.c.h.b16 %v1140
        %v1163 = vunpack.c.l.b16 %v1141
        %v1164 = vpack.c.b16 %v1157, %v1150
        %v1165 = vpack.c.b16 %v1158, %v1151
        %v1166 = vpack.c.b16 %v1159, %v1152
        %v1167 = vpack.c.b16 %v1160, %v1153
        %v1168 = vpack.c.b16 %v1161, %v1154
        %v1169 = vpack.c.b16 %v1162, %v1155
        %v1170 = vpack.c.b16 %v1163, %v1156
        %1178 = vmatprep.subr.bf16.mxu0 0
        %1179 = vmatpush1.bf16.msra.mxu0 %v646
        %1180 = vmatprep.subr.bf16.mxu0 0
        %1181 = vmatpush1.bf16.msra.mxu0 %v647
        %1182 = vmatprep.subr.bf16.mxu0 0
        %1183 = vmatpush1.bf16.msra.mxu0 %v648
        %1184 = vmatprep.subr.bf16.mxu0 0
        %1185 = vmatpush1.bf16.msra.mxu0 %v649
        %1186 = vmatprep.subr.bf16.mxu0 0
        %1187 = vmatpush1.bf16.msra.mxu0 %v650
        %1188 = vmatprep.subr.bf16.mxu0 0
        %1189 = vmatpush1.bf16.msra.mxu0 %v651
        %1190 = vmatprep.subr.bf16.mxu0 0
        %1191 = vmatpush1.bf16.msra.mxu0 %v652
        %1192 = vmatprep.subr.bf16.mxu0 0
        %1193 = vmatpush1.bf16.msra.mxu0 %v653
        %1194 = vmatprep.subr.bf16.mxu0 0
        %1195 = vmatpush1.bf16.msra.mxu0 %v654
        %1196 = vmatprep.subr.bf16.mxu0 0
        %1197 = vmatpush1.bf16.msra.mxu0 %v655
        %1198 = vmatprep.subr.bf16.mxu0 0
        %1199 = vmatpush1.bf16.msra.mxu0 %v656
        %1200 = vmatprep.subr.bf16.mxu0 0
        %1201 = vmatpush1.bf16.msra.mxu0 %v657
        %1202 = vmatprep.subr.bf16.mxu0 0
        %1203 = vmatpush1.bf16.msra.mxu0 %v658
        %1204 = vmatprep.subr.bf16.mxu0 0
        %1205 = vmatpush1.bf16.msra.mxu0 %v659
        %1206 = vmatprep.subr.bf16.mxu0 0
        %1207 = vmatpush1.bf16.msra.mxu0 %v660
        %1208 = vmatprep.subr.bf16.mxu0 0
        %1209 = vmatpush1.bf16.msra.mxu0 %v661
        %1210 = vmatprep.mubr.bf16.mxu0 %v1165
        %1211 = vmatmul.mubr.bf16.gmra.mrb[0].mxu0 %v1164
        %v1212 = vpop.f32.mrb[0].mxu0
        %v1213 = vadd.f32 0.0, %v1212
        %v1214 = vpop.f32.mrb[0].mxu0
        %v1215 = vpop.f32.mrb[0].mxu0
        %v1216 = vadd.f32 0.0, %v1215
        %v1217 = vpop.f32.mrb[0].mxu0
        %1218 = vdwg.mxu0
        %1219 = vmatprep.subr.bf16.mxu0 0
        %1220 = vmatpush1.bf16.msra.mxu0 %v662
        %1221 = vmatprep.subr.bf16.mxu0 0
        %1222 = vmatpush1.bf16.msra.mxu0 %v663
        %1223 = vmatprep.subr.bf16.mxu0 0
        %1224 = vmatpush1.bf16.msra.mxu0 %v664
        %1225 = vmatprep.subr.bf16.mxu0 0
        %1226 = vmatpush1.bf16.msra.mxu0 %v665
        %1227 = vmatprep.subr.bf16.mxu0 0
        %1228 = vmatpush1.bf16.msra.mxu0 %v666
        %1229 = vmatprep.subr.bf16.mxu0 0
        %1230 = vmatpush1.bf16.msra.mxu0 %v667
        %1231 = vmatprep.subr.bf16.mxu0 0
        %1232 = vmatpush1.bf16.msra.mxu0 %v668
        %1233 = vmatprep.subr.bf16.mxu0 0
        %1234 = vmatpush1.bf16.msra.mxu0 %v669
        %1235 = vmatprep.subr.bf16.mxu0 0
        %1236 = vmatpush1.bf16.msra.mxu0 %v670
        %1237 = vmatprep.subr.bf16.mxu0 0
        %1238 = vmatpush1.bf16.msra.mxu0 %v671
        %1239 = vmatprep.subr.bf16.mxu0 0
        %1240 = vmatpush1.bf16.msra.mxu0 %v672
        %1241 = vmatprep.subr.bf16.mxu0 0
        %1242 = vmatpush1.bf16.msra.mxu0 %v673
        %1243 = vmatprep.subr.bf16.mxu0 0
        %1244 = vmatpush1.bf16.msra.mxu0 %v674
        %1245 = vmatprep.subr.bf16.mxu0 0
        %1246 = vmatpush1.bf16.msra.mxu0 %v675
        %1247 = vmatprep.subr.bf16.mxu0 0
        %1248 = vmatpush1.bf16.msra.mxu0 %v676
        %1249 = vmatprep.subr.bf16.mxu0 0
        %1250 = vmatpush1.bf16.msra.mxu0 %v677
        %1251 = vmatprep.mubr.bf16.mxu0 %v1167
        %1252 = vmatmul.mubr.bf16.gmra.mrb[0].mxu0 %v1166
        %v1253 = vpop.f32.mrb[0].mxu0
        %v1254 = vadd.f32 %v1213, %v1253
        %v1255 = vpop.f32.mrb[0].mxu0
        %v1256 = vpop.f32.mrb[0].mxu0
        %v1257 = vadd.f32 %v1216, %v1256
        %v1258 = vpop.f32.mrb[0].mxu0
        %1259 = vdwg.mxu0
        %1260 = vmatprep.subr.bf16.mxu0 0
        %1261 = vmatpush1.bf16.msra.mxu0 %v678
        %1262 = vmatprep.subr.bf16.mxu0 0
        %1263 = vmatpush1.bf16.msra.mxu0 %v679
        %1264 = vmatprep.subr.bf16.mxu0 0
        %1265 = vmatpush1.bf16.msra.mxu0 %v680
        %1266 = vmatprep.subr.bf16.mxu0 0
        %1267 = vmatpush1.bf16.msra.mxu0 %v681
        %1268 = vmatprep.subr.bf16.mxu0 0
        %1269 = vmatpush1.bf16.msra.mxu0 %v682
        %1270 = vmatprep.subr.bf16.mxu0 0
        %1271 = vmatpush1.bf16.msra.mxu0 %v683
        %1272 = vmatprep.subr.bf16.mxu0 0
        %1273 = vmatpush1.bf16.msra.mxu0 %v684
        %1274 = vmatprep.subr.bf16.mxu0 0
        %1275 = vmatpush1.bf16.msra.mxu0 %v685
        %1276 = vmatprep.subr.bf16.mxu0 0
        %1277 = vmatpush1.bf16.msra.mxu0 %v686
        %1278 = vmatprep.subr.bf16.mxu0 0
        %1279 = vmatpush1.bf16.msra.mxu0 %v687
        %1280 = vmatprep.subr.bf16.mxu0 0
        %1281 = vmatpush1.bf16.msra.mxu0 %v688
        %1282 = vmatprep.subr.bf16.mxu0 0
        %1283 = vmatpush1.bf16.msra.mxu0 %v689
        %1284 = vmatprep.subr.bf16.mxu0 0
        %1285 = vmatpush1.bf16.msra.mxu0 %v690
        %1286 = vmatprep.subr.bf16.mxu0 0
        %1287 = vmatpush1.bf16.msra.mxu0 %v691
        %1288 = vmatprep.subr.bf16.mxu0 0
        %1289 = vmatpush1.bf16.msra.mxu0 %v692
        %1290 = vmatprep.subr.bf16.mxu0 0
        %1291 = vmatpush1.bf16.msra.mxu0 %v693
        %1292 = vmatprep.mubr.bf16.mxu0 %v1169
        %1293 = vmatmul.mubr.bf16.gmra.mrb[0].mxu0 %v1168
        %v1294 = vpop.f32.mrb[0].mxu0
        %v1295 = vadd.f32 %v1254, %v1294
        %v1296 = vpop.f32.mrb[0].mxu0
        %v1297 = vpop.f32.mrb[0].mxu0
        %v1298 = vadd.f32 %v1257, %v1297
        %v1299 = vpop.f32.mrb[0].mxu0
        %1300 = vdwg.mxu0
        %1301 = vmatprep.subr.bf16.mxu0 0
        %1302 = vmatpush1.bf16.msra.mxu0 %v694
        %1303 = vmatprep.subr.bf16.mxu0 0
        %1304 = vmatpush1.bf16.msra.mxu0 %v695
        %1305 = vmatprep.subr.bf16.mxu0 0
        %1306 = vmatpush1.bf16.msra.mxu0 %v696
        %1307 = vmatprep.subr.bf16.mxu0 0
        %1308 = vmatpush1.bf16.msra.mxu0 %v697
        %1309 = vmatprep.subr.bf16.mxu0 0
        %1310 = vmatpush1.bf16.msra.mxu0 %v698
        %1311 = vmatprep.subr.bf16.mxu0 0
        %1312 = vmatpush1.bf16.msra.mxu0 %v699
        %1313 = vmatprep.subr.bf16.mxu0 0
        %1314 = vmatpush1.bf16.msra.mxu0 %v700
        %1315 = vmatprep.subr.bf16.mxu0 0
        %1316 = vmatpush1.bf16.msra.mxu0 %v701
        %1317 = vmatprep.subr.bf16.mxu0 0
        %1318 = vmatpush1.bf16.msra.mxu0 0
        %1319 = vmatprep.subr.bf16.mxu0 0
        %1320 = vmatpush1.bf16.msra.mxu0 0
        %1321 = vmatprep.subr.bf16.mxu0 0
        %1322 = vmatpush1.bf16.msra.mxu0 0
        %1323 = vmatprep.subr.bf16.mxu0 0
        %1324 = vmatpush1.bf16.msra.mxu0 0
        %1325 = vmatprep.subr.bf16.mxu0 0
        %1326 = vmatpush1.bf16.msra.mxu0 0
        %1327 = vmatprep.subr.bf16.mxu0 0
        %1328 = vmatpush1.bf16.msra.mxu0 0
        %1329 = vmatprep.subr.bf16.mxu0 0
        %1330 = vmatpush1.bf16.msra.mxu0 0
        %1331 = vmatprep.subr.bf16.mxu0 0
        %1332 = vmatpush1.bf16.msra.mxu0 0
        %1333 = vmatprep.mubr.bf16.mxu0 0
        %1334 = vmatmul.mubr.bf16.gmra.mrb[0].mxu0 %v1170
        %v1335 = vpop.f32.mrb[0].mxu0
        %v1336 = vadd.f32 %v1295, %v1335
        %v1337 = vpop.f32.mrb[0].mxu0
        %v1338 = vpop.f32.mrb[0].mxu0
        %v1339 = vadd.f32 %v1298, %v1338
        %v1340 = vpop.f32.mrb[0].mxu0
        %1341 = vdwg.mxu0
        %v1342 = vmax.f32 %v1131, %v1336
        %v1343 = vmax.f32 %v1132, %v1339
        %s1344 = scalar_lea.vmem %s237, 168 [#allocation2]
        %v1345 = vld [vmem:[%s1344] sm:$0xff]
        %v1346 = vld [vmem:[%s1344 + $0x8] sm:$0xff]
        %v1347 = vld [vmem:[%s1344 + $0x10] sm:$0xff]
        %v1348 = vld [vmem:[%s1344 + $0x18] sm:$0xf]
        %v1349 = vld [vmem:[%s1344 + $0x1c] sm:$0xff]
        %v1350 = vld [vmem:[%s1344 + $0x24] sm:$0xff]
        %v1351 = vld [vmem:[%s1344 + $0x2c] sm:$0xff]
        %v1352 = vld [vmem:[%s1344 + $0x34] sm:$0xf]
        %v1361 = vunpack.c.l.b16 %v1345
        %v1362 = vunpack.c.h.b16 %v1345
        %v1363 = vunpack.c.l.b16 %v1346
        %v1364 = vunpack.c.h.b16 %v1346
        %v1365 = vunpack.c.l.b16 %v1347
        %v1366 = vunpack.c.h.b16 %v1347
        %v1367 = vunpack.c.l.b16 %v1348
        %v1368 = vunpack.c.l.b16 %v1349
        %v1369 = vunpack.c.h.b16 %v1349
        %v1370 = vunpack.c.l.b16 %v1350
        %v1371 = vunpack.c.h.b16 %v1350
        %v1372 = vunpack.c.l.b16 %v1351
        %v1373 = vunpack.c.h.b16 %v1351
        %v1374 = vunpack.c.l.b16 %v1352
        %v1375 = vpack.c.b16 %v1368, %v1361
        %v1376 = vpack.c.b16 %v1369, %v1362
        %v1377 = vpack.c.b16 %v1370, %v1363
        %v1378 = vpack.c.b16 %v1371, %v1364
        %v1379 = vpack.c.b16 %v1372, %v1365
        %v1380 = vpack.c.b16 %v1373, %v1366
        %v1381 = vpack.c.b16 %v1374, %v1367
        %1389 = vmatprep.subr.bf16.mxu0 0
        %1390 = vmatpush1.bf16.msra.mxu0 %v646
        %1391 = vmatprep.subr.bf16.mxu0 0
        %1392 = vmatpush1.bf16.msra.mxu0 %v647
        %1393 = vmatprep.subr.bf16.mxu0 0
        %1394 = vmatpush1.bf16.msra.mxu0 %v648
        %1395 = vmatprep.subr.bf16.mxu0 0
        %1396 = vmatpush1.bf16.msra.mxu0 %v649
        %1397 = vmatprep.subr.bf16.mxu0 0
        %1398 = vmatpush1.bf16.msra.mxu0 %v650
        %1399 = vmatprep.subr.bf16.mxu0 0
        %1400 = vmatpush1.bf16.msra.mxu0 %v651
        %1401 = vmatprep.subr.bf16.mxu0 0
        %1402 = vmatpush1.bf16.msra.mxu0 %v652
        %1403 = vmatprep.subr.bf16.mxu0 0
        %1404 = vmatpush1.bf16.msra.mxu0 %v653
        %1405 = vmatprep.subr.bf16.mxu0 0
        %1406 = vmatpush1.bf16.msra.mxu0 %v654
        %1407 = vmatprep.subr.bf16.mxu0 0
        %1408 = vmatpush1.bf16.msra.mxu0 %v655
        %1409 = vmatprep.subr.bf16.mxu0 0
        %1410 = vmatpush1.bf16.msra.mxu0 %v656
        %1411 = vmatprep.subr.bf16.mxu0 0
        %1412 = vmatpush1.bf16.msra.mxu0 %v657
        %1413 = vmatprep.subr.bf16.mxu0 0
        %1414 = vmatpush1.bf16.msra.mxu0 %v658
        %1415 = vmatprep.subr.bf16.mxu0 0
        %1416 = vmatpush1.bf16.msra.mxu0 %v659
        %1417 = vmatprep.subr.bf16.mxu0 0
        %1418 = vmatpush1.bf16.msra.mxu0 %v660
        %1419 = vmatprep.subr.bf16.mxu0 0
        %1420 = vmatpush1.bf16.msra.mxu0 %v661
        %1421 = vmatprep.mubr.bf16.mxu0 %v1376
        %1422 = vmatmul.mubr.bf16.gmra.mrb[0].mxu0 %v1375
        %v1423 = vpop.f32.mrb[0].mxu0
        %v1424 = vadd.f32 0.0, %v1423
        %v1425 = vpop.f32.mrb[0].mxu0
        %v1426 = vpop.f32.mrb[0].mxu0
        %v1427 = vadd.f32 0.0, %v1426
        %v1428 = vpop.f32.mrb[0].mxu0
        %1429 = vdwg.mxu0
        %1430 = vmatprep.subr.bf16.mxu0 0
        %1431 = vmatpush1.bf16.msra.mxu0 %v662
        %1432 = vmatprep.subr.bf16.mxu0 0
        %1433 = vmatpush1.bf16.msra.mxu0 %v663
        %1434 = vmatprep.subr.bf16.mxu0 0
        %1435 = vmatpush1.bf16.msra.mxu0 %v664
        %1436 = vmatprep.subr.bf16.mxu0 0
        %1437 = vmatpush1.bf16.msra.mxu0 %v665
        %1438 = vmatprep.subr.bf16.mxu0 0
        %1439 = vmatpush1.bf16.msra.mxu0 %v666
        %1440 = vmatprep.subr.bf16.mxu0 0
        %1441 = vmatpush1.bf16.msra.mxu0 %v667
        %1442 = vmatprep.subr.bf16.mxu0 0
        %1443 = vmatpush1.bf16.msra.mxu0 %v668
        %1444 = vmatprep.subr.bf16.mxu0 0
        %1445 = vmatpush1.bf16.msra.mxu0 %v669
        %1446 = vmatprep.subr.bf16.mxu0 0
        %1447 = vmatpush1.bf16.msra.mxu0 %v670
        %1448 = vmatprep.subr.bf16.mxu0 0
        %1449 = vmatpush1.bf16.msra.mxu0 %v671
        %1450 = vmatprep.subr.bf16.mxu0 0
        %1451 = vmatpush1.bf16.msra.mxu0 %v672
        %1452 = vmatprep.subr.bf16.mxu0 0
        %1453 = vmatpush1.bf16.msra.mxu0 %v673
        %1454 = vmatprep.subr.bf16.mxu0 0
        %1455 = vmatpush1.bf16.msra.mxu0 %v674
        %1456 = vmatprep.subr.bf16.mxu0 0
        %1457 = vmatpush1.bf16.msra.mxu0 %v675
        %1458 = vmatprep.subr.bf16.mxu0 0
        %1459 = vmatpush1.bf16.msra.mxu0 %v676
        %1460 = vmatprep.subr.bf16.mxu0 0
        %1461 = vmatpush1.bf16.msra.mxu0 %v677
        %1462 = vmatprep.mubr.bf16.mxu0 %v1378
        %1463 = vmatmul.mubr.bf16.gmra.mrb[0].mxu0 %v1377
        %v1464 = vpop.f32.mrb[0].mxu0
        %v1465 = vadd.f32 %v1424, %v1464
        %v1466 = vpop.f32.mrb[0].mxu0
        %v1467 = vpop.f32.mrb[0].mxu0
        %v1468 = vadd.f32 %v1427, %v1467
        %v1469 = vpop.f32.mrb[0].mxu0
        %1470 = vdwg.mxu0
        %1471 = vmatprep.subr.bf16.mxu0 0
        %1472 = vmatpush1.bf16.msra.mxu0 %v678
        %1473 = vmatprep.subr.bf16.mxu0 0
        %1474 = vmatpush1.bf16.msra.mxu0 %v679
        %1475 = vmatprep.subr.bf16.mxu0 0
        %1476 = vmatpush1.bf16.msra.mxu0 %v680
        %1477 = vmatprep.subr.bf16.mxu0 0
        %1478 = vmatpush1.bf16.msra.mxu0 %v681
        %1479 = vmatprep.subr.bf16.mxu0 0
        %1480 = vmatpush1.bf16.msra.mxu0 %v682
        %1481 = vmatprep.subr.bf16.mxu0 0
        %1482 = vmatpush1.bf16.msra.mxu0 %v683
        %1483 = vmatprep.subr.bf16.mxu0 0
        %1484 = vmatpush1.bf16.msra.mxu0 %v684
        %1485 = vmatprep.subr.bf16.mxu0 0
        %1486 = vmatpush1.bf16.msra.mxu0 %v685
        %1487 = vmatprep.subr.bf16.mxu0 0
        %1488 = vmatpush1.bf16.msra.mxu0 %v686
        %1489 = vmatprep.subr.bf16.mxu0 0
        %1490 = vmatpush1.bf16.msra.mxu0 %v687
        %1491 = vmatprep.subr.bf16.mxu0 0
        %1492 = vmatpush1.bf16.msra.mxu0 %v688
        %1493 = vmatprep.subr.bf16.mxu0 0
        %1494 = vmatpush1.bf16.msra.mxu0 %v689
        %1495 = vmatprep.subr.bf16.mxu0 0
        %1496 = vmatpush1.bf16.msra.mxu0 %v690
        %1497 = vmatprep.subr.bf16.mxu0 0
        %1498 = vmatpush1.bf16.msra.mxu0 %v691
        %1499 = vmatprep.subr.bf16.mxu0 0
        %1500 = vmatpush1.bf16.msra.mxu0 %v692
        %1501 = vmatprep.subr.bf16.mxu0 0
        %1502 = vmatpush1.bf16.msra.mxu0 %v693
        %1503 = vmatprep.mubr.bf16.mxu0 %v1380
        %1504 = vmatmul.mubr.bf16.gmra.mrb[0].mxu0 %v1379
        %v1505 = vpop.f32.mrb[0].mxu0
        %v1506 = vadd.f32 %v1465, %v1505
        %v1507 = vpop.f32.mrb[0].mxu0
        %v1508 = vpop.f32.mrb[0].mxu0
        %v1509 = vadd.f32 %v1468, %v1508
        %v1510 = vpop.f32.mrb[0].mxu0
        %1511 = vdwg.mxu0
        %1512 = vmatprep.subr.bf16.mxu0 0
        %1513 = vmatpush1.bf16.msra.mxu0 %v694
        %1514 = vmatprep.subr.bf16.mxu0 0
        %1515 = vmatpush1.bf16.msra.mxu0 %v695
        %1516 = vmatprep.subr.bf16.mxu0 0
        %1517 = vmatpush1.bf16.msra.mxu0 %v696
        %1518 = vmatprep.subr.bf16.mxu0 0
        %1519 = vmatpush1.bf16.msra.mxu0 %v697
        %1520 = vmatprep.subr.bf16.mxu0 0
        %1521 = vmatpush1.bf16.msra.mxu0 %v698
        %1522 = vmatprep.subr.bf16.mxu0 0
        %1523 = vmatpush1.bf16.msra.mxu0 %v699
        %1524 = vmatprep.subr.bf16.mxu0 0
        %1525 = vmatpush1.bf16.msra.mxu0 %v700
        %1526 = vmatprep.subr.bf16.mxu0 0
        %1527 = vmatpush1.bf16.msra.mxu0 %v701
        %1528 = vmatprep.subr.bf16.mxu0 0
        %1529 = vmatpush1.bf16.msra.mxu0 0
        %1530 = vmatprep.subr.bf16.mxu0 0
        %1531 = vmatpush1.bf16.msra.mxu0 0
        %1532 = vmatprep.subr.bf16.mxu0 0
        %1533 = vmatpush1.bf16.msra.mxu0 0
        %1534 = vmatprep.subr.bf16.mxu0 0
        %1535 = vmatpush1.bf16.msra.mxu0 0
        %1536 = vmatprep.subr.bf16.mxu0 0
        %1537 = vmatpush1.bf16.msra.mxu0 0
        %1538 = vmatprep.subr.bf16.mxu0 0
        %1539 = vmatpush1.bf16.msra.mxu0 0
        %1540 = vmatprep.subr.bf16.mxu0 0
        %1541 = vmatpush1.bf16.msra.mxu0 0
        %1542 = vmatprep.subr.bf16.mxu0 0
        %1543 = vmatpush1.bf16.msra.mxu0 0
        %1544 = vmatprep.mubr.bf16.mxu0 0
        %1545 = vmatmul.mubr.bf16.gmra.mrb[0].mxu0 %v1381
        %v1546 = vpop.f32.mrb[0].mxu0
        %v1547 = vadd.f32 %v1506, %v1546
        %v1548 = vpop.f32.mrb[0].mxu0
        %v1549 = vpop.f32.mrb[0].mxu0
        %v1550 = vadd.f32 %v1509, %v1549
        %v1551 = vpop.f32.mrb[0].mxu0
        %1552 = vdwg.mxu0
        %v1553 = vmax.f32 %v1342, %v1547
        %v1554 = vmax.f32 %v1343, %v1550
        %v1555 = vld [vmem:[%s2] sm:$0x1]
        %v1557 = vlaneseq
        %v1558 = vshrl.u32 %v1557, 7
        %v1559 = vsub.s32 0, %v1558
        %v1560 = vrot.slane %v1555, %v1559
        %v1562 = vadd.f32 %v1553, %v1560
        %v1563 = vadd.f32 %v1554, %v1560
        %v1564 = vmax.f32 %v1562, 0.0
        %v1565 = vmax.f32 %v1563, 0.0
        %v1566 = vpack.c.bf16 %v1565, %v1564
        %v1568 = vunpack.c.l.b16 %v1566
        %v1569 = vunpack.c.h.b16 %v1566
        %v1570 = vpack.c.b16 %v1568, %v1568
        %v1571 = vpack.c.b16 %v1569, %v1569
        %1574 = vst [vmem:[%s263] sm:$0xf] %v1570
        %1575 = vst [vmem:[%s263 + $0x4] sm:$0xf] %v1571
        %s1576 = smul.u32 2, %s14
        %p1577 = scmp.lt.s32.totalorder %s1576, 7
        %s1578 = scalar_select %p1577, %s1576, 7
        %s1579 = smul.addr %s1578, 4
        %s1580 = scalar_lea.vmem %s3, %s1579
        // Predicated region
        $region59: #{fedavg_cnn_forward.4} parent=53 // pred_check
          %p1581 = pneg %p100
        $region60: #{fedavg_cnn_forward.4} parent=53 // pred_check_branch
          %1583 = sbr.rel (%p1581) target = $region62
        $region61: #{fedavg_cnn_forward.4} parent=53 // pred_region
          %s1584 = smul.u32 2, %s14
        $region62: #{fedavg_cnn_forward.4} parent=53 // pred_fallthru
          _
      $region54: #{fedavg_cnn_forward.4} parent=5 // pred_fallthru
        _
      %p1585 = scmp.le.s32.totalorder 2, %s9
      // Predicated region
      $region63: #{fedavg_cnn_forward.4} parent=5 // pred_check
        %p1586 = pneg %p1585
      $region64: #{fedavg_cnn_forward.4} parent=5 // pred_check_branch
        %1588 = sbr.rel (%p1586) target = $region66
      $region65: #{fedavg_cnn_forward.4} parent=5 // pred_region
        %s1589 = ssub.s32 %s9, 2
        // Predicated region
        $region67: #{fedavg_cnn_forward.4} parent=65 // pred_check
          %p1590 = pneg %p106
        $region68: #{fedavg_cnn_forward.4} parent=65 // pred_check_branch
          %1592 = sbr.rel (%p1590) target = $region70
        $region69: #{fedavg_cnn_forward.4} parent=65 // pred_region
          %s1593 = smul.u32 2, %s15
          %p1594 = scmp.lt.s32.totalorder %s1593, 7
          %s1595 = scalar_select %p1594, %s1593, 7
          %s1596 = smul.addr %s1595, 4
          %s1597 = scalar_lea.vmem %s3, %s1596
        $region70: #{fedavg_cnn_forward.4} parent=65 // pred_fallthru
          _
      $region66: #{fedavg_cnn_forward.4} parent=5 // pred_fallthru
        _
    $region6: #{fedavg_cnn_forward.4} parent=1 // loop_footer
      %s13 = sadd.s32 1, %s9
    $region7: #{fedavg_cnn_forward.4} parent=1 // loop_footer_branch
      %8 = sbr.rel target = $region3
    $region8: #{fedavg_cnn_forward.4} parent=1 // loop_exit
      _

// kernel: fedavg_cnn_forward.5
$region0: #{fedavg_cnn_forward.5}
  #allocation0 [shape = 'u32[]', space=smem, size = 0x4, offset = 0x4, fixed_abs, tag = 'smem constant byte address 0x4 - core index']
  #allocation1 [shape = 'u32[144,128]{1,0:T(1,128)}', space=vmem, size = 0x12000, scoped, tag = 'internal scratch']
  %s0 = inlined_call_operand.vmem [shape: bf16[8,1664], index: 0, kind: input, shape index: {}]
  %s1 = inlined_call_operand.vmem [shape: bf16[1664,512], index: 1, kind: input, shape index: {}]
  %s2 = inlined_call_operand.vmem [shape: f32[1,512], index: 2, kind: input, shape index: {}]
  %s3 = inlined_call_operand.vmem [shape: bf16[512,128], index: 3, kind: input, shape index: {}]
  %s4 = inlined_call_operand.vmem [shape: f32[1,128], index: 4, kind: input, shape index: {}]
  %s5 = inlined_call_operand.vmem [shape: f32[8,128], index: 5, kind: output, shape index: {0}]
  %s6 = inlined_call_operand.vmem [shape: f32[8,128], index: 6, kind: output, shape index: {1}]
  %7 = xla_tuple %s5, %s6
  %s8 = sld [smem:[#allocation0]]
  $region38: #{fedavg_cnn_forward.5} parent=0
    _
  %s10 = ssub.s32 1, %s8
  %s11 = scalar_select 0, %s10, %s8
  // Predicated region
  $region2: #{fedavg_cnn_forward.5} parent=0 // pred_check
    _
  $region3: #{fedavg_cnn_forward.5} parent=0 // pred_check_branch
    %13 = sbr.rel (0) target = $region5
  $region4: #{fedavg_cnn_forward.5} parent=0 // pred_region
    _
  $region5: #{fedavg_cnn_forward.5} parent=0 // pred_fallthru
    _
  // Predicated region
  $region6: #{fedavg_cnn_forward.5} parent=0 // pred_check
    _
  $region7: #{fedavg_cnn_forward.5} parent=0 // pred_check_branch
    %15 = sbr.rel (0) target = $region9
  $region8: #{fedavg_cnn_forward.5} parent=0 // pred_region
    _
  $region9: #{fedavg_cnn_forward.5} parent=0 // pred_fallthru
    _
  // Predicated region
  $region10: #{fedavg_cnn_forward.5} parent=0 // pred_check
    _
  $region11: #{fedavg_cnn_forward.5} parent=0 // pred_check_branch
    %17 = sbr.rel (0) target = $region13
  $region12: #{fedavg_cnn_forward.5} parent=0 // pred_region
    _
  $region13: #{fedavg_cnn_forward.5} parent=0 // pred_fallthru
    _
  // Predicated region
  $region14: #{fedavg_cnn_forward.5} parent=0 // pred_check
    _
  $region15: #{fedavg_cnn_forward.5} parent=0 // pred_check_branch
    %19 = sbr.rel (0) target = $region17
  $region16: #{fedavg_cnn_forward.5} parent=0 // pred_region
    _
  $region17: #{fedavg_cnn_forward.5} parent=0 // pred_fallthru
    _
  // Predicated region
  $region18: #{fedavg_cnn_forward.5} parent=0 // pred_check
    _
  $region19: #{fedavg_cnn_forward.5} parent=0 // pred_check_branch
    %21 = sbr.rel (0) target = $region21
  $region20: #{fedavg_cnn_forward.5} parent=0 // pred_region
    _
  $region21: #{fedavg_cnn_forward.5} parent=0 // pred_fallthru
    _
  %v23 = vld [vmem:[%s0] sm:$0xff]
  %v24 = vld [vmem:[%s0 + $0x8] sm:$0xff]
  %v25 = vld [vmem:[%s0 + $0x10] sm:$0xff]
  %v26 = vld [vmem:[%s0 + $0x18] sm:$0xff]
  %v27 = vld [vmem:[%s0 + $0x20] sm:$0xff]
  %v28 = vld [vmem:[%s0 + $0x28] sm:$0xff]
  %v29 = vld [vmem:[%s0 + $0x30] sm:$0xf]
  %v30 = vld [vmem:[%s1] sm:$0xff]
  %v31 = vld [vmem:[%s1 + $0x8] sm:$0xff]
  %v32 = vld [vmem:[%s1 + $0x10] sm:$0xff]
  %v33 = vld [vmem:[%s1 + $0x18] sm:$0xff]
  %v34 = vld [vmem:[%s1 + $0x20] sm:$0xff]
  %v35 = vld [vmem:[%s1 + $0x28] sm:$0xff]
  %v36 = vld [vmem:[%s1 + $0x30] sm:$0xff]
  %v37 = vld [vmem:[%s1 + $0x38] sm:$0xff]
  %v38 = vld [vmem:[%s1 + $0x40] sm:$0xff]
  %v39 = vld [vmem:[%s1 + $0x48] sm:$0xff]
  %v40 = vld [vmem:[%s1 + $0x50] sm:$0xff]
  %v41 = vld [vmem:[%s1 + $0x58] sm:$0xff]
  %v42 = vld [vmem:[%s1 + $0x60] sm:$0xff]
  %v43 = vld [vmem:[%s1 + $0x68] sm:$0xff]
  %v44 = vld [vmem:[%s1 + $0x70] sm:$0xff]
  %v45 = vld [vmem:[%s1 + $0x78] sm:$0xff]
  %v46 = vld [vmem:[%s1 + $0x80] sm:$0xff]
  %v47 = vld [vmem:[%s1 + $0x88] sm:$0xff]
  %v48 = vld [vmem:[%s1 + $0x90] sm:$0xff]
  %v49 = vld [vmem:[%s1 + $0x98] sm:$0xff]
  %v50 = vld [vmem:[%s1 + $0xa0] sm:$0xff]
  %v51 = vld [vmem:[%s1 + $0xa8] sm:$0xff]
  %v52 = vld [vmem:[%s1 + $0xb0] sm:$0xff]
  %v53 = vld [vmem:[%s1 + $0xb8] sm:$0xff]
  %v54 = vld [vmem:[%s1 + $0xc0] sm:$0xff]
  %v55 = vld [vmem:[%s1 + $0xc8] sm:$0xff]
  %v56 = vld [vmem:[%s1 + $0xd0] sm:$0xff]
  %v57 = vld [vmem:[%s1 + $0xd8] sm:$0xff]
  %v58 = vld [vmem:[%s1 + $0xe0] sm:$0xff]
  %v59 = vld [vmem:[%s1 + $0xe8] sm:$0xff]
  %v60 = vld [vmem:[%s1 + $0xf0] sm:$0xff]
  %v61 = vld [vmem:[%s1 + $0xf8] sm:$0xff]
  %v62 = vld [vmem:[%s1 + $0x100] sm:$0xff]
  %v63 = vld [vmem:[%s1 + $0x108] sm:$0xff]
  %v64 = vld [vmem:[%s1 + $0x110] sm:$0xff]
  %v65 = vld [vmem:[%s1 + $0x118] sm:$0xff]
  %v66 = vld [vmem:[%s1 + $0x120] sm:$0xff]
  %v67 = vld [vmem:[%s1 + $0x128] sm:$0xff]
  %v68 = vld [vmem:[%s1 + $0x130] sm:$0xff]
  %v69 = vld [vmem:[%s1 + $0x138] sm:$0xff]
  %v70 = vld [vmem:[%s1 + $0x140] sm:$0xff]
  %v71 = vld [vmem:[%s1 + $0x148] sm:$0xff]
  %v72 = vld [vmem:[%s1 + $0x150] sm:$0xff]
  %v73 = vld [vmem:[%s1 + $0x158] sm:$0xff]
  %v74 = vld [vmem:[%s1 + $0x160] sm:$0xff]
  %v75 = vld [vmem:[%s1 + $0x168] sm:$0xff]
  %v76 = vld [vmem:[%s1 + $0x170] sm:$0xff]
  %v77 = vld [vmem:[%s1 + $0x178] sm:$0xff]
  %v78 = vld [vmem:[%s1 + $0x180] sm:$0xff]
  %v79 = vld [vmem:[%s1 + $0x188] sm:$0xff]
  %v80 = vld [vmem:[%s1 + $0x190] sm:$0xff]
  %v81 = vld [vmem:[%s1 + $0x198] sm:$0xff]
  %v82 = vld [vmem:[%s1 + $0x1a0] sm:$0xff]
  %v83 = vld [vmem:[%s1 + $0x1a8] sm:$0xff]
  %v84 = vld [vmem:[%s1 + $0x1b0] sm:$0xff]
  %v85 = vld [vmem:[%s1 + $0x1b8] sm:$0xff]
  %v86 = vld [vmem:[%s1 + $0x1c0] sm:$0xff]
  %v87 = vld [vmem:[%s1 + $0x1c8] sm:$0xff]
  %v88 = vld [vmem:[%s1 + $0x1d0] sm:$0xff]
  %v89 = vld [vmem:[%s1 + $0x1d8] sm:$0xff]
  %v90 = vld [vmem:[%s1 + $0x1e0] sm:$0xff]
  %v91 = vld [vmem:[%s1 + $0x1e8] sm:$0xff]
  %v92 = vld [vmem:[%s1 + $0x1f0] sm:$0xff]
  %v93 = vld [vmem:[%s1 + $0x1f8] sm:$0xff]
  %v94 = vld [vmem:[%s1 + $0x200] sm:$0xff]
  %v95 = vld [vmem:[%s1 + $0x208] sm:$0xff]
  %v96 = vld [vmem:[%s1 + $0x210] sm:$0xff]
  %v97 = vld [vmem:[%s1 + $0x218] sm:$0xff]
  %v98 = vld [vmem:[%s1 + $0x220] sm:$0xff]
  %v99 = vld [vmem:[%s1 + $0x228] sm:$0xff]
  %v100 = vld [vmem:[%s1 + $0x230] sm:$0xff]
  %v101 = vld [vmem:[%s1 + $0x238] sm:$0xff]
  %v102 = vld [vmem:[%s1 + $0x240] sm:$0xff]
  %v103 = vld [vmem:[%s1 + $0x248] sm:$0xff]
  %v104 = vld [vmem:[%s1 + $0x250] sm:$0xff]
  %v105 = vld [vmem:[%s1 + $0x258] sm:$0xff]
  %v106 = vld [vmem:[%s1 + $0x260] sm:$0xff]
  %v107 = vld [vmem:[%s1 + $0x268] sm:$0xff]
  %v108 = vld [vmem:[%s1 + $0x270] sm:$0xff]
  %v109 = vld [vmem:[%s1 + $0x278] sm:$0xff]
  %v110 = vld [vmem:[%s1 + $0x280] sm:$0xff]
  %v111 = vld [vmem:[%s1 + $0x288] sm:$0xff]
  %v112 = vld [vmem:[%s1 + $0x290] sm:$0xff]
  %v113 = vld [vmem:[%s1 + $0x298] sm:$0xff]
  %v114 = vld [vmem:[%s1 + $0x2a0] sm:$0xff]
  %v115 = vld [vmem:[%s1 + $0x2a8] sm:$0xff]
  %v116 = vld [vmem:[%s1 + $0x2b0] sm:$0xff]
  %v117 = vld [vmem:[%s1 + $0x2b8] sm:$0xff]
  %v118 = vld [vmem:[%s1 + $0x2c0] sm:$0xff]
  %v119 = vld [vmem:[%s1 + $0x2c8] sm:$0xff]
  %v120 = vld [vmem:[%s1 + $0x2d0] sm:$0xff]
  %v121 = vld [vmem:[%s1 + $0x2d8] sm:$0xff]
  %v122 = vld [vmem:[%s1 + $0x2e0] sm:$0xff]
  %v123 = vld [vmem:[%s1 + $0x2e8] sm:$0xff]
  %v124 = vld [vmem:[%s1 + $0x2f0] sm:$0xff]
  %v125 = vld [vmem:[%s1 + $0x2f8] sm:$0xff]
  %v126 = vld [vmem:[%s1 + $0x300] sm:$0xff]
  %v127 = vld [vmem:[%s1 + $0x308] sm:$0xff]
  %v128 = vld [vmem:[%s1 + $0x310] sm:$0xff]
  %v129 = vld [vmem:[%s1 + $0x318] sm:$0xff]
  %v130 = vld [vmem:[%s1 + $0x320] sm:$0xff]
  %v131 = vld [vmem:[%s1 + $0x328] sm:$0xff]
  %v132 = vld [vmem:[%s1 + $0x330] sm:$0xff]
  %v133 = vld [vmem:[%s1 + $0x338] sm:$0xff]
  %v134 = vld [vmem:[%s1 + $0x340] sm:$0xff]
  %v135 = vld [vmem:[%s1 + $0x348] sm:$0xff]
  %v136 = vld [vmem:[%s1 + $0x350] sm:$0xff]
  %v137 = vld [vmem:[%s1 + $0x358] sm:$0xff]
  %v138 = vld [vmem:[%s1 + $0x360] sm:$0xff]
  %v139 = vld [vmem:[%s1 + $0x368] sm:$0xff]
  %v140 = vld [vmem:[%s1 + $0x370] sm:$0xff]
  %v141 = vld [vmem:[%s1 + $0x378] sm:$0xff]
  %v142 = vld [vmem:[%s1 + $0x380] sm:$0xff]
  %v143 = vld [vmem:[%s1 + $0x388] sm:$0xff]
  %v144 = vld [vmem:[%s1 + $0x390] sm:$0xff]
  %v145 = vld [vmem:[%s1 + $0x398] sm:$0xff]
  %v146 = vld [vmem:[%s1 + $0x3a0] sm:$0xff]
  %v147 = vld [vmem:[%s1 + $0x3a8] sm:$0xff]
  %v148 = vld [vmem:[%s1 + $0x3b0] sm:$0xff]
  %v149 = vld [vmem:[%s1 + $0x3b8] sm:$0xff]
  %v150 = vld [vmem:[%s1 + $0x3c0] sm:$0xff]
  %v151 = vld [vmem:[%s1 + $0x3c8] sm:$0xff]
  %v152 = vld [vmem:[%s1 + $0x3d0] sm:$0xff]
  %v153 = vld [vmem:[%s1 + $0x3d8] sm:$0xff]
  %v154 = vld [vmem:[%s1 + $0x3e0] sm:$0xff]
  %v155 = vld [vmem:[%s1 + $0x3e8] sm:$0xff]
  %v156 = vld [vmem:[%s1 + $0x3f0] sm:$0xff]
  %v157 = vld [vmem:[%s1 + $0x3f8] sm:$0xff]
  %v158 = vld [vmem:[%s1 + $0x400] sm:$0xff]
  %v159 = vld [vmem:[%s1 + $0x408] sm:$0xff]
  %v160 = vld [vmem:[%s1 + $0x410] sm:$0xff]
  %v161 = vld [vmem:[%s1 + $0x418] sm:$0xff]
  %v162 = vld [vmem:[%s1 + $0x420] sm:$0xff]
  %v163 = vld [vmem:[%s1 + $0x428] sm:$0xff]
  %v164 = vld [vmem:[%s1 + $0x430] sm:$0xff]
  %v165 = vld [vmem:[%s1 + $0x438] sm:$0xff]
  %v166 = vld [vmem:[%s1 + $0x440] sm:$0xff]
  %v167 = vld [vmem:[%s1 + $0x448] sm:$0xff]
  %v168 = vld [vmem:[%s1 + $0x450] sm:$0xff]
  %v169 = vld [vmem:[%s1 + $0x458] sm:$0xff]
  %v170 = vld [vmem:[%s1 + $0x460] sm:$0xff]
  %v171 = vld [vmem:[%s1 + $0x468] sm:$0xff]
  %v172 = vld [vmem:[%s1 + $0x470] sm:$0xff]
  %v173 = vld [vmem:[%s1 + $0x478] sm:$0xff]
  %v174 = vld [vmem:[%s1 + $0x480] sm:$0xff]
  %v175 = vld [vmem:[%s1 + $0x488] sm:$0xff]
  %v176 = vld [vmem:[%s1 + $0x490] sm:$0xff]
  %v177 = vld [vmem:[%s1 + $0x498] sm:$0xff]
  %v178 = vld [vmem:[%s1 + $0x4a0] sm:$0xff]
  %v179 = vld [vmem:[%s1 + $0x4a8] sm:$0xff]
  %v180 = vld [vmem:[%s1 + $0x4b0] sm:$0xff]
  %v181 = vld [vmem:[%s1 + $0x4b8] sm:$0xff]
  %v182 = vld [vmem:[%s1 + $0x4c0] sm:$0xff]
  %v183 = vld [vmem:[%s1 + $0x4c8] sm:$0xff]
  %v184 = vld [vmem:[%s1 + $0x4d0] sm:$0xff]
  %v185 = vld [vmem:[%s1 + $0x4d8] sm:$0xff]
  %v186 = vld [vmem:[%s1 + $0x4e0] sm:$0xff]
  %v187 = vld [vmem:[%s1 + $0x4e8] sm:$0xff]
  %v188 = vld [vmem:[%s1 + $0x4f0] sm:$0xff]
  %v189 = vld [vmem:[%s1 + $0x4f8] sm:$0xff]
  %v190 = vld [vmem:[%s1 + $0x500] sm:$0xff]
  %v191 = vld [vmem:[%s1 + $0x508] sm:$0xff]
  %v192 = vld [vmem:[%s1 + $0x510] sm:$0xff]
  %v193 = vld [vmem:[%s1 + $0x518] sm:$0xff]
  %v194 = vld [vmem:[%s1 + $0x520] sm:$0xff]
  %v195 = vld [vmem:[%s1 + $0x528] sm:$0xff]
  %v196 = vld [vmem:[%s1 + $0x530] sm:$0xff]
  %v197 = vld [vmem:[%s1 + $0x538] sm:$0xff]
  %v198 = vld [vmem:[%s1 + $0x540] sm:$0xff]
  %v199 = vld [vmem:[%s1 + $0x548] sm:$0xff]
  %v200 = vld [vmem:[%s1 + $0x550] sm:$0xff]
  %v201 = vld [vmem:[%s1 + $0x558] sm:$0xff]
  %v202 = vld [vmem:[%s1 + $0x560] sm:$0xff]
  %v203 = vld [vmem:[%s1 + $0x568] sm:$0xff]
  %v204 = vld [vmem:[%s1 + $0x570] sm:$0xff]
  %v205 = vld [vmem:[%s1 + $0x578] sm:$0xff]
  %v206 = vld [vmem:[%s1 + $0x580] sm:$0xff]
  %v207 = vld [vmem:[%s1 + $0x588] sm:$0xff]
  %v208 = vld [vmem:[%s1 + $0x590] sm:$0xff]
  %v209 = vld [vmem:[%s1 + $0x598] sm:$0xff]
  %v210 = vld [vmem:[%s1 + $0x5a0] sm:$0xff]
  %v211 = vld [vmem:[%s1 + $0x5a8] sm:$0xff]
  %v212 = vld [vmem:[%s1 + $0x5b0] sm:$0xff]
  %v213 = vld [vmem:[%s1 + $0x5b8] sm:$0xff]
  %v214 = vld [vmem:[%s1 + $0x5c0] sm:$0xff]
  %v215 = vld [vmem:[%s1 + $0x5c8] sm:$0xff]
  %v216 = vld [vmem:[%s1 + $0x5d0] sm:$0xff]
  %v217 = vld [vmem:[%s1 + $0x5d8] sm:$0xff]
  %v218 = vld [vmem:[%s1 + $0x5e0] sm:$0xff]
  %v219 = vld [vmem:[%s1 + $0x5e8] sm:$0xff]
  %v220 = vld [vmem:[%s1 + $0x5f0] sm:$0xff]
  %v221 = vld [vmem:[%s1 + $0x5f8] sm:$0xff]
  %v222 = vld [vmem:[%s1 + $0x600] sm:$0xff]
  %v223 = vld [vmem:[%s1 + $0x608] sm:$0xff]
  %v224 = vld [vmem:[%s1 + $0x610] sm:$0xff]
  %v225 = vld [vmem:[%s1 + $0x618] sm:$0xff]
  %v226 = vld [vmem:[%s1 + $0x620] sm:$0xff]
  %v227 = vld [vmem:[%s1 + $0x628] sm:$0xff]
  %v228 = vld [vmem:[%s1 + $0x630] sm:$0xff]
  %v229 = vld [vmem:[%s1 + $0x638] sm:$0xff]
  %v230 = vld [vmem:[%s1 + $0x640] sm:$0xff]
  %v231 = vld [vmem:[%s1 + $0x648] sm:$0xff]
  %v232 = vld [vmem:[%s1 + $0x650] sm:$0xff]
  %v233 = vld [vmem:[%s1 + $0x658] sm:$0xff]
  %v234 = vld [vmem:[%s1 + $0x660] sm:$0xff]
  %v235 = vld [vmem:[%s1 + $0x668] sm:$0xff]
  %v236 = vld [vmem:[%s1 + $0x670] sm:$0xff]
  %v237 = vld [vmem:[%s1 + $0x678] sm:$0xff]
  %v238 = vld [vmem:[%s1 + $0x680] sm:$0xff]
  %v239 = vld [vmem:[%s1 + $0x688] sm:$0xff]
  %v240 = vld [vmem:[%s1 + $0x690] sm:$0xff]
  %v241 = vld [vmem:[%s1 + $0x698] sm:$0xff]
  %v242 = vld [vmem:[%s1 + $0x6a0] sm:$0xff]
  %v243 = vld [vmem:[%s1 + $0x6a8] sm:$0xff]
  %v244 = vld [vmem:[%s1 + $0x6b0] sm:$0xff]
  %v245 = vld [vmem:[%s1 + $0x6b8] sm:$0xff]
  %v246 = vld [vmem:[%s1 + $0x6c0] sm:$0xff]
  %v247 = vld [vmem:[%s1 + $0x6c8] sm:$0xff]
  %v248 = vld [vmem:[%s1 + $0x6d0] sm:$0xff]
  %v249 = vld [vmem:[%s1 + $0x6d8] sm:$0xff]
  %v250 = vld [vmem:[%s1 + $0x6e0] sm:$0xff]
  %v251 = vld [vmem:[%s1 + $0x6e8] sm:$0xff]
  %v252 = vld [vmem:[%s1 + $0x6f0] sm:$0xff]
  %v253 = vld [vmem:[%s1 + $0x6f8] sm:$0xff]
  %v254 = vld [vmem:[%s1 + $0x700] sm:$0xff]
  %v255 = vld [vmem:[%s1 + $0x708] sm:$0xff]
  %v256 = vld [vmem:[%s1 + $0x710] sm:$0xff]
  %v257 = vld [vmem:[%s1 + $0x718] sm:$0xff]
  %v258 = vld [vmem:[%s1 + $0x720] sm:$0xff]
  %v259 = vld [vmem:[%s1 + $0x728] sm:$0xff]
  %v260 = vld [vmem:[%s1 + $0x730] sm:$0xff]
  %v261 = vld [vmem:[%s1 + $0x738] sm:$0xff]
  %v262 = vld [vmem:[%s1 + $0x740] sm:$0xff]
  %v263 = vld [vmem:[%s1 + $0x748] sm:$0xff]
  %v264 = vld [vmem:[%s1 + $0x750] sm:$0xff]
  %v265 = vld [vmem:[%s1 + $0x758] sm:$0xff]
  %v266 = vld [vmem:[%s1 + $0x760] sm:$0xff]
  %v267 = vld [vmem:[%s1 + $0x768] sm:$0xff]
  %v268 = vld [vmem:[%s1 + $0x770] sm:$0xff]
  %v269 = vld [vmem:[%s1 + $0x778] sm:$0xff]
  %v270 = vld [vmem:[%s1 + $0x780] sm:$0xff]
  %v271 = vld [vmem:[%s1 + $0x788] sm:$0xff]
  %v272 = vld [vmem:[%s1 + $0x790] sm:$0xff]
  %v273 = vld [vmem:[%s1 + $0x798] sm:$0xff]
  %v274 = vld [vmem:[%s1 + $0x7a0] sm:$0xff]
  %v275 = vld [vmem:[%s1 + $0x7a8] sm:$0xff]
  %v276 = vld [vmem:[%s1 + $0x7b0] sm:$0xff]
  %v277 = vld [vmem:[%s1 + $0x7b8] sm:$0xff]
  %v278 = vld [vmem:[%s1 + $0x7c0] sm:$0xff]
  %v279 = vld [vmem:[%s1 + $0x7c8] sm:$0xff]
  %v280 = vld [vmem:[%s1 + $0x7d0] sm:$0xff]
  %v281 = vld [vmem:[%s1 + $0x7d8] sm:$0xff]
  %v282 = vld [vmem:[%s1 + $0x7e0] sm:$0xff]
  %v283 = vld [vmem:[%s1 + $0x7e8] sm:$0xff]
  %v284 = vld [vmem:[%s1 + $0x7f0] sm:$0xff]
  %v285 = vld [vmem:[%s1 + $0x7f8] sm:$0xff]
  %v286 = vld [vmem:[%s1 + $0x800] sm:$0xff]
  %v287 = vld [vmem:[%s1 + $0x808] sm:$0xff]
  %v288 = vld [vmem:[%s1 + $0x810] sm:$0xff]
  %v289 = vld [vmem:[%s1 + $0x818] sm:$0xff]
  %v290 = vld [vmem:[%s1 + $0x820] sm:$0xff]
  %v291 = vld [vmem:[%s1 + $0x828] sm:$0xff]
  %v292 = vld [vmem:[%s1 + $0x830] sm:$0xff]
  %v293 = vld [vmem:[%s1 + $0x838] sm:$0xff]
  %v294 = vld [vmem:[%s1 + $0x840] sm:$0xff]
  %v295 = vld [vmem:[%s1 + $0x848] sm:$0xff]
  %v296 = vld [vmem:[%s1 + $0x850] sm:$0xff]
  %v297 = vld [vmem:[%s1 + $0x858] sm:$0xff]
  %v298 = vld [vmem:[%s1 + $0x860] sm:$0xff]
  %v299 = vld [vmem:[%s1 + $0x868] sm:$0xff]
  %v300 = vld [vmem:[%s1 + $0x870] sm:$0xff]
  %v301 = vld [vmem:[%s1 + $0x878] sm:$0xff]
  %v302 = vld [vmem:[%s1 + $0x880] sm:$0xff]
  %v303 = vld [vmem:[%s1 + $0x888] sm:$0xff]
  %v304 = vld [vmem:[%s1 + $0x890] sm:$0xff]
  %v305 = vld [vmem:[%s1 + $0x898] sm:$0xff]
  %v306 = vld [vmem:[%s1 + $0x8a0] sm:$0xff]
  %v307 = vld [vmem:[%s1 + $0x8a8] sm:$0xff]
  %v308 = vld [vmem:[%s1 + $0x8b0] sm:$0xff]
  %v309 = vld [vmem:[%s1 + $0x8b8] sm:$0xff]
  %v310 = vld [vmem:[%s1 + $0x8c0] sm:$0xff]
  %v311 = vld [vmem:[%s1 + $0x8c8] sm:$0xff]
  %v312 = vld [vmem:[%s1 + $0x8d0] sm:$0xff]
  %v313 = vld [vmem:[%s1 + $0x8d8] sm:$0xff]
  %v314 = vld [vmem:[%s1 + $0x8e0] sm:$0xff]
  %v315 = vld [vmem:[%s1 + $0x8e8] sm:$0xff]
  %v316 = vld [vmem:[%s1 + $0x8f0] sm:$0xff]
  %v317 = vld [vmem:[%s1 + $0x8f8] sm:$0xff]
  %v318 = vld [vmem:[%s1 + $0x900] sm:$0xff]
  %v319 = vld [vmem:[%s1 + $0x908] sm:$0xff]
  %v320 = vld [vmem:[%s1 + $0x910] sm:$0xff]
  %v321 = vld [vmem:[%s1 + $0x918] sm:$0xff]
  %v322 = vld [vmem:[%s1 + $0x920] sm:$0xff]
  %v323 = vld [vmem:[%s1 + $0x928] sm:$0xff]
  %v324 = vld [vmem:[%s1 + $0x930] sm:$0xff]
  %v325 = vld [vmem:[%s1 + $0x938] sm:$0xff]
  %v326 = vld [vmem:[%s1 + $0x940] sm:$0xff]
  %v327 = vld [vmem:[%s1 + $0x948] sm:$0xff]
  %v328 = vld [vmem:[%s1 + $0x950] sm:$0xff]
  %v329 = vld [vmem:[%s1 + $0x958] sm:$0xff]
  %v330 = vld [vmem:[%s1 + $0x960] sm:$0xff]
  %v331 = vld [vmem:[%s1 + $0x968] sm:$0xff]
  %v332 = vld [vmem:[%s1 + $0x970] sm:$0xff]
  %v333 = vld [vmem:[%s1 + $0x978] sm:$0xff]
  %v334 = vld [vmem:[%s1 + $0x980] sm:$0xff]
  %v335 = vld [vmem:[%s1 + $0x988] sm:$0xff]
  %v336 = vld [vmem:[%s1 + $0x990] sm:$0xff]
  %v337 = vld [vmem:[%s1 + $0x998] sm:$0xff]
  %v338 = vld [vmem:[%s1 + $0x9a0] sm:$0xff]
  %v339 = vld [vmem:[%s1 + $0x9a8] sm:$0xff]
  %v340 = vld [vmem:[%s1 + $0x9b0] sm:$0xff]
  %v341 = vld [vmem:[%s1 + $0x9b8] sm:$0xff]
  %v342 = vld [vmem:[%s1 + $0x9c0] sm:$0xff]
  %v343 = vld [vmem:[%s1 + $0x9c8] sm:$0xff]
  %v344 = vld [vmem:[%s1 + $0x9d0] sm:$0xff]
  %v345 = vld [vmem:[%s1 + $0x9d8] sm:$0xff]
  %v346 = vld [vmem:[%s1 + $0x9e0] sm:$0xff]
  %v347 = vld [vmem:[%s1 + $0x9e8] sm:$0xff]
  %v348 = vld [vmem:[%s1 + $0x9f0] sm:$0xff]
  %v349 = vld [vmem:[%s1 + $0x9f8] sm:$0xff]
  %v350 = vld [vmem:[%s1 + $0xa00] sm:$0xff]
  %v351 = vld [vmem:[%s1 + $0xa08] sm:$0xff]
  %v352 = vld [vmem:[%s1 + $0xa10] sm:$0xff]
  %v353 = vld [vmem:[%s1 + $0xa18] sm:$0xff]
  %v354 = vld [vmem:[%s1 + $0xa20] sm:$0xff]
  %v355 = vld [vmem:[%s1 + $0xa28] sm:$0xff]
  %v356 = vld [vmem:[%s1 + $0xa30] sm:$0xff]
  %v357 = vld [vmem:[%s1 + $0xa38] sm:$0xff]
  %v358 = vld [vmem:[%s1 + $0xa40] sm:$0xff]
  %v359 = vld [vmem:[%s1 + $0xa48] sm:$0xff]
  %v360 = vld [vmem:[%s1 + $0xa50] sm:$0xff]
  %v361 = vld [vmem:[%s1 + $0xa58] sm:$0xff]
  %v362 = vld [vmem:[%s1 + $0xa60] sm:$0xff]
  %v363 = vld [vmem:[%s1 + $0xa68] sm:$0xff]
  %v364 = vld [vmem:[%s1 + $0xa70] sm:$0xff]
  %v365 = vld [vmem:[%s1 + $0xa78] sm:$0xff]
  %v366 = vld [vmem:[%s1 + $0xa80] sm:$0xff]
  %v367 = vld [vmem:[%s1 + $0xa88] sm:$0xff]
  %v368 = vld [vmem:[%s1 + $0xa90] sm:$0xff]
  %v369 = vld [vmem:[%s1 + $0xa98] sm:$0xff]
  %v370 = vld [vmem:[%s1 + $0xaa0] sm:$0xff]
  %v371 = vld [vmem:[%s1 + $0xaa8] sm:$0xff]
  %v372 = vld [vmem:[%s1 + $0xab0] sm:$0xff]
  %v373 = vld [vmem:[%s1 + $0xab8] sm:$0xff]
  %v374 = vld [vmem:[%s1 + $0xac0] sm:$0xff]
  %v375 = vld [vmem:[%s1 + $0xac8] sm:$0xff]
  %v376 = vld [vmem:[%s1 + $0xad0] sm:$0xff]
  %v377 = vld [vmem:[%s1 + $0xad8] sm:$0xff]
  %v378 = vld [vmem:[%s1 + $0xae0] sm:$0xff]
  %v379 = vld [vmem:[%s1 + $0xae8] sm:$0xff]
  %v380 = vld [vmem:[%s1 + $0xaf0] sm:$0xff]
  %v381 = vld [vmem:[%s1 + $0xaf8] sm:$0xff]
  %v382 = vld [vmem:[%s1 + $0xb00] sm:$0xff]
  %v383 = vld [vmem:[%s1 + $0xb08] sm:$0xff]
  %v384 = vld [vmem:[%s1 + $0xb10] sm:$0xff]
  %v385 = vld [vmem:[%s1 + $0xb18] sm:$0xff]
  %v386 = vld [vmem:[%s1 + $0xb20] sm:$0xff]
  %v387 = vld [vmem:[%s1 + $0xb28] sm:$0xff]
  %v388 = vld [vmem:[%s1 + $0xb30] sm:$0xff]
  %v389 = vld [vmem:[%s1 + $0xb38] sm:$0xff]
  %v390 = vld [vmem:[%s1 + $0xb40] sm:$0xff]
  %v391 = vld [vmem:[%s1 + $0xb48] sm:$0xff]
  %v392 = vld [vmem:[%s1 + $0xb50] sm:$0xff]
  %v393 = vld [vmem:[%s1 + $0xb58] sm:$0xff]
  %v394 = vld [vmem:[%s1 + $0xb60] sm:$0xff]
  %v395 = vld [vmem:[%s1 + $0xb68] sm:$0xff]
  %v396 = vld [vmem:[%s1 + $0xb70] sm:$0xff]
  %v397 = vld [vmem:[%s1 + $0xb78] sm:$0xff]
  %v398 = vld [vmem:[%s1 + $0xb80] sm:$0xff]
  %v399 = vld [vmem:[%s1 + $0xb88] sm:$0xff]
  %v400 = vld [vmem:[%s1 + $0xb90] sm:$0xff]
  %v401 = vld [vmem:[%s1 + $0xb98] sm:$0xff]
  %v402 = vld [vmem:[%s1 + $0xba0] sm:$0xff]
  %v403 = vld [vmem:[%s1 + $0xba8] sm:$0xff]
  %v404 = vld [vmem:[%s1 + $0xbb0] sm:$0xff]
  %v405 = vld [vmem:[%s1 + $0xbb8] sm:$0xff]
  %v406 = vld [vmem:[%s1 + $0xbc0] sm:$0xff]
  %v407 = vld [vmem:[%s1 + $0xbc8] sm:$0xff]
  %v408 = vld [vmem:[%s1 + $0xbd0] sm:$0xff]
  %v409 = vld [vmem:[%s1 + $0xbd8] sm:$0xff]
  %v410 = vld [vmem:[%s1 + $0xbe0] sm:$0xff]
  %v411 = vld [vmem:[%s1 + $0xbe8] sm:$0xff]
  %v412 = vld [vmem:[%s1 + $0xbf0] sm:$0xff]
  %v413 = vld [vmem:[%s1 + $0xbf8] sm:$0xff]
  %v414 = vld [vmem:[%s1 + $0xc00] sm:$0xff]
  %v415 = vld [vmem:[%s1 + $0xc08] sm:$0xff]
  %v416 = vld [vmem:[%s1 + $0xc10] sm:$0xff]
  %v417 = vld [vmem:[%s1 + $0xc18] sm:$0xff]
  %v418 = vld [vmem:[%s1 + $0xc20] sm:$0xff]
  %v419 = vld [vmem:[%s1 + $0xc28] sm:$0xff]
  %v420 = vld [vmem:[%s1 + $0xc30] sm:$0xff]
  %v421 = vld [vmem:[%s1 + $0xc38] sm:$0xff]
  %v422 = vld [vmem:[%s1 + $0xc40] sm:$0xff]
  %v423 = vld [vmem:[%s1 + $0xc48] sm:$0xff]
  %v424 = vld [vmem:[%s1 + $0xc50] sm:$0xff]
  %v425 = vld [vmem:[%s1 + $0xc58] sm:$0xff]
  %v426 = vld [vmem:[%s1 + $0xc60] sm:$0xff]
  %v427 = vld [vmem:[%s1 + $0xc68] sm:$0xff]
  %v428 = vld [vmem:[%s1 + $0xc70] sm:$0xff]
  %v429 = vld [vmem:[%s1 + $0xc78] sm:$0xff]
  %v430 = vld [vmem:[%s1 + $0xc80] sm:$0xff]
  %v431 = vld [vmem:[%s1 + $0xc88] sm:$0xff]
  %v432 = vld [vmem:[%s1 + $0xc90] sm:$0xff]
  %v433 = vld [vmem:[%s1 + $0xc98] sm:$0xff]
  %v434 = vld [vmem:[%s1 + $0xca0] sm:$0xff]
  %v435 = vld [vmem:[%s1 + $0xca8] sm:$0xff]
  %v436 = vld [vmem:[%s1 + $0xcb0] sm:$0xff]
  %v437 = vld [vmem:[%s1 + $0xcb8] sm:$0xff]
  %v438 = vld [vmem:[%s1 + $0xcc0] sm:$0xff]
  %v439 = vld [vmem:[%s1 + $0xcc8] sm:$0xff]
  %v440 = vld [vmem:[%s1 + $0xcd0] sm:$0xff]
  %v441 = vld [vmem:[%s1 + $0xcd8] sm:$0xff]
  %v442 = vld [vmem:[%s1 + $0xce0] sm:$0xff]
  %v443 = vld [vmem:[%s1 + $0xce8] sm:$0xff]
  %v444 = vld [vmem:[%s1 + $0xcf0] sm:$0xff]
  %v445 = vld [vmem:[%s1 + $0xcf8] sm:$0xff]
  %v446 = vld [vmem:[%s2] sm:$0xf]
  %v448 = vlaneseq
  %v449 = vshrl.u32 %v448, 7
  %v450 = vsub.s32 0, %v449
  %v451 = vrot.slane %v446, %v450
  %v452 = vlaneseq
  %v453 = vshrl.u32 %v452, 7
  %v454 = vsub.s32 1, %v453
  %v455 = vrot.slane %v446, %v454
  %v456 = vlaneseq
  %v457 = vshrl.u32 %v456, 7
  %v458 = vsub.s32 2, %v457
  %v459 = vrot.slane %v446, %v458
  %v460 = vlaneseq
  %v461 = vshrl.u32 %v460, 7
  %v462 = vsub.s32 3, %v461
  %v463 = vrot.slane %v446, %v462
  %v475 = vunpack.c.l.b16 %v23
  %v476 = vunpack.c.h.b16 %v23
  %v477 = vunpack.c.l.b16 %v24
  %v478 = vunpack.c.h.b16 %v24
  %v479 = vunpack.c.l.b16 %v25
  %v480 = vunpack.c.h.b16 %v25
  %v481 = vunpack.c.l.b16 %v26
  %v482 = vunpack.c.h.b16 %v26
  %v483 = vunpack.c.l.b16 %v27
  %v484 = vunpack.c.h.b16 %v27
  %v485 = vunpack.c.l.b16 %v28
  %v486 = vunpack.c.h.b16 %v28
  %v487 = vunpack.c.l.b16 %v29
  %v488 = vpack.c.b16 %v475, %v475
  %v489 = vpack.c.b16 %v476, %v476
  %v490 = vpack.c.b16 %v477, %v477
  %v491 = vpack.c.b16 %v478, %v478
  %v492 = vpack.c.b16 %v479, %v479
  %v493 = vpack.c.b16 %v480, %v480
  %v494 = vpack.c.b16 %v481, %v481
  %v495 = vpack.c.b16 %v482, %v482
  %v496 = vpack.c.b16 %v483, %v483
  %v497 = vpack.c.b16 %v484, %v484
  %v498 = vpack.c.b16 %v485, %v485
  %v499 = vpack.c.b16 %v486, %v486
  %v500 = vpack.c.b16 %v487, %v487
  %v930 = vunpack.c.l.b16 %v30
  %v931 = vunpack.c.h.b16 %v30
  %v932 = vunpack.c.l.b16 %v31
  %v933 = vunpack.c.h.b16 %v31
  %v934 = vunpack.c.l.b16 %v32
  %v935 = vunpack.c.h.b16 %v32
  %v936 = vunpack.c.l.b16 %v33
  %v937 = vunpack.c.h.b16 %v33
  %v938 = vunpack.c.l.b16 %v34
  %v939 = vunpack.c.h.b16 %v34
  %v940 = vunpack.c.l.b16 %v35
  %v941 = vunpack.c.h.b16 %v35
  %v942 = vunpack.c.l.b16 %v36
  %v943 = vunpack.c.h.b16 %v36
  %v944 = vunpack.c.l.b16 %v37
  %v945 = vunpack.c.h.b16 %v37
  %v946 = vunpack.c.l.b16 %v38
  %v947 = vunpack.c.h.b16 %v38
  %v948 = vunpack.c.l.b16 %v39
  %v949 = vunpack.c.h.b16 %v39
  %v950 = vunpack.c.l.b16 %v40
  %v951 = vunpack.c.h.b16 %v40
  %v952 = vunpack.c.l.b16 %v41
  %v953 = vunpack.c.h.b16 %v41
  %v954 = vunpack.c.l.b16 %v42
  %v955 = vunpack.c.h.b16 %v42
  %v956 = vunpack.c.l.b16 %v43
  %v957 = vunpack.c.h.b16 %v43
  %v958 = vunpack.c.l.b16 %v44
  %v959 = vunpack.c.h.b16 %v44
  %v960 = vunpack.c.l.b16 %v45
  %v961 = vunpack.c.h.b16 %v45
  %v962 = vunpack.c.l.b16 %v46
  %v963 = vunpack.c.h.b16 %v46
  %v964 = vunpack.c.l.b16 %v47
  %v965 = vunpack.c.h.b16 %v47
  %v966 = vunpack.c.l.b16 %v48
  %v967 = vunpack.c.h.b16 %v48
  %v968 = vunpack.c.l.b16 %v49
  %v969 = vunpack.c.h.b16 %v49
  %v970 = vunpack.c.l.b16 %v50
  %v971 = vunpack.c.h.b16 %v50
  %v972 = vunpack.c.l.b16 %v51
  %v973 = vunpack.c.h.b16 %v51
  %v974 = vunpack.c.l.b16 %v52
  %v975 = vunpack.c.h.b16 %v52
  %v976 = vunpack.c.l.b16 %v53
  %v977 = vunpack.c.h.b16 %v53
  %v978 = vunpack.c.l.b16 %v54
  %v979 = vunpack.c.h.b16 %v54
  %v980 = vunpack.c.l.b16 %v55
  %v981 = vunpack.c.h.b16 %v55
  %v982 = vunpack.c.l.b16 %v56
  %v983 = vunpack.c.h.b16 %v56
  %v984 = vunpack.c.l.b16 %v57
  %v985 = vunpack.c.h.b16 %v57
  %v986 = vunpack.c.l.b16 %v58
  %v987 = vunpack.c.h.b16 %v58
  %v988 = vunpack.c.l.b16 %v59
  %v989 = vunpack.c.h.b16 %v59
  %v990 = vunpack.c.l.b16 %v60
  %v991 = vunpack.c.h.b16 %v60
  %v992 = vunpack.c.l.b16 %v61
  %v993 = vunpack.c.h.b16 %v61
  %v994 = vunpack.c.l.b16 %v62
  %v995 = vunpack.c.h.b16 %v62
  %v996 = vunpack.c.l.b16 %v63
  %v997 = vunpack.c.h.b16 %v63
  %v998 = vunpack.c.l.b16 %v64
  %v999 = vunpack.c.h.b16 %v64
  %v1000 = vunpack.c.l.b16 %v65
  %v1001 = vunpack.c.h.b16 %v65
  %v1002 = vunpack.c.l.b16 %v66
  %v1003 = vunpack.c.h.b16 %v66
  %v1004 = vunpack.c.l.b16 %v67
  %v1005 = vunpack.c.h.b16 %v67
  %v1006 = vunpack.c.l.b16 %v68
  %v1007 = vunpack.c.h.b16 %v68
  %v1008 = vunpack.c.l.b16 %v69
  %v1009 = vunpack.c.h.b16 %v69
  %v1010 = vunpack.c.l.b16 %v70
  %v1011 = vunpack.c.h.b16 %v70
  %v1012 = vunpack.c.l.b16 %v71
  %v1013 = vunpack.c.h.b16 %v71
  %v1014 = vunpack.c.l.b16 %v72
  %v1015 = vunpack.c.h.b16 %v72
  %v1016 = vunpack.c.l.b16 %v73
  %v1017 = vunpack.c.h.b16 %v73
  %v1018 = vunpack.c.l.b16 %v74
  %v1019 = vunpack.c.h.b16 %v74
  %v1020 = vunpack.c.l.b16 %v75
  %v1021 = vunpack.c.h.b16 %v75
  %v1022 = vunpack.c.l.b16 %v76
  %v1023 = vunpack.c.h.b16 %v76
  %v1024 = vunpack.c.l.b16 %v77
  %v1025 = vunpack.c.h.b16 %v77
  %v1026 = vunpack.c.l.b16 %v78
  %v1027 = vunpack.c.h.b16 %v78
  %v1028 = vunpack.c.l.b16 %v79
  %v1029 = vunpack.c.h.b16 %v79
  %v1030 = vunpack.c.l.b16 %v80
  %v1031 = vunpack.c.h.b16 %v80
  %v1032 = vunpack.c.l.b16 %v81
  %v1033 = vunpack.c.h.b16 %v81
  %v1034 = vunpack.c.l.b16 %v82
  %v1035 = vunpack.c.h.b16 %v82
  %v1036 = vunpack.c.l.b16 %v83
  %v1037 = vunpack.c.h.b16 %v83
  %v1038 = vunpack.c.l.b16 %v84
  %v1039 = vunpack.c.h.b16 %v84
  %v1040 = vunpack.c.l.b16 %v85
  %v1041 = vunpack.c.h.b16 %v85
  %v1042 = vunpack.c.l.b16 %v86
  %v1043 = vunpack.c.h.b16 %v86
  %v1044 = vunpack.c.l.b16 %v87
  %v1045 = vunpack.c.h.b16 %v87
  %v1046 = vunpack.c.l.b16 %v88
  %v1047 = vunpack.c.h.b16 %v88
  %v1048 = vunpack.c.l.b16 %v89
  %v1049 = vunpack.c.h.b16 %v89
  %v1050 = vunpack.c.l.b16 %v90
  %v1051 = vunpack.c.h.b16 %v90
  %v1052 = vunpack.c.l.b16 %v91
  %v1053 = vunpack.c.h.b16 %v91
  %v1054 = vunpack.c.l.b16 %v92
  %v1055 = vunpack.c.h.b16 %v92
  %v1056 = vunpack.c.l.b16 %v93
  %v1057 = vunpack.c.h.b16 %v93
  %v1058 = vunpack.c.l.b16 %v94
  %v1059 = vunpack.c.h.b16 %v94
  %v1060 = vunpack.c.l.b16 %v95
  %v1061 = vunpack.c.h.b16 %v95
  %v1062 = vunpack.c.l.b16 %v96
  %v1063 = vunpack.c.h.b16 %v96
  %v1064 = vunpack.c.l.b16 %v97
  %v1065 = vunpack.c.h.b16 %v97
  %v1066 = vunpack.c.l.b16 %v98
  %v1067 = vunpack.c.h.b16 %v98
  %v1068 = vunpack.c.l.b16 %v99
  %v1069 = vunpack.c.h.b16 %v99
  %v1070 = vunpack.c.l.b16 %v100
  %v1071 = vunpack.c.h.b16 %v100
  %v1072 = vunpack.c.l.b16 %v101
  %v1073 = vunpack.c.h.b16 %v101
  %v1074 = vunpack.c.l.b16 %v102
  %v1075 = vunpack.c.h.b16 %v102
  %v1076 = vunpack.c.l.b16 %v103
  %v1077 = vunpack.c.h.b16 %v103
  %v1078 = vunpack.c.l.b16 %v104
  %v1079 = vunpack.c.h.b16 %v104
  %v1080 = vunpack.c.l.b16 %v105
  %v1081 = vunpack.c.h.b16 %v105
  %v1082 = vunpack.c.l.b16 %v106
  %v1083 = vunpack.c.h.b16 %v106
  %v1084 = vunpack.c.l.b16 %v107
  %v1085 = vunpack.c.h.b16 %v107
  %v1086 = vunpack.c.l.b16 %v108
  %v1087 = vunpack.c.h.b16 %v108
  %v1088 = vunpack.c.l.b16 %v109
  %v1089 = vunpack.c.h.b16 %v109
  %v1090 = vunpack.c.l.b16 %v110
  %v1091 = vunpack.c.h.b16 %v110
  %v1092 = vunpack.c.l.b16 %v111
  %v1093 = vunpack.c.h.b16 %v111
  %v1094 = vunpack.c.l.b16 %v112
  %v1095 = vunpack.c.h.b16 %v112
  %v1096 = vunpack.c.l.b16 %v113
  %v1097 = vunpack.c.h.b16 %v113
  %v1098 = vunpack.c.l.b16 %v114
  %v1099 = vunpack.c.h.b16 %v114
  %v1100 = vunpack.c.l.b16 %v115
  %v1101 = vunpack.c.h.b16 %v115
  %v1102 = vunpack.c.l.b16 %v116
  %v1103 = vunpack.c.h.b16 %v116
  %v1104 = vunpack.c.l.b16 %v117
  %v1105 = vunpack.c.h.b16 %v117
  %v1106 = vunpack.c.l.b16 %v118
  %v1107 = vunpack.c.h.b16 %v118
  %v1108 = vunpack.c.l.b16 %v119
  %v1109 = vunpack.c.h.b16 %v119
  %v1110 = vunpack.c.l.b16 %v120
  %v1111 = vunpack.c.h.b16 %v120
  %v1112 = vunpack.c.l.b16 %v121
  %v1113 = vunpack.c.h.b16 %v121
  %v1114 = vunpack.c.l.b16 %v122
  %v1115 = vunpack.c.h.b16 %v122
  %v1116 = vunpack.c.l.b16 %v123
  %v1117 = vunpack.c.h.b16 %v123
  %v1118 = vunpack.c.l.b16 %v124
  %v1119 = vunpack.c.h.b16 %v124
  %v1120 = vunpack.c.l.b16 %v125
  %v1121 = vunpack.c.h.b16 %v125
  %v1122 = vunpack.c.l.b16 %v126
  %v1123 = vunpack.c.h.b16 %v126
  %v1124 = vunpack.c.l.b16 %v127
  %v1125 = vunpack.c.h.b16 %v127
  %v1126 = vunpack.c.l.b16 %v128
  %v1127 = vunpack.c.h.b16 %v128
  %v1128 = vunpack.c.l.b16 %v129
  %v1129 = vunpack.c.h.b16 %v129
  %v1130 = vunpack.c.l.b16 %v130
  %v1131 = vunpack.c.h.b16 %v130
  %v1132 = vunpack.c.l.b16 %v131
  %v1133 = vunpack.c.h.b16 %v131
  %v1134 = vunpack.c.l.b16 %v132
  %v1135 = vunpack.c.h.b16 %v132
  %v1136 = vunpack.c.l.b16 %v133
  %v1137 = vunpack.c.h.b16 %v133
  %v1138 = vunpack.c.l.b16 %v134
  %v1139 = vunpack.c.h.b16 %v134
  %v1140 = vunpack.c.l.b16 %v135
  %v1141 = vunpack.c.h.b16 %v135
  %v1142 = vunpack.c.l.b16 %v136
  %v1143 = vunpack.c.h.b16 %v136
  %v1144 = vunpack.c.l.b16 %v137
  %v1145 = vunpack.c.h.b16 %v137
  %v1146 = vunpack.c.l.b16 %v138
  %v1147 = vunpack.c.h.b16 %v138
  %v1148 = vunpack.c.l.b16 %v139
  %v1149 = vunpack.c.h.b16 %v139
  %v1150 = vunpack.c.l.b16 %v140
  %v1151 = vunpack.c.h.b16 %v140
  %v1152 = vunpack.c.l.b16 %v141
  %v1153 = vunpack.c.h.b16 %v141
  %v1154 = vunpack.c.l.b16 %v142
  %v1155 = vunpack.c.h.b16 %v142
  %v1156 = vunpack.c.l.b16 %v143
  %v1157 = vunpack.c.h.b16 %v143
  %v1158 = vunpack.c.l.b16 %v144
  %v1159 = vunpack.c.h.b16 %v144
  %v1160 = vunpack.c.l.b16 %v145
  %v1161 = vunpack.c.h.b16 %v145
  %v1162 = vunpack.c.l.b16 %v146
  %v1163 = vunpack.c.h.b16 %v146
  %v1164 = vunpack.c.l.b16 %v147
  %v1165 = vunpack.c.h.b16 %v147
  %v1166 = vunpack.c.l.b16 %v148
  %v1167 = vunpack.c.h.b16 %v148
  %v1168 = vunpack.c.l.b16 %v149
  %v1169 = vunpack.c.h.b16 %v149
  %v1170 = vunpack.c.l.b16 %v150
  %v1171 = vunpack.c.h.b16 %v150
  %v1172 = vunpack.c.l.b16 %v151
  %v1173 = vunpack.c.h.b16 %v151
  %v1174 = vunpack.c.l.b16 %v152
  %v1175 = vunpack.c.h.b16 %v152
  %v1176 = vunpack.c.l.b16 %v153
  %v1177 = vunpack.c.h.b16 %v153
  %v1178 = vunpack.c.l.b16 %v154
  %v1179 = vunpack.c.h.b16 %v154
  %v1180 = vunpack.c.l.b16 %v155
  %v1181 = vunpack.c.h.b16 %v155
  %v1182 = vunpack.c.l.b16 %v156
  %v1183 = vunpack.c.h.b16 %v156
  %v1184 = vunpack.c.l.b16 %v157
  %v1185 = vunpack.c.h.b16 %v157
  %v1186 = vunpack.c.l.b16 %v158
  %v1187 = vunpack.c.h.b16 %v158
  %v1188 = vunpack.c.l.b16 %v159
  %v1189 = vunpack.c.h.b16 %v159
  %v1190 = vunpack.c.l.b16 %v160
  %v1191 = vunpack.c.h.b16 %v160
  %v1192 = vunpack.c.l.b16 %v161
  %v1193 = vunpack.c.h.b16 %v161
  %v1194 = vunpack.c.l.b16 %v162
  %v1195 = vunpack.c.h.b16 %v162
  %v1196 = vunpack.c.l.b16 %v163
  %v1197 = vunpack.c.h.b16 %v163
  %v1198 = vunpack.c.l.b16 %v164
  %v1199 = vunpack.c.h.b16 %v164
  %v1200 = vunpack.c.l.b16 %v165
  %v1201 = vunpack.c.h.b16 %v165
  %v1202 = vunpack.c.l.b16 %v166
  %v1203 = vunpack.c.h.b16 %v166
  %v1204 = vunpack.c.l.b16 %v167
  %v1205 = vunpack.c.h.b16 %v167
  %v1206 = vunpack.c.l.b16 %v168
  %v1207 = vunpack.c.h.b16 %v168
  %v1208 = vunpack.c.l.b16 %v169
  %v1209 = vunpack.c.h.b16 %v169
  %v1210 = vunpack.c.l.b16 %v170
  %v1211 = vunpack.c.h.b16 %v170
  %v1212 = vunpack.c.l.b16 %v171
  %v1213 = vunpack.c.h.b16 %v171
  %v1214 = vunpack.c.l.b16 %v172
  %v1215 = vunpack.c.h.b16 %v172
  %v1216 = vunpack.c.l.b16 %v173
  %v1217 = vunpack.c.h.b16 %v173
  %v1218 = vunpack.c.l.b16 %v174
  %v1219 = vunpack.c.h.b16 %v174
  %v1220 = vunpack.c.l.b16 %v175
  %v1221 = vunpack.c.h.b16 %v175
  %v1222 = vunpack.c.l.b16 %v176
  %v1223 = vunpack.c.h.b16 %v176
  %v1224 = vunpack.c.l.b16 %v177
  %v1225 = vunpack.c.h.b16 %v177
  %v1226 = vunpack.c.l.b16 %v178
  %v1227 = vunpack.c.h.b16 %v178
  %v1228 = vunpack.c.l.b16 %v179
  %v1229 = vunpack.c.h.b16 %v179
  %v1230 = vunpack.c.l.b16 %v180
  %v1231 = vunpack.c.h.b16 %v180
  %v1232 = vunpack.c.l.b16 %v181
  %v1233 = vunpack.c.h.b16 %v181
  %v1234 = vunpack.c.l.b16 %v182
  %v1235 = vunpack.c.h.b16 %v182
  %v1236 = vunpack.c.l.b16 %v183
  %v1237 = vunpack.c.h.b16 %v183
  %v1238 = vunpack.c.l.b16 %v184
  %v1239 = vunpack.c.h.b16 %v184
  %v1240 = vunpack.c.l.b16 %v185
  %v1241 = vunpack.c.h.b16 %v185
  %v1242 = vunpack.c.l.b16 %v186
  %v1243 = vunpack.c.h.b16 %v186
  %v1244 = vunpack.c.l.b16 %v187
  %v1245 = vunpack.c.h.b16 %v187
  %v1246 = vunpack.c.l.b16 %v188
  %v1247 = vunpack.c.h.b16 %v188
  %v1248 = vunpack.c.l.b16 %v189
  %v1249 = vunpack.c.h.b16 %v189
  %v1250 = vunpack.c.l.b16 %v190
  %v1251 = vunpack.c.h.b16 %v190
  %v1252 = vunpack.c.l.b16 %v191
  %v1253 = vunpack.c.h.b16 %v191
  %v1254 = vunpack.c.l.b16 %v192
  %v1255 = vunpack.c.h.b16 %v192
  %v1256 = vunpack.c.l.b16 %v193
  %v1257 = vunpack.c.h.b16 %v193
  %v1258 = vunpack.c.l.b16 %v194
  %v1259 = vunpack.c.h.b16 %v194
  %v1260 = vunpack.c.l.b16 %v195
  %v1261 = vunpack.c.h.b16 %v195
  %v1262 = vunpack.c.l.b16 %v196
  %v1263 = vunpack.c.h.b16 %v196
  %v1264 = vunpack.c.l.b16 %v197
  %v1265 = vunpack.c.h.b16 %v197
  %v1266 = vunpack.c.l.b16 %v198
  %v1267 = vunpack.c.h.b16 %v198
  %v1268 = vunpack.c.l.b16 %v199
  %v1269 = vunpack.c.h.b16 %v199
  %v1270 = vunpack.c.l.b16 %v200
  %v1271 = vunpack.c.h.b16 %v200
  %v1272 = vunpack.c.l.b16 %v201
  %v1273 = vunpack.c.h.b16 %v201
  %v1274 = vunpack.c.l.b16 %v202
  %v1275 = vunpack.c.h.b16 %v202
  %v1276 = vunpack.c.l.b16 %v203
  %v1277 = vunpack.c.h.b16 %v203
  %v1278 = vunpack.c.l.b16 %v204
  %v1279 = vunpack.c.h.b16 %v204
  %v1280 = vunpack.c.l.b16 %v205
  %v1281 = vunpack.c.h.b16 %v205
  %v1282 = vunpack.c.l.b16 %v206
  %v1283 = vunpack.c.h.b16 %v206
  %v1284 = vunpack.c.l.b16 %v207
  %v1285 = vunpack.c.h.b16 %v207
  %v1286 = vunpack.c.l.b16 %v208
  %v1287 = vunpack.c.h.b16 %v208
  %v1288 = vunpack.c.l.b16 %v209
  %v1289 = vunpack.c.h.b16 %v209
  %v1290 = vunpack.c.l.b16 %v210
  %v1291 = vunpack.c.h.b16 %v210
  %v1292 = vunpack.c.l.b16 %v211
  %v1293 = vunpack.c.h.b16 %v211
  %v1294 = vunpack.c.l.b16 %v212
  %v1295 = vunpack.c.h.b16 %v212
  %v1296 = vunpack.c.l.b16 %v213
  %v1297 = vunpack.c.h.b16 %v213
  %v1298 = vunpack.c.l.b16 %v214
  %v1299 = vunpack.c.h.b16 %v214
  %v1300 = vunpack.c.l.b16 %v215
  %v1301 = vunpack.c.h.b16 %v215
  %v1302 = vunpack.c.l.b16 %v216
  %v1303 = vunpack.c.h.b16 %v216
  %v1304 = vunpack.c.l.b16 %v217
  %v1305 = vunpack.c.h.b16 %v217
  %v1306 = vunpack.c.l.b16 %v218
  %v1307 = vunpack.c.h.b16 %v218
  %v1308 = vunpack.c.l.b16 %v219
  %v1309 = vunpack.c.h.b16 %v219
  %v1310 = vunpack.c.l.b16 %v220
  %v1311 = vunpack.c.h.b16 %v220
  %v1312 = vunpack.c.l.b16 %v221
  %v1313 = vunpack.c.h.b16 %v221
  %v1314 = vunpack.c.l.b16 %v222
  %v1315 = vunpack.c.h.b16 %v222
  %v1316 = vunpack.c.l.b16 %v223
  %v1317 = vunpack.c.h.b16 %v223
  %v1318 = vunpack.c.l.b16 %v224
  %v1319 = vunpack.c.h.b16 %v224
  %v1320 = vunpack.c.l.b16 %v225
  %v1321 = vunpack.c.h.b16 %v225
  %v1322 = vunpack.c.l.b16 %v226
  %v1323 = vunpack.c.h.b16 %v226
  %v1324 = vunpack.c.l.b16 %v227
  %v1325 = vunpack.c.h.b16 %v227
  %v1326 = vunpack.c.l.b16 %v228
  %v1327 = vunpack.c.h.b16 %v228
  %v1328 = vunpack.c.l.b16 %v229
  %v1329 = vunpack.c.h.b16 %v229
  %v1330 = vunpack.c.l.b16 %v230
  %v1331 = vunpack.c.h.b16 %v230
  %v1332 = vunpack.c.l.b16 %v231
  %v1333 = vunpack.c.h.b16 %v231
  %v1334 = vunpack.c.l.b16 %v232
  %v1335 = vunpack.c.h.b16 %v232
  %v1336 = vunpack.c.l.b16 %v233
  %v1337 = vunpack.c.h.b16 %v233
  %v1338 = vunpack.c.l.b16 %v234
  %v1339 = vunpack.c.h.b16 %v234
  %v1340 = vunpack.c.l.b16 %v235
  %v1341 = vunpack.c.h.b16 %v235
  %v1342 = vunpack.c.l.b16 %v236
  %v1343 = vunpack.c.h.b16 %v236
  %v1344 = vunpack.c.l.b16 %v237
  %v1345 = vunpack.c.h.b16 %v237
  %v1346 = vunpack.c.l.b16 %v238
  %v1347 = vunpack.c.h.b16 %v238
  %v1348 = vunpack.c.l.b16 %v239
  %v1349 = vunpack.c.h.b16 %v239
  %v1350 = vunpack.c.l.b16 %v240
  %v1351 = vunpack.c.h.b16 %v240
  %v1352 = vunpack.c.l.b16 %v241
  %v1353 = vunpack.c.h.b16 %v241
  %v1354 = vunpack.c.l.b16 %v242
  %v1355 = vunpack.c.h.b16 %v242
  %v1356 = vunpack.c.l.b16 %v243
  %v1357 = vunpack.c.h.b16 %v243
  %v1358 = vunpack.c.l.b16 %v244
  %v1359 = vunpack.c.h.b16 %v244
  %v1360 = vunpack.c.l.b16 %v245
  %v1361 = vunpack.c.h.b16 %v245
  %v1362 = vunpack.c.l.b16 %v246
  %v1363 = vunpack.c.h.b16 %v246
  %v1364 = vunpack.c.l.b16 %v247
  %v1365 = vunpack.c.h.b16 %v247
  %v1366 = vunpack.c.l.b16 %v248
  %v1367 = vunpack.c.h.b16 %v248
  %v1368 = vunpack.c.l.b16 %v249
  %v1369 = vunpack.c.h.b16 %v249
  %v1370 = vunpack.c.l.b16 %v250
  %v1371 = vunpack.c.h.b16 %v250
  %v1372 = vunpack.c.l.b16 %v251
  %v1373 = vunpack.c.h.b16 %v251
  %v1374 = vunpack.c.l.b16 %v252
  %v1375 = vunpack.c.h.b16 %v252
  %v1376 = vunpack.c.l.b16 %v253
  %v1377 = vunpack.c.h.b16 %v253
  %v1378 = vunpack.c.l.b16 %v254
  %v1379 = vunpack.c.h.b16 %v254
  %v1380 = vunpack.c.l.b16 %v255
  %v1381 = vunpack.c.h.b16 %v255
  %v1382 = vunpack.c.l.b16 %v256
  %v1383 = vunpack.c.h.b16 %v256
  %v1384 = vunpack.c.l.b16 %v257
  %v1385 = vunpack.c.h.b16 %v257
  %v1386 = vunpack.c.l.b16 %v258
  %v1387 = vunpack.c.h.b16 %v258
  %v1388 = vunpack.c.l.b16 %v259
  %v1389 = vunpack.c.h.b16 %v259
  %v1390 = vunpack.c.l.b16 %v260
  %v1391 = vunpack.c.h.b16 %v260
  %v1392 = vunpack.c.l.b16 %v261
  %v1393 = vunpack.c.h.b16 %v261
  %v1394 = vunpack.c.l.b16 %v262
  %v1395 = vunpack.c.h.b16 %v262
  %v1396 = vunpack.c.l.b16 %v263
  %v1397 = vunpack.c.h.b16 %v263
  %v1398 = vunpack.c.l.b16 %v264
  %v1399 = vunpack.c.h.b16 %v264
  %v1400 = vunpack.c.l.b16 %v265
  %v1401 = vunpack.c.h.b16 %v265
  %v1402 = vunpack.c.l.b16 %v266
  %v1403 = vunpack.c.h.b16 %v266
  %v1404 = vunpack.c.l.b16 %v267
  %v1405 = vunpack.c.h.b16 %v267
  %v1406 = vunpack.c.l.b16 %v268
  %v1407 = vunpack.c.h.b16 %v268
  %v1408 = vunpack.c.l.b16 %v269
  %v1409 = vunpack.c.h.b16 %v269
  %v1410 = vunpack.c.l.b16 %v270
  %v1411 = vunpack.c.h.b16 %v270
  %v1412 = vunpack.c.l.b16 %v271
  %v1413 = vunpack.c.h.b16 %v271
  %v1414 = vunpack.c.l.b16 %v272
  %v1415 = vunpack.c.h.b16 %v272
  %v1416 = vunpack.c.l.b16 %v273
  %v1417 = vunpack.c.h.b16 %v273
  %v1418 = vunpack.c.l.b16 %v274
  %v1419 = vunpack.c.h.b16 %v274
  %v1420 = vunpack.c.l.b16 %v275
  %v1421 = vunpack.c.h.b16 %v275
  %v1422 = vunpack.c.l.b16 %v276
  %v1423 = vunpack.c.h.b16 %v276
  %v1424 = vunpack.c.l.b16 %v277
  %v1425 = vunpack.c.h.b16 %v277
  %v1426 = vunpack.c.l.b16 %v278
  %v1427 = vunpack.c.h.b16 %v278
  %v1428 = vunpack.c.l.b16 %v279
  %v1429 = vunpack.c.h.b16 %v279
  %v1430 = vunpack.c.l.b16 %v280
  %v1431 = vunpack.c.h.b16 %v280
  %v1432 = vunpack.c.l.b16 %v281
  %v1433 = vunpack.c.h.b16 %v281
  %v1434 = vunpack.c.l.b16 %v282
  %v1435 = vunpack.c.h.b16 %v282
  %v1436 = vunpack.c.l.b16 %v283
  %v1437 = vunpack.c.h.b16 %v283
  %v1438 = vunpack.c.l.b16 %v284
  %v1439 = vunpack.c.h.b16 %v284
  %v1440 = vunpack.c.l.b16 %v285
  %v1441 = vunpack.c.h.b16 %v285
  %v1442 = vunpack.c.l.b16 %v286
  %v1443 = vunpack.c.h.b16 %v286
  %v1444 = vunpack.c.l.b16 %v287
  %v1445 = vunpack.c.h.b16 %v287
  %v1446 = vunpack.c.l.b16 %v288
  %v1447 = vunpack.c.h.b16 %v288
  %v1448 = vunpack.c.l.b16 %v289
  %v1449 = vunpack.c.h.b16 %v289
  %v1450 = vunpack.c.l.b16 %v290
  %v1451 = vunpack.c.h.b16 %v290
  %v1452 = vunpack.c.l.b16 %v291
  %v1453 = vunpack.c.h.b16 %v291
  %v1454 = vunpack.c.l.b16 %v292
  %v1455 = vunpack.c.h.b16 %v292
  %v1456 = vunpack.c.l.b16 %v293
  %v1457 = vunpack.c.h.b16 %v293
  %v1458 = vunpack.c.l.b16 %v294
  %v1459 = vunpack.c.h.b16 %v294
  %v1460 = vunpack.c.l.b16 %v295
  %v1461 = vunpack.c.h.b16 %v295
  %v1462 = vunpack.c.l.b16 %v296
  %v1463 = vunpack.c.h.b16 %v296
  %v1464 = vunpack.c.l.b16 %v297
  %v1465 = vunpack.c.h.b16 %v297
  %v1466 = vunpack.c.l.b16 %v298
  %v1467 = vunpack.c.h.b16 %v298
  %v1468 = vunpack.c.l.b16 %v299
  %v1469 = vunpack.c.h.b16 %v299
  %v1470 = vunpack.c.l.b16 %v300
  %v1471 = vunpack.c.h.b16 %v300
  %v1472 = vunpack.c.l.b16 %v301
  %v1473 = vunpack.c.h.b16 %v301
  %v1474 = vunpack.c.l.b16 %v302
  %v1475 = vunpack.c.h.b16 %v302
  %v1476 = vunpack.c.l.b16 %v303
  %v1477 = vunpack.c.h.b16 %v303
  %v1478 = vunpack.c.l.b16 %v304
  %v1479 = vunpack.c.h.b16 %v304
  %v1480 = vunpack.c.l.b16 %v305
  %v1481 = vunpack.c.h.b16 %v305
  %v1482 = vunpack.c.l.b16 %v306
  %v1483 = vunpack.c.h.b16 %v306
  %v1484 = vunpack.c.l.b16 %v307
  %v1485 = vunpack.c.h.b16 %v307
  %v1486 = vunpack.c.l.b16 %v308
  %v1487 = vunpack.c.h.b16 %v308
  %v1488 = vunpack.c.l.b16 %v309
  %v1489 = vunpack.c.h.b16 %v309
  %v1490 = vunpack.c.l.b16 %v310
  %v1491 = vunpack.c.h.b16 %v310
  %v1492 = vunpack.c.l.b16 %v311
  %v1493 = vunpack.c.h.b16 %v311
  %v1494 = vunpack.c.l.b16 %v312
  %v1495 = vunpack.c.h.b16 %v312
  %v1496 = vunpack.c.l.b16 %v313
  %v1497 = vunpack.c.h.b16 %v313
  %v1498 = vunpack.c.l.b16 %v314
  %v1499 = vunpack.c.h.b16 %v314
  %v1500 = vunpack.c.l.b16 %v315
  %v1501 = vunpack.c.h.b16 %v315
  %v1502 = vunpack.c.l.b16 %v316
  %v1503 = vunpack.c.h.b16 %v316
  %v1504 = vunpack.c.l.b16 %v317
  %v1505 = vunpack.c.h.b16 %v317
  %v1506 = vunpack.c.l.b16 %v318
  %v1507 = vunpack.c.h.b16 %v318
  %v1508 = vunpack.c.l.b16 %v319
  %v1509 = vunpack.c.h.b16 %v319
  %v1510 = vunpack.c.l.b16 %v320
  %v1511 = vunpack.c.h.b16 %v320
  %v1512 = vunpack.c.l.b16 %v321
  %v1513 = vunpack.c.h.b16 %v321
  %v1514 = vunpack.c.l.b16 %v322
  %v1515 = vunpack.c.h.b16 %v322
  %v1516 = vunpack.c.l.b16 %v323
  %v1517 = vunpack.c.h.b16 %v323
  %v1518 = vunpack.c.l.b16 %v324
  %v1519 = vunpack.c.h.b16 %v324
  %v1520 = vunpack.c.l.b16 %v325
  %v1521 = vunpack.c.h.b16 %v325
  %v1522 = vunpack.c.l.b16 %v326
  %v1523 = vunpack.c.h.b16 %v326
  %v1524 = vunpack.c.l.b16 %v327
  %v1525 = vunpack.c.h.b16 %v327
  %v1526 = vunpack.c.l.b16 %v328
  %v1527 = vunpack.c.h.b16 %v328
  %v1528 = vunpack.c.l.b16 %v329
  %v1529 = vunpack.c.h.b16 %v329
  %v1530 = vunpack.c.l.b16 %v330
  %v1531 = vunpack.c.h.b16 %v330
  %v1532 = vunpack.c.l.b16 %v331
  %v1533 = vunpack.c.h.b16 %v331
  %v1534 = vunpack.c.l.b16 %v332
  %v1535 = vunpack.c.h.b16 %v332
  %v1536 = vunpack.c.l.b16 %v333
  %v1537 = vunpack.c.h.b16 %v333
  %v1538 = vunpack.c.l.b16 %v334
  %v1539 = vunpack.c.h.b16 %v334
  %v1540 = vunpack.c.l.b16 %v335
  %v1541 = vunpack.c.h.b16 %v335
  %v1542 = vunpack.c.l.b16 %v336
  %v1543 = vunpack.c.h.b16 %v336
  %v1544 = vunpack.c.l.b16 %v337
  %v1545 = vunpack.c.h.b16 %v337
  %v1546 = vunpack.c.l.b16 %v338
  %v1547 = vunpack.c.h.b16 %v338
  %v1548 = vunpack.c.l.b16 %v339
  %v1549 = vunpack.c.h.b16 %v339
  %v1550 = vunpack.c.l.b16 %v340
  %v1551 = vunpack.c.h.b16 %v340
  %v1552 = vunpack.c.l.b16 %v341
  %v1553 = vunpack.c.h.b16 %v341
  %v1554 = vunpack.c.l.b16 %v342
  %v1555 = vunpack.c.h.b16 %v342
  %v1556 = vunpack.c.l.b16 %v343
  %v1557 = vunpack.c.h.b16 %v343
  %v1558 = vunpack.c.l.b16 %v344
  %v1559 = vunpack.c.h.b16 %v344
  %v1560 = vunpack.c.l.b16 %v345
  %v1561 = vunpack.c.h.b16 %v345
  %v1562 = vunpack.c.l.b16 %v346
  %v1563 = vunpack.c.h.b16 %v346
  %v1564 = vunpack.c.l.b16 %v347
  %v1565 = vunpack.c.h.b16 %v347
  %v1566 = vunpack.c.l.b16 %v348
  %v1567 = vunpack.c.h.b16 %v348
  %v1568 = vunpack.c.l.b16 %v349
  %v1569 = vunpack.c.h.b16 %v349
  %v1570 = vunpack.c.l.b16 %v350
  %v1571 = vunpack.c.h.b16 %v350
  %v1572 = vunpack.c.l.b16 %v351
  %v1573 = vunpack.c.h.b16 %v351
  %v1574 = vunpack.c.l.b16 %v352
  %v1575 = vunpack.c.h.b16 %v352
  %v1576 = vunpack.c.l.b16 %v353
  %v1577 = vunpack.c.h.b16 %v353
  %v1578 = vunpack.c.l.b16 %v354
  %v1579 = vunpack.c.h.b16 %v354
  %v1580 = vunpack.c.l.b16 %v355
  %v1581 = vunpack.c.h.b16 %v355
  %v1582 = vunpack.c.l.b16 %v356
  %v1583 = vunpack.c.h.b16 %v356
  %v1584 = vunpack.c.l.b16 %v357
  %v1585 = vunpack.c.h.b16 %v357
  %v1586 = vunpack.c.l.b16 %v358
  %v1587 = vunpack.c.h.b16 %v358
  %v1588 = vunpack.c.l.b16 %v359
  %v1589 = vunpack.c.h.b16 %v359
  %v1590 = vunpack.c.l.b16 %v360
  %v1591 = vunpack.c.h.b16 %v360
  %v1592 = vunpack.c.l.b16 %v361
  %v1593 = vunpack.c.h.b16 %v361
  %v1594 = vunpack.c.l.b16 %v362
  %v1595 = vunpack.c.h.b16 %v362
  %v1596 = vunpack.c.l.b16 %v363
  %v1597 = vunpack.c.h.b16 %v363
  %v1598 = vunpack.c.l.b16 %v364
  %v1599 = vunpack.c.h.b16 %v364
  %v1600 = vunpack.c.l.b16 %v365
  %v1601 = vunpack.c.h.b16 %v365
  %v1602 = vunpack.c.l.b16 %v366
  %v1603 = vunpack.c.h.b16 %v366
  %v1604 = vunpack.c.l.b16 %v367
  %v1605 = vunpack.c.h.b16 %v367
  %v1606 = vunpack.c.l.b16 %v368
  %v1607 = vunpack.c.h.b16 %v368
  %v1608 = vunpack.c.l.b16 %v369
  %v1609 = vunpack.c.h.b16 %v369
  %v1610 = vunpack.c.l.b16 %v370
  %v1611 = vunpack.c.h.b16 %v370
  %v1612 = vunpack.c.l.b16 %v371
  %v1613 = vunpack.c.h.b16 %v371
  %v1614 = vunpack.c.l.b16 %v372
  %v1615 = vunpack.c.h.b16 %v372
  %v1616 = vunpack.c.l.b16 %v373
  %v1617 = vunpack.c.h.b16 %v373
  %v1618 = vunpack.c.l.b16 %v374
  %v1619 = vunpack.c.h.b16 %v374
  %v1620 = vunpack.c.l.b16 %v375
  %v1621 = vunpack.c.h.b16 %v375
  %v1622 = vunpack.c.l.b16 %v376
  %v1623 = vunpack.c.h.b16 %v376
  %v1624 = vunpack.c.l.b16 %v377
  %v1625 = vunpack.c.h.b16 %v377
  %v1626 = vunpack.c.l.b16 %v378
  %v1627 = vunpack.c.h.b16 %v378
  %v1628 = vunpack.c.l.b16 %v379
  %v1629 = vunpack.c.h.b16 %v379
  %v1630 = vunpack.c.l.b16 %v380
  %v1631 = vunpack.c.h.b16 %v380
  %v1632 = vunpack.c.l.b16 %v381
  %v1633 = vunpack.c.h.b16 %v381
  %v1634 = vunpack.c.l.b16 %v382
  %v1635 = vunpack.c.h.b16 %v382
  %v1636 = vunpack.c.l.b16 %v383
  %v1637 = vunpack.c.h.b16 %v383
  %v1638 = vunpack.c.l.b16 %v384
  %v1639 = vunpack.c.h.b16 %v384
  %v1640 = vunpack.c.l.b16 %v385
  %v1641 = vunpack.c.h.b16 %v385
  %v1642 = vunpack.c.l.b16 %v386
  %v1643 = vunpack.c.h.b16 %v386
  %v1644 = vunpack.c.l.b16 %v387
  %v1645 = vunpack.c.h.b16 %v387
  %v1646 = vunpack.c.l.b16 %v388
  %v1647 = vunpack.c.h.b16 %v388
  %v1648 = vunpack.c.l.b16 %v389
  %v1649 = vunpack.c.h.b16 %v389
  %v1650 = vunpack.c.l.b16 %v390
  %v1651 = vunpack.c.h.b16 %v390
  %v1652 = vunpack.c.l.b16 %v391
  %v1653 = vunpack.c.h.b16 %v391
  %v1654 = vunpack.c.l.b16 %v392
  %v1655 = vunpack.c.h.b16 %v392
  %v1656 = vunpack.c.l.b16 %v393
  %v1657 = vunpack.c.h.b16 %v393
  %v1658 = vunpack.c.l.b16 %v394
  %v1659 = vunpack.c.h.b16 %v394
  %v1660 = vunpack.c.l.b16 %v395
  %v1661 = vunpack.c.h.b16 %v395
  %v1662 = vunpack.c.l.b16 %v396
  %v1663 = vunpack.c.h.b16 %v396
  %v1664 = vunpack.c.l.b16 %v397
  %v1665 = vunpack.c.h.b16 %v397
  %v1666 = vunpack.c.l.b16 %v398
  %v1667 = vunpack.c.h.b16 %v398
  %v1668 = vunpack.c.l.b16 %v399
  %v1669 = vunpack.c.h.b16 %v399
  %v1670 = vunpack.c.l.b16 %v400
  %v1671 = vunpack.c.h.b16 %v400
  %v1672 = vunpack.c.l.b16 %v401
  %v1673 = vunpack.c.h.b16 %v401
  %v1674 = vunpack.c.l.b16 %v402
  %v1675 = vunpack.c.h.b16 %v402
  %v1676 = vunpack.c.l.b16 %v403
  %v1677 = vunpack.c.h.b16 %v403
  %v1678 = vunpack.c.l.b16 %v404
  %v1679 = vunpack.c.h.b16 %v404
  %v1680 = vunpack.c.l.b16 %v405
  %v1681 = vunpack.c.h.b16 %v405
  %v1682 = vunpack.c.l.b16 %v406
  %v1683 = vunpack.c.h.b16 %v406
  %v1684 = vunpack.c.l.b16 %v407
  %v1685 = vunpack.c.h.b16 %v407
  %v1686 = vunpack.c.l.b16 %v408
  %v1687 = vunpack.c.h.b16 %v408
  %v1688 = vunpack.c.l.b16 %v409
  %v1689 = vunpack.c.h.b16 %v409
  %v1690 = vunpack.c.l.b16 %v410
  %v1691 = vunpack.c.h.b16 %v410
  %v1692 = vunpack.c.l.b16 %v411
  %v1693 = vunpack.c.h.b16 %v411
  %v1694 = vunpack.c.l.b16 %v412
  %v1695 = vunpack.c.h.b16 %v412
  %v1696 = vunpack.c.l.b16 %v413
  %v1697 = vunpack.c.h.b16 %v413
  %v1698 = vunpack.c.l.b16 %v414
  %v1699 = vunpack.c.h.b16 %v414
  %v1700 = vunpack.c.l.b16 %v415
  %v1701 = vunpack.c.h.b16 %v415
  %v1702 = vunpack.c.l.b16 %v416
  %v1703 = vunpack.c.h.b16 %v416
  %v1704 = vunpack.c.l.b16 %v417
  %v1705 = vunpack.c.h.b16 %v417
  %v1706 = vunpack.c.l.b16 %v418
  %v1707 = vunpack.c.h.b16 %v418
  %v1708 = vunpack.c.l.b16 %v419
  %v1709 = vunpack.c.h.b16 %v419
  %v1710 = vunpack.c.l.b16 %v420
  %v1711 = vunpack.c.h.b16 %v420
  %v1712 = vunpack.c.l.b16 %v421
  %v1713 = vunpack.c.h.b16 %v421
  %v1714 = vunpack.c.l.b16 %v422
  %v1715 = vunpack.c.h.b16 %v422
  %v1716 = vunpack.c.l.b16 %v423
  %v1717 = vunpack.c.h.b16 %v423
  %v1718 = vunpack.c.l.b16 %v424
  %v1719 = vunpack.c.h.b16 %v424
  %v1720 = vunpack.c.l.b16 %v425
  %v1721 = vunpack.c.h.b16 %v425
  %v1722 = vunpack.c.l.b16 %v426
  %v1723 = vunpack.c.h.b16 %v426
  %v1724 = vunpack.c.l.b16 %v427
  %v1725 = vunpack.c.h.b16 %v427
  %v1726 = vunpack.c.l.b16 %v428
  %v1727 = vunpack.c.h.b16 %v428
  %v1728 = vunpack.c.l.b16 %v429
  %v1729 = vunpack.c.h.b16 %v429
  %v1730 = vunpack.c.l.b16 %v430
  %v1731 = vunpack.c.h.b16 %v430
  %v1732 = vunpack.c.l.b16 %v431
  %v1733 = vunpack.c.h.b16 %v431
  %v1734 = vunpack.c.l.b16 %v432
  %v1735 = vunpack.c.h.b16 %v432
  %v1736 = vunpack.c.l.b16 %v433
  %v1737 = vunpack.c.h.b16 %v433
  %v1738 = vunpack.c.l.b16 %v434
  %v1739 = vunpack.c.h.b16 %v434
  %v1740 = vunpack.c.l.b16 %v435
  %v1741 = vunpack.c.h.b16 %v435
  %v1742 = vunpack.c.l.b16 %v436
  %v1743 = vunpack.c.h.b16 %v436
  %v1744 = vunpack.c.l.b16 %v437
  %v1745 = vunpack.c.h.b16 %v437
  %v1746 = vunpack.c.l.b16 %v438
  %v1747 = vunpack.c.h.b16 %v438
  %v1748 = vunpack.c.l.b16 %v439
  %v1749 = vunpack.c.h.b16 %v439
  %v1750 = vunpack.c.l.b16 %v440
  %v1751 = vunpack.c.h.b16 %v440
  %v1752 = vunpack.c.l.b16 %v441
  %v1753 = vunpack.c.h.b16 %v441
  %v1754 = vunpack.c.l.b16 %v442
  %v1755 = vunpack.c.h.b16 %v442
  %v1756 = vunpack.c.l.b16 %v443
  %v1757 = vunpack.c.h.b16 %v443
  %v1758 = vunpack.c.l.b16 %v444
  %v1759 = vunpack.c.h.b16 %v444
  %v1760 = vunpack.c.l.b16 %v445
  %v1761 = vunpack.c.h.b16 %v445
  %v1762 = vpack.c.b16 %v934, %v930
  %v1763 = vpack.c.b16 %v935, %v931
  %v1764 = vpack.c.b16 %v936, %v932
  %v1765 = vpack.c.b16 %v937, %v933
  %v1766 = vpack.c.b16 %v942, %v938
  %v1767 = vpack.c.b16 %v943, %v939
  %v1768 = vpack.c.b16 %v944, %v940
  %v1769 = vpack.c.b16 %v945, %v941
  %v1770 = vpack.c.b16 %v950, %v946
  %v1771 = vpack.c.b16 %v951, %v947
  %v1772 = vpack.c.b16 %v952, %v948
  %v1773 = vpack.c.b16 %v953, %v949
  %v1774 = vpack.c.b16 %v958, %v954
  %v1775 = vpack.c.b16 %v959, %v955
  %v1776 = vpack.c.b16 %v960, %v956
  %v1777 = vpack.c.b16 %v961, %v957
  %v1778 = vpack.c.b16 %v966, %v962
  %v1779 = vpack.c.b16 %v967, %v963
  %v1780 = vpack.c.b16 %v968, %v964
  %v1781 = vpack.c.b16 %v969, %v965
  %v1782 = vpack.c.b16 %v974, %v970
  %v1783 = vpack.c.b16 %v975, %v971
  %v1784 = vpack.c.b16 %v976, %v972
  %v1785 = vpack.c.b16 %v977, %v973
  %v1786 = vpack.c.b16 %v982, %v978
  %v1787 = vpack.c.b16 %v983, %v979
  %v1788 = vpack.c.b16 %v984, %v980
  %v1789 = vpack.c.b16 %v985, %v981
  %v1790 = vpack.c.b16 %v990, %v986
  %v1791 = vpack.c.b16 %v991, %v987
  %v1792 = vpack.c.b16 %v992, %v988
  %v1793 = vpack.c.b16 %v993, %v989
  %v1794 = vpack.c.b16 %v998, %v994
  %v1795 = vpack.c.b16 %v999, %v995
  %v1796 = vpack.c.b16 %v1000, %v996
  %v1797 = vpack.c.b16 %v1001, %v997
  %v1798 = vpack.c.b16 %v1006, %v1002
  %v1799 = vpack.c.b16 %v1007, %v1003
  %v1800 = vpack.c.b16 %v1008, %v1004
  %v1801 = vpack.c.b16 %v1009, %v1005
  %v1802 = vpack.c.b16 %v1014, %v1010
  %v1803 = vpack.c.b16 %v1015, %v1011
  %v1804 = vpack.c.b16 %v1016, %v1012
  %v1805 = vpack.c.b16 %v1017, %v1013
  %v1806 = vpack.c.b16 %v1022, %v1018
  %v1807 = vpack.c.b16 %v1023, %v1019
  %v1808 = vpack.c.b16 %v1024, %v1020
  %v1809 = vpack.c.b16 %v1025, %v1021
  %v1810 = vpack.c.b16 %v1030, %v1026
  %v1811 = vpack.c.b16 %v1031, %v1027
  %v1812 = vpack.c.b16 %v1032, %v1028
  %v1813 = vpack.c.b16 %v1033, %v1029
  %v1814 = vpack.c.b16 %v1038, %v1034
  %v1815 = vpack.c.b16 %v1039, %v1035
  %v1816 = vpack.c.b16 %v1040, %v1036
  %v1817 = vpack.c.b16 %v1041, %v1037
  %v1818 = vpack.c.b16 %v1046, %v1042
  %v1819 = vpack.c.b16 %v1047, %v1043
  %v1820 = vpack.c.b16 %v1048, %v1044
  %v1821 = vpack.c.b16 %v1049, %v1045
  %v1822 = vpack.c.b16 %v1054, %v1050
  %v1823 = vpack.c.b16 %v1055, %v1051
  %v1824 = vpack.c.b16 %v1056, %v1052
  %v1825 = vpack.c.b16 %v1057, %v1053
  %v1826 = vpack.c.b16 %v1062, %v1058
  %v1827 = vpack.c.b16 %v1063, %v1059
  %v1828 = vpack.c.b16 %v1064, %v1060
  %v1829 = vpack.c.b16 %v1065, %v1061
  %v1830 = vpack.c.b16 %v1070, %v1066
  %v1831 = vpack.c.b16 %v1071, %v1067
  %v1832 = vpack.c.b16 %v1072, %v1068
  %v1833 = vpack.c.b16 %v1073, %v1069
  %v1834 = vpack.c.b16 %v1078, %v1074
  %v1835 = vpack.c.b16 %v1079, %v1075
  %v1836 = vpack.c.b16 %v1080, %v1076
  %v1837 = vpack.c.b16 %v1081, %v1077
  %v1838 = vpack.c.b16 %v1086, %v1082
  %v1839 = vpack.c.b16 %v1087, %v1083
  %v1840 = vpack.c.b16 %v1088, %v1084
  %v1841 = vpack.c.b16 %v1089, %v1085
  %v1842 = vpack.c.b16 %v1094, %v1090
  %v1843 = vpack.c.b16 %v1095, %v1091
  %v1844 = vpack.c.b16 %v1096, %v1092
  %v1845 = vpack.c.b16 %v1097, %v1093
  %v1846 = vpack.c.b16 %v1102, %v1098
  %v1847 = vpack.c.b16 %v1103, %v1099
  %v1848 = vpack.c.b16 %v1104, %v1100
  %v1849 = vpack.c.b16 %v1105, %v1101
  %v1850 = vpack.c.b16 %v1110, %v1106
  %v1851 = vpack.c.b16 %v1111, %v1107
  %v1852 = vpack.c.b16 %v1112, %v1108
  %v1853 = vpack.c.b16 %v1113, %v1109
  %v1854 = vpack.c.b16 %v1118, %v1114
  %v1855 = vpack.c.b16 %v1119, %v1115
  %v1856 = vpack.c.b16 %v1120, %v1116
  %v1857 = vpack.c.b16 %v1121, %v1117
  %v1858 = vpack.c.b16 %v1126, %v1122
  %v1859 = vpack.c.b16 %v1127, %v1123
  %v1860 = vpack.c.b16 %v1128, %v1124
  %v1861 = vpack.c.b16 %v1129, %v1125
  %v1862 = vpack.c.b16 %v1134, %v1130
  %v1863 = vpack.c.b16 %v1135, %v1131
  %v1864 = vpack.c.b16 %v1136, %v1132
  %v1865 = vpack.c.b16 %v1137, %v1133
  %v1866 = vpack.c.b16 %v1142, %v1138
  %v1867 = vpack.c.b16 %v1143, %v1139
  %v1868 = vpack.c.b16 %v1144, %v1140
  %v1869 = vpack.c.b16 %v1145, %v1141
  %v1870 = vpack.c.b16 %v1150, %v1146
  %v1871 = vpack.c.b16 %v1151, %v1147
  %v1872 = vpack.c.b16 %v1152, %v1148
  %v1873 = vpack.c.b16 %v1153, %v1149
  %v1874 = vpack.c.b16 %v1158, %v1154
  %v1875 = vpack.c.b16 %v1159, %v1155
  %v1876 = vpack.c.b16 %v1160, %v1156
  %v1877 = vpack.c.b16 %v1161, %v1157
  %v1878 = vpack.c.b16 %v1166, %v1162
  %v1879 = vpack.c.b16 %v1167, %v1163
  %v1880 = vpack.c.b16 %v1168, %v1164
  %v1881 = vpack.c.b16 %v1169, %v1165
  %v1882 = vpack.c.b16 %v1174, %v1170
  %v1883 = vpack.c.b16 %v1175, %v1171
  %v1884 = vpack.c.b16 %v1176, %v1172
  %v1885 = vpack.c.b16 %v1177, %v1173
  %v1886 = vpack.c.b16 %v1182, %v1178
  %v1887 = vpack.c.b16 %v1183, %v1179
  %v1888 = vpack.c.b16 %v1184, %v1180
  %v1889 = vpack.c.b16 %v1185, %v1181
  %v1890 = vpack.c.b16 %v1190, %v1186
  %v1891 = vpack.c.b16 %v1191, %v1187
  %v1892 = vpack.c.b16 %v1192, %v1188
  %v1893 = vpack.c.b16 %v1193, %v1189
  %v1894 = vpack.c.b16 %v1198, %v1194
  %v1895 = vpack.c.b16 %v1199, %v1195
  %v1896 = vpack.c.b16 %v1200, %v1196
  %v1897 = vpack.c.b16 %v1201, %v1197
  %v1898 = vpack.c.b16 %v1206, %v1202
  %v1899 = vpack.c.b16 %v1207, %v1203
  %v1900 = vpack.c.b16 %v1208, %v1204
  %v1901 = vpack.c.b16 %v1209, %v1205
  %v1902 = vpack.c.b16 %v1214, %v1210
  %v1903 = vpack.c.b16 %v1215, %v1211
  %v1904 = vpack.c.b16 %v1216, %v1212
  %v1905 = vpack.c.b16 %v1217, %v1213
  %v1906 = vpack.c.b16 %v1222, %v1218
  %v1907 = vpack.c.b16 %v1223, %v1219
  %v1908 = vpack.c.b16 %v1224, %v1220
  %v1909 = vpack.c.b16 %v1225, %v1221
  %v1910 = vpack.c.b16 %v1230, %v1226
  %v1911 = vpack.c.b16 %v1231, %v1227
  %v1912 = vpack.c.b16 %v1232, %v1228
  %v1913 = vpack.c.b16 %v1233, %v1229
  %v1914 = vpack.c.b16 %v1238, %v1234
  %v1915 = vpack.c.b16 %v1239, %v1235
  %v1916 = vpack.c.b16 %v1240, %v1236
  %v1917 = vpack.c.b16 %v1241, %v1237
  %v1918 = vpack.c.b16 %v1246, %v1242
  %v1919 = vpack.c.b16 %v1247, %v1243
  %v1920 = vpack.c.b16 %v1248, %v1244
  %v1921 = vpack.c.b16 %v1249, %v1245
  %v1922 = vpack.c.b16 %v1254, %v1250
  %v1923 = vpack.c.b16 %v1255, %v1251
  %v1924 = vpack.c.b16 %v1256, %v1252
  %v1925 = vpack.c.b16 %v1257, %v1253
  %v1926 = vpack.c.b16 %v1262, %v1258
  %v1927 = vpack.c.b16 %v1263, %v1259
  %v1928 = vpack.c.b16 %v1264, %v1260
  %v1929 = vpack.c.b16 %v1265, %v1261
  %v1930 = vpack.c.b16 %v1270, %v1266
  %v1931 = vpack.c.b16 %v1271, %v1267
  %v1932 = vpack.c.b16 %v1272, %v1268
  %v1933 = vpack.c.b16 %v1273, %v1269
  %v1934 = vpack.c.b16 %v1278, %v1274
  %v1935 = vpack.c.b16 %v1279, %v1275
  %v1936 = vpack.c.b16 %v1280, %v1276
  %v1937 = vpack.c.b16 %v1281, %v1277
  %v1938 = vpack.c.b16 %v1286, %v1282
  %v1939 = vpack.c.b16 %v1287, %v1283
  %v1940 = vpack.c.b16 %v1288, %v1284
  %v1941 = vpack.c.b16 %v1289, %v1285
  %v1942 = vpack.c.b16 %v1294, %v1290
  %v1943 = vpack.c.b16 %v1295, %v1291
  %v1944 = vpack.c.b16 %v1296, %v1292
  %v1945 = vpack.c.b16 %v1297, %v1293
  %v1946 = vpack.c.b16 %v1302, %v1298
  %v1947 = vpack.c.b16 %v1303, %v1299
  %v1948 = vpack.c.b16 %v1304, %v1300
  %v1949 = vpack.c.b16 %v1305, %v1301
  %v1950 = vpack.c.b16 %v1310, %v1306
  %v1951 = vpack.c.b16 %v1311, %v1307
  %v1952 = vpack.c.b16 %v1312, %v1308
  %v1953 = vpack.c.b16 %v1313, %v1309
  %v1954 = vpack.c.b16 %v1318, %v1314
  %v1955 = vpack.c.b16 %v1319, %v1315
  %v1956 = vpack.c.b16 %v1320, %v1316
  %v1957 = vpack.c.b16 %v1321, %v1317
  %v1958 = vpack.c.b16 %v1326, %v1322
  %v1959 = vpack.c.b16 %v1327, %v1323
  %v1960 = vpack.c.b16 %v1328, %v1324
  %v1961 = vpack.c.b16 %v1329, %v1325
  %v1962 = vpack.c.b16 %v1334, %v1330
  %v1963 = vpack.c.b16 %v1335, %v1331
  %v1964 = vpack.c.b16 %v1336, %v1332
  %v1965 = vpack.c.b16 %v1337, %v1333
  %v1966 = vpack.c.b16 %v1342, %v1338
  %v1967 = vpack.c.b16 %v1343, %v1339
  %v1968 = vpack.c.b16 %v1344, %v1340
  %v1969 = vpack.c.b16 %v1345, %v1341
  %v1970 = vpack.c.b16 %v1350, %v1346
  %v1971 = vpack.c.b16 %v1351, %v1347
  %v1972 = vpack.c.b16 %v1352, %v1348
  %v1973 = vpack.c.b16 %v1353, %v1349
  %v1974 = vpack.c.b16 %v1358, %v1354
  %v1975 = vpack.c.b16 %v1359, %v1355
  %v1976 = vpack.c.b16 %v1360, %v1356
  %v1977 = vpack.c.b16 %v1361, %v1357
  %v1978 = vpack.c.b16 %v1366, %v1362
  %v1979 = vpack.c.b16 %v1367, %v1363
  %v1980 = vpack.c.b16 %v1368, %v1364
  %v1981 = vpack.c.b16 %v1369, %v1365
  %v1982 = vpack.c.b16 %v1374, %v1370
  %v1983 = vpack.c.b16 %v1375, %v1371
  %v1984 = vpack.c.b16 %v1376, %v1372
  %v1985 = vpack.c.b16 %v1377, %v1373
  %v1986 = vpack.c.b16 %v1382, %v1378
  %v1987 = vpack.c.b16 %v1383, %v1379
  %v1988 = vpack.c.b16 %v1384, %v1380
  %v1989 = vpack.c.b16 %v1385, %v1381
  %v1990 = vpack.c.b16 %v1390, %v1386
  %v1991 = vpack.c.b16 %v1391, %v1387
  %v1992 = vpack.c.b16 %v1392, %v1388
  %v1993 = vpack.c.b16 %v1393, %v1389
  %v1994 = vpack.c.b16 %v1398, %v1394
  %v1995 = vpack.c.b16 %v1399, %v1395
  %v1996 = vpack.c.b16 %v1400, %v1396
  %v1997 = vpack.c.b16 %v1401, %v1397
  %v1998 = vpack.c.b16 %v1406, %v1402
  %v1999 = vpack.c.b16 %v1407, %v1403
  %v2000 = vpack.c.b16 %v1408, %v1404
  %v2001 = vpack.c.b16 %v1409, %v1405
  %v2002 = vpack.c.b16 %v1414, %v1410
  %v2003 = vpack.c.b16 %v1415, %v1411
  %v2004 = vpack.c.b16 %v1416, %v1412
  %v2005 = vpack.c.b16 %v1417, %v1413
  %v2006 = vpack.c.b16 %v1422, %v1418
  %v2007 = vpack.c.b16 %v1423, %v1419
  %v2008 = vpack.c.b16 %v1424, %v1420
  %v2009 = vpack.c.b16 %v1425, %v1421
  %v2010 = vpack.c.b16 %v1430, %v1426
  %v2011 = vpack.c.b16 %v1431, %v1427
  %v2012 = vpack.c.b16 %v1432, %v1428
  %v2013 = vpack.c.b16 %v1433, %v1429
  %v2014 = vpack.c.b16 %v1438, %v1434
  %v2015 = vpack.c.b16 %v1439, %v1435
  %v2016 = vpack.c.b16 %v1440, %v1436
  %v2017 = vpack.c.b16 %v1441, %v1437
  %v2018 = vpack.c.b16 %v1446, %v1442
  %v2019 = vpack.c.b16 %v1447, %v1443
  %v2020 = vpack.c.b16 %v1448, %v1444
  %v2021 = vpack.c.b16 %v1449, %v1445
  %v2022 = vpack.c.b16 %v1454, %v1450
  %v2023 = vpack.c.b16 %v1455, %v1451
  %v2024 = vpack.c.b16 %v1456, %v1452
  %v2025 = vpack.c.b16 %v1457, %v1453
  %v2026 = vpack.c.b16 %v1462, %v1458
  %v2027 = vpack.c.b16 %v1463, %v1459
  %v2028 = vpack.c.b16 %v1464, %v1460
  %v2029 = vpack.c.b16 %v1465, %v1461
  %v2030 = vpack.c.b16 %v1470, %v1466
  %v2031 = vpack.c.b16 %v1471, %v1467
  %v2032 = vpack.c.b16 %v1472, %v1468
  %v2033 = vpack.c.b16 %v1473, %v1469
  %v2034 = vpack.c.b16 %v1478, %v1474
  %v2035 = vpack.c.b16 %v1479, %v1475
  %v2036 = vpack.c.b16 %v1480, %v1476
  %v2037 = vpack.c.b16 %v1481, %v1477
  %v2038 = vpack.c.b16 %v1486, %v1482
  %v2039 = vpack.c.b16 %v1487, %v1483
  %v2040 = vpack.c.b16 %v1488, %v1484
  %v2041 = vpack.c.b16 %v1489, %v1485
  %v2042 = vpack.c.b16 %v1494, %v1490
  %v2043 = vpack.c.b16 %v1495, %v1491
  %v2044 = vpack.c.b16 %v1496, %v1492
  %v2045 = vpack.c.b16 %v1497, %v1493
  %v2046 = vpack.c.b16 %v1502, %v1498
  %v2047 = vpack.c.b16 %v1503, %v1499
  %v2048 = vpack.c.b16 %v1504, %v1500
  %v2049 = vpack.c.b16 %v1505, %v1501
  %v2050 = vpack.c.b16 %v1510, %v1506
  %v2051 = vpack.c.b16 %v1511, %v1507
  %v2052 = vpack.c.b16 %v1512, %v1508
  %v2053 = vpack.c.b16 %v1513, %v1509
  %v2054 = vpack.c.b16 %v1518, %v1514
  %v2055 = vpack.c.b16 %v1519, %v1515
  %v2056 = vpack.c.b16 %v1520, %v1516
  %v2057 = vpack.c.b16 %v1521, %v1517
  %v2058 = vpack.c.b16 %v1526, %v1522
  %v2059 = vpack.c.b16 %v1527, %v1523
  %v2060 = vpack.c.b16 %v1528, %v1524
  %v2061 = vpack.c.b16 %v1529, %v1525
  %v2062 = vpack.c.b16 %v1534, %v1530
  %v2063 = vpack.c.b16 %v1535, %v1531
  %v2064 = vpack.c.b16 %v1536, %v1532
  %v2065 = vpack.c.b16 %v1537, %v1533
  %v2066 = vpack.c.b16 %v1542, %v1538
  %v2067 = vpack.c.b16 %v1543, %v1539
  %v2068 = vpack.c.b16 %v1544, %v1540
  %v2069 = vpack.c.b16 %v1545, %v1541
  %v2070 = vpack.c.b16 %v1550, %v1546
  %v2071 = vpack.c.b16 %v1551, %v1547
  %v2072 = vpack.c.b16 %v1552, %v1548
  %v2073 = vpack.c.b16 %v1553, %v1549
  %v2074 = vpack.c.b16 %v1558, %v1554
  %v2075 = vpack.c.b16 %v1559, %v1555
  %v2076 = vpack.c.b16 %v1560, %v1556
  %v2077 = vpack.c.b16 %v1561, %v1557
  %v2078 = vpack.c.b16 %v1566, %v1562
  %v2079 = vpack.c.b16 %v1567, %v1563
  %v2080 = vpack.c.b16 %v1568, %v1564
  %v2081 = vpack.c.b16 %v1569, %v1565
  %v2082 = vpack.c.b16 %v1574, %v1570
  %v2083 = vpack.c.b16 %v1575, %v1571
  %v2084 = vpack.c.b16 %v1576, %v1572
  %v2085 = vpack.c.b16 %v1577, %v1573
  %v2086 = vpack.c.b16 %v1582, %v1578
  %v2087 = vpack.c.b16 %v1583, %v1579
  %v2088 = vpack.c.b16 %v1584, %v1580
  %v2089 = vpack.c.b16 %v1585, %v1581
  %v2090 = vpack.c.b16 %v1590, %v1586
  %v2091 = vpack.c.b16 %v1591, %v1587
  %v2092 = vpack.c.b16 %v1592, %v1588
  %v2093 = vpack.c.b16 %v1593, %v1589
  %v2094 = vpack.c.b16 %v1598, %v1594
  %v2095 = vpack.c.b16 %v1599, %v1595
  %v2096 = vpack.c.b16 %v1600, %v1596
  %v2097 = vpack.c.b16 %v1601, %v1597
  %v2098 = vpack.c.b16 %v1606, %v1602
  %v2099 = vpack.c.b16 %v1607, %v1603
  %v2100 = vpack.c.b16 %v1608, %v1604
  %v2101 = vpack.c.b16 %v1609, %v1605
  %v2102 = vpack.c.b16 %v1614, %v1610
  %v2103 = vpack.c.b16 %v1615, %v1611
  %v2104 = vpack.c.b16 %v1616, %v1612
  %v2105 = vpack.c.b16 %v1617, %v1613
  %v2106 = vpack.c.b16 %v1622, %v1618
  %v2107 = vpack.c.b16 %v1623, %v1619
  %v2108 = vpack.c.b16 %v1624, %v1620
  %v2109 = vpack.c.b16 %v1625, %v1621
  %v2110 = vpack.c.b16 %v1630, %v1626
  %v2111 = vpack.c.b16 %v1631, %v1627
  %v2112 = vpack.c.b16 %v1632, %v1628
  %v2113 = vpack.c.b16 %v1633, %v1629
  %v2114 = vpack.c.b16 %v1638, %v1634
  %v2115 = vpack.c.b16 %v1639, %v1635
  %v2116 = vpack.c.b16 %v1640, %v1636
  %v2117 = vpack.c.b16 %v1641, %v1637
  %v2118 = vpack.c.b16 %v1646, %v1642
  %v2119 = vpack.c.b16 %v1647, %v1643
  %v2120 = vpack.c.b16 %v1648, %v1644
  %v2121 = vpack.c.b16 %v1649, %v1645
  %v2122 = vpack.c.b16 %v1654, %v1650
  %v2123 = vpack.c.b16 %v1655, %v1651
  %v2124 = vpack.c.b16 %v1656, %v1652
  %v2125 = vpack.c.b16 %v1657, %v1653
  %v2126 = vpack.c.b16 %v1662, %v1658
  %v2127 = vpack.c.b16 %v1663, %v1659
  %v2128 = vpack.c.b16 %v1664, %v1660
  %v2129 = vpack.c.b16 %v1665, %v1661
  %v2130 = vpack.c.b16 %v1670, %v1666
  %v2131 = vpack.c.b16 %v1671, %v1667
  %v2132 = vpack.c.b16 %v1672, %v1668
  %v2133 = vpack.c.b16 %v1673, %v1669
  %v2134 = vpack.c.b16 %v1678, %v1674
  %v2135 = vpack.c.b16 %v1679, %v1675
  %v2136 = vpack.c.b16 %v1680, %v1676
  %v2137 = vpack.c.b16 %v1681, %v1677
  %v2138 = vpack.c.b16 %v1686, %v1682
  %v2139 = vpack.c.b16 %v1687, %v1683
  %v2140 = vpack.c.b16 %v1688, %v1684
  %v2141 = vpack.c.b16 %v1689, %v1685
  %v2142 = vpack.c.b16 %v1694, %v1690
  %v2143 = vpack.c.b16 %v1695, %v1691
  %v2144 = vpack.c.b16 %v1696, %v1692
  %v2145 = vpack.c.b16 %v1697, %v1693
  %v2146 = vpack.c.b16 %v1702, %v1698
  %v2147 = vpack.c.b16 %v1703, %v1699
  %v2148 = vpack.c.b16 %v1704, %v1700
  %v2149 = vpack.c.b16 %v1705, %v1701
  %v2150 = vpack.c.b16 %v1710, %v1706
  %v2151 = vpack.c.b16 %v1711, %v1707
  %v2152 = vpack.c.b16 %v1712, %v1708
  %v2153 = vpack.c.b16 %v1713, %v1709
  %v2154 = vpack.c.b16 %v1718, %v1714
  %v2155 = vpack.c.b16 %v1719, %v1715
  %v2156 = vpack.c.b16 %v1720, %v1716
  %v2157 = vpack.c.b16 %v1721, %v1717
  %v2158 = vpack.c.b16 %v1726, %v1722
  %v2159 = vpack.c.b16 %v1727, %v1723
  %v2160 = vpack.c.b16 %v1728, %v1724
  %v2161 = vpack.c.b16 %v1729, %v1725
  %v2162 = vpack.c.b16 %v1734, %v1730
  %v2163 = vpack.c.b16 %v1735, %v1731
  %v2164 = vpack.c.b16 %v1736, %v1732
  %v2165 = vpack.c.b16 %v1737, %v1733
  %v2166 = vpack.c.b16 %v1742, %v1738
  %v2167 = vpack.c.b16 %v1743, %v1739
  %v2168 = vpack.c.b16 %v1744, %v1740
  %v2169 = vpack.c.b16 %v1745, %v1741
  %v2170 = vpack.c.b16 %v1750, %v1746
  %v2171 = vpack.c.b16 %v1751, %v1747
  %v2172 = vpack.c.b16 %v1752, %v1748
  %v2173 = vpack.c.b16 %v1753, %v1749
  %v2174 = vpack.c.b16 %v1758, %v1754
  %v2175 = vpack.c.b16 %v1759, %v1755
  %v2176 = vpack.c.b16 %v1760, %v1756
  %v2177 = vpack.c.b16 %v1761, %v1757
  %2594 = vmatprep.subr.bf16.mxu0 %v1763
  %2595 = vmatpush1.bf16.msra.mxu0 %v1762
  %2596 = vmatprep.subr.bf16.mxu0 %v1767
  %2597 = vmatpush1.bf16.msra.mxu0 %v1766
  %2598 = vmatprep.subr.bf16.mxu0 %v1771
  %2599 = vmatpush1.bf16.msra.mxu0 %v1770
  %2600 = vmatprep.subr.bf16.mxu0 %v1775
  %2601 = vmatpush1.bf16.msra.mxu0 %v1774
  %2602 = vmatprep.subr.bf16.mxu0 %v1779
  %2603 = vmatpush1.bf16.msra.mxu0 %v1778
  %2604 = vmatprep.subr.bf16.mxu0 %v1783
  %2605 = vmatpush1.bf16.msra.mxu0 %v1782
  %2606 = vmatprep.subr.bf16.mxu0 %v1787
  %2607 = vmatpush1.bf16.msra.mxu0 %v1786
  %2608 = vmatprep.subr.bf16.mxu0 %v1791
  %2609 = vmatpush1.bf16.msra.mxu0 %v1790
  %2610 = vmatprep.subr.bf16.mxu0 %v1795
  %2611 = vmatpush1.bf16.msra.mxu0 %v1794
  %2612 = vmatprep.subr.bf16.mxu0 %v1799
  %2613 = vmatpush1.bf16.msra.mxu0 %v1798
  %2614 = vmatprep.subr.bf16.mxu0 %v1803
  %2615 = vmatpush1.bf16.msra.mxu0 %v1802
  %2616 = vmatprep.subr.bf16.mxu0 %v1807
  %2617 = vmatpush1.bf16.msra.mxu0 %v1806
  %2618 = vmatprep.subr.bf16.mxu0 %v1811
  %2619 = vmatpush1.bf16.msra.mxu0 %v1810
  %2620 = vmatprep.subr.bf16.mxu0 %v1815
  %2621 = vmatpush1.bf16.msra.mxu0 %v1814
  %2622 = vmatprep.subr.bf16.mxu0 %v1819
  %2623 = vmatpush1.bf16.msra.mxu0 %v1818
  %2624 = vmatprep.subr.bf16.mxu0 %v1823
  %2625 = vmatpush1.bf16.msra.mxu0 %v1822
  %2626 = vmatprep.mubr.bf16.mxu0 %v489
  %2627 = vmatmul.mubr.bf16.gmra.mrb[0].mxu0 %v488
  %v2628 = vpop.f32.mrb[0].mxu0
  %v2629 = vadd.f32 %v451, %v2628
  %v2630 = vpop.f32.mrb[0].mxu0
  %v2631 = vadd.f32 %v455, %v2630
  %v2632 = vpop.f32.mrb[0].mxu0
  %v2633 = vpop.f32.mrb[0].mxu0
  %2634 = vdwg.mxu0
  %2635 = vmatprep.subr.bf16.mxu0 %v1827
  %2636 = vmatpush1.bf16.msra.mxu0 %v1826
  %2637 = vmatprep.subr.bf16.mxu0 %v1831
  %2638 = vmatpush1.bf16.msra.mxu0 %v1830
  %2639 = vmatprep.subr.bf16.mxu0 %v1835
  %2640 = vmatpush1.bf16.msra.mxu0 %v1834
  %2641 = vmatprep.subr.bf16.mxu0 %v1839
  %2642 = vmatpush1.bf16.msra.mxu0 %v1838
  %2643 = vmatprep.subr.bf16.mxu0 %v1843
  %2644 = vmatpush1.bf16.msra.mxu0 %v1842
  %2645 = vmatprep.subr.bf16.mxu0 %v1847
  %2646 = vmatpush1.bf16.msra.mxu0 %v1846
  %2647 = vmatprep.subr.bf16.mxu0 %v1851
  %2648 = vmatpush1.bf16.msra.mxu0 %v1850
  %2649 = vmatprep.subr.bf16.mxu0 %v1855
  %2650 = vmatpush1.bf16.msra.mxu0 %v1854
  %2651 = vmatprep.subr.bf16.mxu0 %v1859
  %2652 = vmatpush1.bf16.msra.mxu0 %v1858
  %2653 = vmatprep.subr.bf16.mxu0 %v1863
  %2654 = vmatpush1.bf16.msra.mxu0 %v1862
  %2655 = vmatprep.subr.bf16.mxu0 %v1867
  %2656 = vmatpush1.bf16.msra.mxu0 %v1866
  %2657 = vmatprep.subr.bf16.mxu0 %v1871
  %2658 = vmatpush1.bf16.msra.mxu0 %v1870
  %2659 = vmatprep.subr.bf16.mxu0 %v1875
  %2660 = vmatpush1.bf16.msra.mxu0 %v1874
  %2661 = vmatprep.subr.bf16.mxu0 %v1879
  %2662 = vmatpush1.bf16.msra.mxu0 %v1878
  %2663 = vmatprep.subr.bf16.mxu0 %v1883
  %2664 = vmatpush1.bf16.msra.mxu0 %v1882
  %2665 = vmatprep.subr.bf16.mxu0 %v1887
  %2666 = vmatpush1.bf16.msra.mxu0 %v1886
  %2667 = vmatprep.mubr.bf16.mxu0 %v491
  %2668 = vmatmul.mubr.bf16.gmra.mrb[0].mxu0 %v490
  %v2669 = vpop.f32.mrb[0].mxu0
  %v2670 = vadd.f32 %v2629, %v2669
  %v2671 = vpop.f32.mrb[0].mxu0
  %v2672 = vadd.f32 %v2631, %v2671
  %v2673 = vpop.f32.mrb[0].mxu0
  %v2674 = vpop.f32.mrb[0].mxu0
  %2675 = vdwg.mxu0
  %2676 = vmatprep.subr.bf16.mxu0 %v1891
  %2677 = vmatpush1.bf16.msra.mxu0 %v1890
  %2678 = vmatprep.subr.bf16.mxu0 %v1895
  %2679 = vmatpush1.bf16.msra.mxu0 %v1894
  %2680 = vmatprep.subr.bf16.mxu0 %v1899
  %2681 = vmatpush1.bf16.msra.mxu0 %v1898
  %2682 = vmatprep.subr.bf16.mxu0 %v1903
  %2683 = vmatpush1.bf16.msra.mxu0 %v1902
  %2684 = vmatprep.subr.bf16.mxu0 %v1907
  %2685 = vmatpush1.bf16.msra.mxu0 %v1906
  %2686 = vmatprep.subr.bf16.mxu0 %v1911
  %2687 = vmatpush1.bf16.msra.mxu0 %v1910
  %2688 = vmatprep.subr.bf16.mxu0 %v1915
  %2689 = vmatpush1.bf16.msra.mxu0 %v1914
  %2690 = vmatprep.subr.bf16.mxu0 %v1919
  %2691 = vmatpush1.bf16.msra.mxu0 %v1918
  %2692 = vmatprep.subr.bf16.mxu0 %v1923
  %2693 = vmatpush1.bf16.msra.mxu0 %v1922
  %2694 = vmatprep.subr.bf16.mxu0 %v1927
  %2695 = vmatpush1.bf16.msra.mxu0 %v1926
  %2696 = vmatprep.subr.bf16.mxu0 %v1931
  %2697 = vmatpush1.bf16.msra.mxu0 %v1930
  %2698 = vmatprep.subr.bf16.mxu0 %v1935
  %2699 = vmatpush1.bf16.msra.mxu0 %v1934
  %2700 = vmatprep.subr.bf16.mxu0 %v1939
  %2701 = vmatpush1.bf16.msra.mxu0 %v1938
  %2702 = vmatprep.subr.bf16.mxu0 %v1943
  %2703 = vmatpush1.bf16.msra.mxu0 %v1942
  %2704 = vmatprep.subr.bf16.mxu0 %v1947
  %2705 = vmatpush1.bf16.msra.mxu0 %v1946
  %2706 = vmatprep.subr.bf16.mxu0 %v1951
  %2707 = vmatpush1.bf16.msra.mxu0 %v1950
  %2708 = vmatprep.mubr.bf16.mxu0 %v493
  %2709 = vmatmul.mubr.bf16.gmra.mrb[0].mxu0 %v492
  %v2710 = vpop.f32.mrb[0].mxu0
  %v2711 = vadd.f32 %v2670, %v2710
  %v2712 = vpop.f32.mrb[0].mxu0
  %v2713 = vadd.f32 %v2672, %v2712
  %v2714 = vpop.f32.mrb[0].mxu0
  %v2715 = vpop.f32.mrb[0].mxu0
  %2716 = vdwg.mxu0
  %2717 = vmatprep.subr.bf16.mxu0 %v1955
  %2718 = vmatpush1.bf16.msra.mxu0 %v1954
  %2719 = vmatprep.subr.bf16.mxu0 %v1959
  %2720 = vmatpush1.bf16.msra.mxu0 %v1958
  %2721 = vmatprep.subr.bf16.mxu0 %v1963
  %2722 = vmatpush1.bf16.msra.mxu0 %v1962
  %2723 = vmatprep.subr.bf16.mxu0 %v1967
  %2724 = vmatpush1.bf16.msra.mxu0 %v1966
  %2725 = vmatprep.subr.bf16.mxu0 %v1971
  %2726 = vmatpush1.bf16.msra.mxu0 %v1970
  %2727 = vmatprep.subr.bf16.mxu0 %v1975
  %2728 = vmatpush1.bf16.msra.mxu0 %v1974
  %2729 = vmatprep.subr.bf16.mxu0 %v1979
  %2730 = vmatpush1.bf16.msra.mxu0 %v1978
  %2731 = vmatprep.subr.bf16.mxu0 %v1983
  %2732 = vmatpush1.bf16.msra.mxu0 %v1982
  %2733 = vmatprep.subr.bf16.mxu0 %v1987
  %2734 = vmatpush1.bf16.msra.mxu0 %v1986
  %2735 = vmatprep.subr.bf16.mxu0 %v1991
  %2736 = vmatpush1.bf16.msra.mxu0 %v1990
  %2737 = vmatprep.subr.bf16.mxu0 %v1995
  %2738 = vmatpush1.bf16.msra.mxu0 %v1994
  %2739 = vmatprep.subr.bf16.mxu0 %v1999
  %2740 = vmatpush1.bf16.msra.mxu0 %v1998
  %2741 = vmatprep.subr.bf16.mxu0 %v2003
  %2742 = vmatpush1.bf16.msra.mxu0 %v2002
  %2743 = vmatprep.subr.bf16.mxu0 %v2007
  %2744 = vmatpush1.bf16.msra.mxu0 %v2006
  %2745 = vmatprep.subr.bf16.mxu0 %v2011
  %2746 = vmatpush1.bf16.msra.mxu0 %v2010
  %2747 = vmatprep.subr.bf16.mxu0 %v2015
  %2748 = vmatpush1.bf16.msra.mxu0 %v2014
  %2749 = vmatprep.mubr.bf16.mxu0 %v495
  %2750 = vmatmul.mubr.bf16.gmra.mrb[0].mxu0 %v494
  %v2751 = vpop.f32.mrb[0].mxu0
  %v2752 = vadd.f32 %v2711, %v2751
  %v2753 = vpop.f32.mrb[0].mxu0
  %v2754 = vadd.f32 %v2713, %v2753
  %v2755 = vpop.f32.mrb[0].mxu0
  %v2756 = vpop.f32.mrb[0].mxu0
  %2757 = vdwg.mxu0
  %2758 = vmatprep.subr.bf16.mxu0 %v2019
  %2759 = vmatpush1.bf16.msra.mxu0 %v2018
  %2760 = vmatprep.subr.bf16.mxu0 %v2023
  %2761 = vmatpush1.bf16.msra.mxu0 %v2022
  %2762 = vmatprep.subr.bf16.mxu0 %v2027
  %2763 = vmatpush1.bf16.msra.mxu0 %v2026
  %2764 = vmatprep.subr.bf16.mxu0 %v2031
  %2765 = vmatpush1.bf16.msra.mxu0 %v2030
  %2766 = vmatprep.subr.bf16.mxu0 %v2035
  %2767 = vmatpush1.bf16.msra.mxu0 %v2034
  %2768 = vmatprep.subr.bf16.mxu0 %v2039
  %2769 = vmatpush1.bf16.msra.mxu0 %v2038
  %2770 = vmatprep.subr.bf16.mxu0 %v2043
  %2771 = vmatpush1.bf16.msra.mxu0 %v2042
  %2772 = vmatprep.subr.bf16.mxu0 %v2047
  %2773 = vmatpush1.bf16.msra.mxu0 %v2046
  %2774 = vmatprep.subr.bf16.mxu0 %v2051
  %2775 = vmatpush1.bf16.msra.mxu0 %v2050
  %2776 = vmatprep.subr.bf16.mxu0 %v2055
  %2777 = vmatpush1.bf16.msra.mxu0 %v2054
  %2778 = vmatprep.subr.bf16.mxu0 %v2059
  %2779 = vmatpush1.bf16.msra.mxu0 %v2058
  %2780 = vmatprep.subr.bf16.mxu0 %v2063
  %2781 = vmatpush1.bf16.msra.mxu0 %v2062
  %2782 = vmatprep.subr.bf16.mxu0 %v2067
  %2783 = vmatpush1.bf16.msra.mxu0 %v2066
  %2784 = vmatprep.subr.bf16.mxu0 %v2071
  %2785 = vmatpush1.bf16.msra.mxu0 %v2070
  %2786 = vmatprep.subr.bf16.mxu0 %v2075
  %2787 = vmatpush1.bf16.msra.mxu0 %v2074
  %2788 = vmatprep.subr.bf16.mxu0 %v2079
  %2789 = vmatpush1.bf16.msra.mxu0 %v2078
  %2790 = vmatprep.mubr.bf16.mxu0 %v497
  %2791 = vmatmul.mubr.bf16.gmra.mrb[0].mxu0 %v496
  %v2792 = vpop.f32.mrb[0].mxu0
  %v2793 = vadd.f32 %v2752, %v2792
  %v2794 = vpop.f32.mrb[0].mxu0
  %v2795 = vadd.f32 %v2754, %v2794
  %v2796 = vpop.f32.mrb[0].mxu0
  %v2797 = vpop.f32.mrb[0].mxu0
  %2798 = vdwg.mxu0
  %2799 = vmatprep.subr.bf16.mxu0 %v2083
  %2800 = vmatpush1.bf16.msra.mxu0 %v2082
  %2801 = vmatprep.subr.bf16.mxu0 %v2087
  %2802 = vmatpush1.bf16.msra.mxu0 %v2086
  %2803 = vmatprep.subr.bf16.mxu0 %v2091
  %2804 = vmatpush1.bf16.msra.mxu0 %v2090
  %2805 = vmatprep.subr.bf16.mxu0 %v2095
  %2806 = vmatpush1.bf16.msra.mxu0 %v2094
  %2807 = vmatprep.subr.bf16.mxu0 %v2099
  %2808 = vmatpush1.bf16.msra.mxu0 %v2098
  %2809 = vmatprep.subr.bf16.mxu0 %v2103
  %2810 = vmatpush1.bf16.msra.mxu0 %v2102
  %2811 = vmatprep.subr.bf16.mxu0 %v2107
  %2812 = vmatpush1.bf16.msra.mxu0 %v2106
  %2813 = vmatprep.subr.bf16.mxu0 %v2111
  %2814 = vmatpush1.bf16.msra.mxu0 %v2110
  %2815 = vmatprep.subr.bf16.mxu0 %v2115
  %2816 = vmatpush1.bf16.msra.mxu0 %v2114
  %2817 = vmatprep.subr.bf16.mxu0 %v2119
  %2818 = vmatpush1.bf16.msra.mxu0 %v2118
  %2819 = vmatprep.subr.bf16.mxu0 %v2123
  %2820 = vmatpush1.bf16.msra.mxu0 %v2122
  %2821 = vmatprep.subr.bf16.mxu0 %v2127
  %2822 = vmatpush1.bf16.msra.mxu0 %v2126
  %2823 = vmatprep.subr.bf16.mxu0 %v2131
  %2824 = vmatpush1.bf16.msra.mxu0 %v2130
  %2825 = vmatprep.subr.bf16.mxu0 %v2135
  %2826 = vmatpush1.bf16.msra.mxu0 %v2134
  %2827 = vmatprep.subr.bf16.mxu0 %v2139
  %2828 = vmatpush1.bf16.msra.mxu0 %v2138
  %2829 = vmatprep.subr.bf16.mxu0 %v2143
  %2830 = vmatpush1.bf16.msra.mxu0 %v2142
  %2831 = vmatprep.mubr.bf16.mxu0 %v499
  %2832 = vmatmul.mubr.bf16.gmra.mrb[0].mxu0 %v498
  %v2833 = vpop.f32.mrb[0].mxu0
  %v2834 = vadd.f32 %v2793, %v2833
  %v2835 = vpop.f32.mrb[0].mxu0
  %v2836 = vadd.f32 %v2795, %v2835
  %v2837 = vpop.f32.mrb[0].mxu0
  %v2838 = vpop.f32.mrb[0].mxu0
  %2839 = vdwg.mxu0
  %2840 = vmatprep.subr.bf16.mxu0 %v2147
  %2841 = vmatpush1.bf16.msra.mxu0 %v2146
  %2842 = vmatprep.subr.bf16.mxu0 %v2151
  %2843 = vmatpush1.bf16.msra.mxu0 %v2150
  %2844 = vmatprep.subr.bf16.mxu0 %v2155
  %2845 = vmatpush1.bf16.msra.mxu0 %v2154
  %2846 = vmatprep.subr.bf16.mxu0 %v2159
  %2847 = vmatpush1.bf16.msra.mxu0 %v2158
  %2848 = vmatprep.subr.bf16.mxu0 %v2163
  %2849 = vmatpush1.bf16.msra.mxu0 %v2162
  %2850 = vmatprep.subr.bf16.mxu0 %v2167
  %2851 = vmatpush1.bf16.msra.mxu0 %v2166
  %2852 = vmatprep.subr.bf16.mxu0 %v2171
  %2853 = vmatpush1.bf16.msra.mxu0 %v2170
  %2854 = vmatprep.subr.bf16.mxu0 %v2175
  %2855 = vmatpush1.bf16.msra.mxu0 %v2174
  %2856 = vmatprep.subr.bf16.mxu0 0
  %2857 = vmatpush1.bf16.msra.mxu0 0
  %2858 = vmatprep.subr.bf16.mxu0 0
  %2859 = vmatpush1.bf16.msra.mxu0 0
  %2860 = vmatprep.subr.bf16.mxu0 0
  %2861 = vmatpush1.bf16.msra.mxu0 0
  %2862 = vmatprep.subr.bf16.mxu0 0
  %2863 = vmatpush1.bf16.msra.mxu0 0
  %2864 = vmatprep.subr.bf16.mxu0 0
  %2865 = vmatpush1.bf16.msra.mxu0 0
  %2866 = vmatprep.subr.bf16.mxu0 0
  %2867 = vmatpush1.bf16.msra.mxu0 0
  %2868 = vmatprep.subr.bf16.mxu0 0
  %2869 = vmatpush1.bf16.msra.mxu0 0
  %2870 = vmatprep.subr.bf16.mxu0 0
  %2871 = vmatpush1.bf16.msra.mxu0 0
  %2872 = vmatprep.mubr.bf16.mxu0 0
  %2873 = vmatmul.mubr.bf16.gmra.mrb[0].mxu0 %v500
  %v2874 = vpop.f32.mrb[0].mxu0
  %v2875 = vadd.f32 %v2834, %v2874
  %v2876 = vpop.f32.mrb[0].mxu0
  %v2877 = vadd.f32 %v2836, %v2876
  %v2878 = vpop.f32.mrb[0].mxu0
  %v2879 = vpop.f32.mrb[0].mxu0
  %2880 = vdwg.mxu0
  %2881 = vmatprep.subr.bf16.mxu0 %v1765
  %2882 = vmatpush1.bf16.msra.mxu0 %v1764
  %2883 = vmatprep.subr.bf16.mxu0 %v1769
  %2884 = vmatpush1.bf16.msra.mxu0 %v1768
  %2885 = vmatprep.subr.bf16.mxu0 %v1773
  %2886 = vmatpush1.bf16.msra.mxu0 %v1772
  %2887 = vmatprep.subr.bf16.mxu0 %v1777
  %2888 = vmatpush1.bf16.msra.mxu0 %v1776
  %2889 = vmatprep.subr.bf16.mxu0 %v1781
  %2890 = vmatpush1.bf16.msra.mxu0 %v1780
  %2891 = vmatprep.subr.bf16.mxu0 %v1785
  %2892 = vmatpush1.bf16.msra.mxu0 %v1784
  %2893 = vmatprep.subr.bf16.mxu0 %v1789
  %2894 = vmatpush1.bf16.msra.mxu0 %v1788
  %2895 = vmatprep.subr.bf16.mxu0 %v1793
  %2896 = vmatpush1.bf16.msra.mxu0 %v1792
  %2897 = vmatprep.subr.bf16.mxu0 %v1797
  %2898 = vmatpush1.bf16.msra.mxu0 %v1796
  %2899 = vmatprep.subr.bf16.mxu0 %v1801
  %2900 = vmatpush1.bf16.msra.mxu0 %v1800
  %2901 = vmatprep.subr.bf16.mxu0 %v1805
  %2902 = vmatpush1.bf16.msra.mxu0 %v1804
  %2903 = vmatprep.subr.bf16.mxu0 %v1809
  %2904 = vmatpush1.bf16.msra.mxu0 %v1808
  %2905 = vmatprep.subr.bf16.mxu0 %v1813
  %2906 = vmatpush1.bf16.msra.mxu0 %v1812
  %2907 = vmatprep.subr.bf16.mxu0 %v1817
  %2908 = vmatpush1.bf16.msra.mxu0 %v1816
  %2909 = vmatprep.subr.bf16.mxu0 %v1821
  %2910 = vmatpush1.bf16.msra.mxu0 %v1820
  %2911 = vmatprep.subr.bf16.mxu0 %v1825
  %2912 = vmatpush1.bf16.msra.mxu0 %v1824
  %2913 = vmatprep.mubr.bf16.mxu0 %v489
  %2914 = vmatmul.mubr.bf16.gmra.mrb[0].mxu0 %v488
  %v2915 = vpop.f32.mrb[0].mxu0
  %v2916 = vadd.f32 %v459, %v2915
  %v2917 = vpop.f32.mrb[0].mxu0
  %v2918 = vadd.f32 %v463, %v2917
  %v2919 = vpop.f32.mrb[0].mxu0
  %v2920 = vpop.f32.mrb[0].mxu0
  %2921 = vdwg.mxu0
  %2922 = vmatprep.subr.bf16.mxu0 %v1829
  %2923 = vmatpush1.bf16.msra.mxu0 %v1828
  %2924 = vmatprep.subr.bf16.mxu0 %v1833
  %2925 = vmatpush1.bf16.msra.mxu0 %v1832
  %2926 = vmatprep.subr.bf16.mxu0 %v1837
  %2927 = vmatpush1.bf16.msra.mxu0 %v1836
  %2928 = vmatprep.subr.bf16.mxu0 %v1841
  %2929 = vmatpush1.bf16.msra.mxu0 %v1840
  %2930 = vmatprep.subr.bf16.mxu0 %v1845
  %2931 = vmatpush1.bf16.msra.mxu0 %v1844
  %2932 = vmatprep.subr.bf16.mxu0 %v1849
  %2933 = vmatpush1.bf16.msra.mxu0 %v1848
  %2934 = vmatprep.subr.bf16.mxu0 %v1853
  %2935 = vmatpush1.bf16.msra.mxu0 %v1852
  %2936 = vmatprep.subr.bf16.mxu0 %v1857
  %2937 = vmatpush1.bf16.msra.mxu0 %v1856
  %2938 = vmatprep.subr.bf16.mxu0 %v1861
  %2939 = vmatpush1.bf16.msra.mxu0 %v1860
  %2940 = vmatprep.subr.bf16.mxu0 %v1865
  %2941 = vmatpush1.bf16.msra.mxu0 %v1864
  %2942 = vmatprep.subr.bf16.mxu0 %v1869
  %2943 = vmatpush1.bf16.msra.mxu0 %v1868
  %2944 = vmatprep.subr.bf16.mxu0 %v1873
  %2945 = vmatpush1.bf16.msra.mxu0 %v1872
  %2946 = vmatprep.subr.bf16.mxu0 %v1877
  %2947 = vmatpush1.bf16.msra.mxu0 %v1876
  %2948 = vmatprep.subr.bf16.mxu0 %v1881
  %2949 = vmatpush1.bf16.msra.mxu0 %v1880
  %2950 = vmatprep.subr.bf16.mxu0 %v1885
  %2951 = vmatpush1.bf16.msra.mxu0 %v1884
  %2952 = vmatprep.subr.bf16.mxu0 %v1889
  %2953 = vmatpush1.bf16.msra.mxu0 %v1888
  %2954 = vmatprep.mubr.bf16.mxu0 %v491
  %2955 = vmatmul.mubr.bf16.gmra.mrb[0].mxu0 %v490
  %v2956 = vpop.f32.mrb[0].mxu0
  %v2957 = vadd.f32 %v2916, %v2956
  %v2958 = vpop.f32.mrb[0].mxu0
  %v2959 = vadd.f32 %v2918, %v2958
  %v2960 = vpop.f32.mrb[0].mxu0
  %v2961 = vpop.f32.mrb[0].mxu0
  %2962 = vdwg.mxu0
  %2963 = vmatprep.subr.bf16.mxu0 %v1893
  %2964 = vmatpush1.bf16.msra.mxu0 %v1892
  %2965 = vmatprep.subr.bf16.mxu0 %v1897
  %2966 = vmatpush1.bf16.msra.mxu0 %v1896
  %2967 = vmatprep.subr.bf16.mxu0 %v1901
  %2968 = vmatpush1.bf16.msra.mxu0 %v1900
  %2969 = vmatprep.subr.bf16.mxu0 %v1905
  %2970 = vmatpush1.bf16.msra.mxu0 %v1904
  %2971 = vmatprep.subr.bf16.mxu0 %v1909
  %2972 = vmatpush1.bf16.msra.mxu0 %v1908
  %2973 = vmatprep.subr.bf16.mxu0 %v1913
  %2974 = vmatpush1.bf16.msra.mxu0 %v1912
  %2975 = vmatprep.subr.bf16.mxu0 %v1917
  %2976 = vmatpush1.bf16.msra.mxu0 %v1916
  %2977 = vmatprep.subr.bf16.mxu0 %v1921
  %2978 = vmatpush1.bf16.msra.mxu0 %v1920
  %2979 = vmatprep.subr.bf16.mxu0 %v1925
  %2980 = vmatpush1.bf16.msra.mxu0 %v1924
  %2981 = vmatprep.subr.bf16.mxu0 %v1929
  %2982 = vmatpush1.bf16.msra.mxu0 %v1928
  %2983 = vmatprep.subr.bf16.mxu0 %v1933
  %2984 = vmatpush1.bf16.msra.mxu0 %v1932
  %2985 = vmatprep.subr.bf16.mxu0 %v1937
  %2986 = vmatpush1.bf16.msra.mxu0 %v1936
  %2987 = vmatprep.subr.bf16.mxu0 %v1941
  %2988 = vmatpush1.bf16.msra.mxu0 %v1940
  %2989 = vmatprep.subr.bf16.mxu0 %v1945
  %2990 = vmatpush1.bf16.msra.mxu0 %v1944
  %2991 = vmatprep.subr.bf16.mxu0 %v1949
  %2992 = vmatpush1.bf16.msra.mxu0 %v1948
  %2993 = vmatprep.subr.bf16.mxu0 %v1953
  %2994 = vmatpush1.bf16.msra.mxu0 %v1952
  %2995 = vmatprep.mubr.bf16.mxu0 %v493
  %2996 = vmatmul.mubr.bf16.gmra.mrb[0].mxu0 %v492
  %v2997 = vpop.f32.mrb[0].mxu0
  %v2998 = vadd.f32 %v2957, %v2997
  %v2999 = vpop.f32.mrb[0].mxu0
  %v3000 = vadd.f32 %v2959, %v2999
  %v3001 = vpop.f32.mrb[0].mxu0
  %v3002 = vpop.f32.mrb[0].mxu0
  %3003 = vdwg.mxu0
  %3004 = vmatprep.subr.bf16.mxu0 %v1957
  %3005 = vmatpush1.bf16.msra.mxu0 %v1956
  %3006 = vmatprep.subr.bf16.mxu0 %v1961
  %3007 = vmatpush1.bf16.msra.mxu0 %v1960
  %3008 = vmatprep.subr.bf16.mxu0 %v1965
  %3009 = vmatpush1.bf16.msra.mxu0 %v1964
  %3010 = vmatprep.subr.bf16.mxu0 %v1969
  %3011 = vmatpush1.bf16.msra.mxu0 %v1968
  %3012 = vmatprep.subr.bf16.mxu0 %v1973
  %3013 = vmatpush1.bf16.msra.mxu0 %v1972
  %3014 = vmatprep.subr.bf16.mxu0 %v1977
  %3015 = vmatpush1.bf16.msra.mxu0 %v1976
  %3016 = vmatprep.subr.bf16.mxu0 %v1981
  %3017 = vmatpush1.bf16.msra.mxu0 %v1980
  %3018 = vmatprep.subr.bf16.mxu0 %v1985
  %3019 = vmatpush1.bf16.msra.mxu0 %v1984
  %3020 = vmatprep.subr.bf16.mxu0 %v1989
  %3021 = vmatpush1.bf16.msra.mxu0 %v1988
  %3022 = vmatprep.subr.bf16.mxu0 %v1993
  %3023 = vmatpush1.bf16.msra.mxu0 %v1992
  %3024 = vmatprep.subr.bf16.mxu0 %v1997
  %3025 = vmatpush1.bf16.msra.mxu0 %v1996
  %3026 = vmatprep.subr.bf16.mxu0 %v2001
  %3027 = vmatpush1.bf16.msra.mxu0 %v2000
  %3028 = vmatprep.subr.bf16.mxu0 %v2005
  %3029 = vmatpush1.bf16.msra.mxu0 %v2004
  %3030 = vmatprep.subr.bf16.mxu0 %v2009
  %3031 = vmatpush1.bf16.msra.mxu0 %v2008
  %3032 = vmatprep.subr.bf16.mxu0 %v2013
  %3033 = vmatpush1.bf16.msra.mxu0 %v2012
  %3034 = vmatprep.subr.bf16.mxu0 %v2017
  %3035 = vmatpush1.bf16.msra.mxu0 %v2016
  %3036 = vmatprep.mubr.bf16.mxu0 %v495
  %3037 = vmatmul.mubr.bf16.gmra.mrb[0].mxu0 %v494
  %v3038 = vpop.f32.mrb[0].mxu0
  %v3039 = vadd.f32 %v2998, %v3038
  %v3040 = vpop.f32.mrb[0].mxu0
  %v3041 = vadd.f32 %v3000, %v3040
  %v3042 = vpop.f32.mrb[0].mxu0
  %v3043 = vpop.f32.mrb[0].mxu0
  %3044 = vdwg.mxu0
  %3045 = vmatprep.subr.bf16.mxu0 %v2021
  %3046 = vmatpush1.bf16.msra.mxu0 %v2020
  %3047 = vmatprep.subr.bf16.mxu0 %v2025
  %3048 = vmatpush1.bf16.msra.mxu0 %v2024
  %3049 = vmatprep.subr.bf16.mxu0 %v2029
  %3050 = vmatpush1.bf16.msra.mxu0 %v2028
  %3051 = vmatprep.subr.bf16.mxu0 %v2033
  %3052 = vmatpush1.bf16.msra.mxu0 %v2032
  %3053 = vmatprep.subr.bf16.mxu0 %v2037
  %3054 = vmatpush1.bf16.msra.mxu0 %v2036
  %3055 = vmatprep.subr.bf16.mxu0 %v2041
  %3056 = vmatpush1.bf16.msra.mxu0 %v2040
  %3057 = vmatprep.subr.bf16.mxu0 %v2045
  %3058 = vmatpush1.bf16.msra.mxu0 %v2044
  %3059 = vmatprep.subr.bf16.mxu0 %v2049
  %3060 = vmatpush1.bf16.msra.mxu0 %v2048
  %3061 = vmatprep.subr.bf16.mxu0 %v2053
  %3062 = vmatpush1.bf16.msra.mxu0 %v2052
  %3063 = vmatprep.subr.bf16.mxu0 %v2057
  %3064 = vmatpush1.bf16.msra.mxu0 %v2056
  %3065 = vmatprep.subr.bf16.mxu0 %v2061
  %3066 = vmatpush1.bf16.msra.mxu0 %v2060
  %3067 = vmatprep.subr.bf16.mxu0 %v2065
  %3068 = vmatpush1.bf16.msra.mxu0 %v2064
  %3069 = vmatprep.subr.bf16.mxu0 %v2069
  %3070 = vmatpush1.bf16.msra.mxu0 %v2068
  %3071 = vmatprep.subr.bf16.mxu0 %v2073
  %3072 = vmatpush1.bf16.msra.mxu0 %v2072
  %3073 = vmatprep.subr.bf16.mxu0 %v2077
  %3074 = vmatpush1.bf16.msra.mxu0 %v2076
  %3075 = vmatprep.subr.bf16.mxu0 %v2081
  %3076 = vmatpush1.bf16.msra.mxu0 %v2080
  %3077 = vmatprep.mubr.bf16.mxu0 %v497
  %3078 = vmatmul.mubr.bf16.gmra.mrb[0].mxu0 %v496
  %v3079 = vpop.f32.mrb[0].mxu0
  %v3080 = vadd.f32 %v3039, %v3079
  %v3081 = vpop.f32.mrb[0].mxu0
  %v3082 = vadd.f32 %v3041, %v3081
  %v3083 = vpop.f32.mrb[0].mxu0
  %v3084 = vpop.f32.mrb[0].mxu0
  %3085 = vdwg.mxu0
  %3086 = vmatprep.subr.bf16.mxu0 %v2085
  %3087 = vmatpush1.bf16.msra.mxu0 %v2084
  %3088 = vmatprep.subr.bf16.mxu0 %v2089
  %3089 = vmatpush1.bf16.msra.mxu0 %v2088
  %3090 = vmatprep.subr.bf16.mxu0 %v2093
  %3091 = vmatpush1.bf16.msra.mxu0 %v2092
  %3092 = vmatprep.subr.bf16.mxu0 %v2097
  %3093 = vmatpush1.bf16.msra.mxu0 %v2096
  %3094 = vmatprep.subr.bf16.mxu0 %v2101
  %3095 = vmatpush1.bf16.msra.mxu0 %v2100
  %3096 = vmatprep.subr.bf16.mxu0 %v2105
  %3097 = vmatpush1.bf16.msra.mxu0 %v2104
  %3098 = vmatprep.subr.bf16.mxu0 %v2109
  %3099 = vmatpush1.bf16.msra.mxu0 %v2108
  %3100 = vmatprep.subr.bf16.mxu0 %v2113
  %3101 = vmatpush1.bf16.msra.mxu0 %v2112
  %3102 = vmatprep.subr.bf16.mxu0 %v2117
  %3103 = vmatpush1.bf16.msra.mxu0 %v2116
  %3104 = vmatprep.subr.bf16.mxu0 %v2121
  %3105 = vmatpush1.bf16.msra.mxu0 %v2120
  %3106 = vmatprep.subr.bf16.mxu0 %v2125
  %3107 = vmatpush1.bf16.msra.mxu0 %v2124
  %3108 = vmatprep.subr.bf16.mxu0 %v2129
  %3109 = vmatpush1.bf16.msra.mxu0 %v2128
  %3110 = vmatprep.subr.bf16.mxu0 %v2133
  %3111 = vmatpush1.bf16.msra.mxu0 %v2132
  %3112 = vmatprep.subr.bf16.mxu0 %v2137
  %3113 = vmatpush1.bf16.msra.mxu0 %v2136
  %3114 = vmatprep.subr.bf16.mxu0 %v2141
  %3115 = vmatpush1.bf16.msra.mxu0 %v2140
  %3116 = vmatprep.subr.bf16.mxu0 %v2145
  %3117 = vmatpush1.bf16.msra.mxu0 %v2144
  %3118 = vmatprep.mubr.bf16.mxu0 %v499
  %3119 = vmatmul.mubr.bf16.gmra.mrb[0].mxu0 %v498
  %v3120 = vpop.f32.mrb[0].mxu0
  %v3121 = vadd.f32 %v3080, %v3120
  %v3122 = vpop.f32.mrb[0].mxu0
  %v3123 = vadd.f32 %v3082, %v3122
  %v3124 = vpop.f32.mrb[0].mxu0
  %v3125 = vpop.f32.mrb[0].mxu0
  %3126 = vdwg.mxu0
  %3127 = vmatprep.subr.bf16.mxu0 %v2149
  %3128 = vmatpush1.bf16.msra.mxu0 %v2148
  %3129 = vmatprep.subr.bf16.mxu0 %v2153
  %3130 = vmatpush1.bf16.msra.mxu0 %v2152
  %3131 = vmatprep.subr.bf16.mxu0 %v2157
  %3132 = vmatpush1.bf16.msra.mxu0 %v2156
  %3133 = vmatprep.subr.bf16.mxu0 %v2161
  %3134 = vmatpush1.bf16.msra.mxu0 %v2160
  %3135 = vmatprep.subr.bf16.mxu0 %v2165
  %3136 = vmatpush1.bf16.msra.mxu0 %v2164
  %3137 = vmatprep.subr.bf16.mxu0 %v2169
  %3138 = vmatpush1.bf16.msra.mxu0 %v2168
  %3139 = vmatprep.subr.bf16.mxu0 %v2173
  %3140 = vmatpush1.bf16.msra.mxu0 %v2172
  %3141 = vmatprep.subr.bf16.mxu0 %v2177
  %3142 = vmatpush1.bf16.msra.mxu0 %v2176
  %3143 = vmatprep.subr.bf16.mxu0 0
  %3144 = vmatpush1.bf16.msra.mxu0 0
  %3145 = vmatprep.subr.bf16.mxu0 0
  %3146 = vmatpush1.bf16.msra.mxu0 0
  %3147 = vmatprep.subr.bf16.mxu0 0
  %3148 = vmatpush1.bf16.msra.mxu0 0
  %3149 = vmatprep.subr.bf16.mxu0 0
  %3150 = vmatpush1.bf16.msra.mxu0 0
  %3151 = vmatprep.subr.bf16.mxu0 0
  %3152 = vmatpush1.bf16.msra.mxu0 0
  %3153 = vmatprep.subr.bf16.mxu0 0
  %3154 = vmatpush1.bf16.msra.mxu0 0
  %3155 = vmatprep.subr.bf16.mxu0 0
  %3156 = vmatpush1.bf16.msra.mxu0 0
  %3157 = vmatprep.subr.bf16.mxu0 0
  %3158 = vmatpush1.bf16.msra.mxu0 0
  %3159 = vmatprep.mubr.bf16.mxu0 0
  %3160 = vmatmul.mubr.bf16.gmra.mrb[0].mxu0 %v500
  %v3161 = vpop.f32.mrb[0].mxu0
  %v3162 = vadd.f32 %v3121, %v3161
  %v3163 = vpop.f32.mrb[0].mxu0
  %v3164 = vadd.f32 %v3123, %v3163
  %v3165 = vpop.f32.mrb[0].mxu0
  %v3166 = vpop.f32.mrb[0].mxu0
  %3167 = vdwg.mxu0
  %v3168 = vmax.f32 %v2875, 0.0
  %v3169 = vmax.f32 %v2877, 0.0
  %v3170 = vmax.f32 %v3162, 0.0
  %v3171 = vmax.f32 %v3164, 0.0
  %v3172 = vpack.c.bf16 %v3168, %v3168
  %v3173 = vpack.c.bf16 %v3169, %v3169
  %v3174 = vpack.c.bf16 %v3170, %v3170
  %v3175 = vpack.c.bf16 %v3171, %v3171
  %v3176 = vld [vmem:[%s3] sm:$0xf]
  %v3177 = vld [vmem:[%s3 + $0x4] sm:$0xf]
  %v3178 = vld [vmem:[%s3 + $0x8] sm:$0xf]
  %v3179 = vld [vmem:[%s3 + $0xc] sm:$0xf]
  %v3180 = vld [vmem:[%s3 + $0x10] sm:$0xf]
  %v3181 = vld [vmem:[%s3 + $0x14] sm:$0xf]
  %v3182 = vld [vmem:[%s3 + $0x18] sm:$0xf]
  %v3183 = vld [vmem:[%s3 + $0x1c] sm:$0xf]
  %v3184 = vld [vmem:[%s3 + $0x20] sm:$0xf]
  %v3185 = vld [vmem:[%s3 + $0x24] sm:$0xf]
  %v3186 = vld [vmem:[%s3 + $0x28] sm:$0xf]
  %v3187 = vld [vmem:[%s3 + $0x2c] sm:$0xf]
  %v3188 = vld [vmem:[%s3 + $0x30] sm:$0xf]
  %v3189 = vld [vmem:[%s3 + $0x34] sm:$0xf]
  %v3190 = vld [vmem:[%s3 + $0x38] sm:$0xf]
  %v3191 = vld [vmem:[%s3 + $0x3c] sm:$0xf]
  %v3192 = vld [vmem:[%s3 + $0x40] sm:$0xf]
  %v3193 = vld [vmem:[%s3 + $0x44] sm:$0xf]
  %v3194 = vld [vmem:[%s3 + $0x48] sm:$0xf]
  %v3195 = vld [vmem:[%s3 + $0x4c] sm:$0xf]
  %v3196 = vld [vmem:[%s3 + $0x50] sm:$0xf]
  %v3197 = vld [vmem:[%s3 + $0x54] sm:$0xf]
  %v3198 = vld [vmem:[%s3 + $0x58] sm:$0xf]
  %v3199 = vld [vmem:[%s3 + $0x5c] sm:$0xf]
  %v3200 = vld [vmem:[%s3 + $0x60] sm:$0xf]
  %v3201 = vld [vmem:[%s3 + $0x64] sm:$0xf]
  %v3202 = vld [vmem:[%s3 + $0x68] sm:$0xf]
  %v3203 = vld [vmem:[%s3 + $0x6c] sm:$0xf]
  %v3204 = vld [vmem:[%s3 + $0x70] sm:$0xf]
  %v3205 = vld [vmem:[%s3 + $0x74] sm:$0xf]
  %v3206 = vld [vmem:[%s3 + $0x78] sm:$0xf]
  %v3207 = vld [vmem:[%s3 + $0x7c] sm:$0xf]
  %v3208 = vld [vmem:[%s3 + $0x80] sm:$0xf]
  %v3209 = vld [vmem:[%s3 + $0x84] sm:$0xf]
  %v3210 = vld [vmem:[%s3 + $0x88] sm:$0xf]
  %v3211 = vld [vmem:[%s3 + $0x8c] sm:$0xf]
  %v3212 = vld [vmem:[%s3 + $0x90] sm:$0xf]
  %v3213 = vld [vmem:[%s3 + $0x94] sm:$0xf]
  %v3214 = vld [vmem:[%s3 + $0x98] sm:$0xf]
  %v3215 = vld [vmem:[%s3 + $0x9c] sm:$0xf]
  %v3216 = vld [vmem:[%s3 + $0xa0] sm:$0xf]
  %v3217 = vld [vmem:[%s3 + $0xa4] sm:$0xf]
  %v3218 = vld [vmem:[%s3 + $0xa8] sm:$0xf]
  %v3219 = vld [vmem:[%s3 + $0xac] sm:$0xf]
  %v3220 = vld [vmem:[%s3 + $0xb0] sm:$0xf]
  %v3221 = vld [vmem:[%s3 + $0xb4] sm:$0xf]
  %v3222 = vld [vmem:[%s3 + $0xb8] sm:$0xf]
  %v3223 = vld [vmem:[%s3 + $0xbc] sm:$0xf]
  %v3224 = vld [vmem:[%s3 + $0xc0] sm:$0xf]
  %v3225 = vld [vmem:[%s3 + $0xc4] sm:$0xf]
  %v3226 = vld [vmem:[%s3 + $0xc8] sm:$0xf]
  %v3227 = vld [vmem:[%s3 + $0xcc] sm:$0xf]
  %v3228 = vld [vmem:[%s3 + $0xd0] sm:$0xf]
  %v3229 = vld [vmem:[%s3 + $0xd4] sm:$0xf]
  %v3230 = vld [vmem:[%s3 + $0xd8] sm:$0xf]
  %v3231 = vld [vmem:[%s3 + $0xdc] sm:$0xf]
  %v3232 = vld [vmem:[%s3 + $0xe0] sm:$0xf]
  %v3233 = vld [vmem:[%s3 + $0xe4] sm:$0xf]
  %v3234 = vld [vmem:[%s3 + $0xe8] sm:$0xf]
  %v3235 = vld [vmem:[%s3 + $0xec] sm:$0xf]
  %v3236 = vld [vmem:[%s3 + $0xf0] sm:$0xf]
  %v3237 = vld [vmem:[%s3 + $0xf4] sm:$0xf]
  %v3238 = vld [vmem:[%s3 + $0xf8] sm:$0xf]
  %v3239 = vld [vmem:[%s3 + $0xfc] sm:$0xf]
  %v3240 = vld [vmem:[%s4] sm:$0x1]
  %v3242 = vlaneseq
  %v3243 = vshrl.u32 %v3242, 7
  %v3244 = vsub.s32 0, %v3243
  %v3245 = vrot.slane %v3240, %v3244
  %v3311 = vunpack.c.l.b16 %v3176
  %v3312 = vunpack.c.l.b16 %v3177
  %v3313 = vunpack.c.l.b16 %v3178
  %v3314 = vunpack.c.l.b16 %v3179
  %v3315 = vunpack.c.l.b16 %v3180
  %v3316 = vunpack.c.l.b16 %v3181
  %v3317 = vunpack.c.l.b16 %v3182
  %v3318 = vunpack.c.l.b16 %v3183
  %v3319 = vunpack.c.l.b16 %v3184
  %v3320 = vunpack.c.l.b16 %v3185
  %v3321 = vunpack.c.l.b16 %v3186
  %v3322 = vunpack.c.l.b16 %v3187
  %v3323 = vunpack.c.l.b16 %v3188
  %v3324 = vunpack.c.l.b16 %v3189
  %v3325 = vunpack.c.l.b16 %v3190
  %v3326 = vunpack.c.l.b16 %v3191
  %v3327 = vunpack.c.l.b16 %v3192
  %v3328 = vunpack.c.l.b16 %v3193
  %v3329 = vunpack.c.l.b16 %v3194
  %v3330 = vunpack.c.l.b16 %v3195
  %v3331 = vunpack.c.l.b16 %v3196
  %v3332 = vunpack.c.l.b16 %v3197
  %v3333 = vunpack.c.l.b16 %v3198
  %v3334 = vunpack.c.l.b16 %v3199
  %v3335 = vunpack.c.l.b16 %v3200
  %v3336 = vunpack.c.l.b16 %v3201
  %v3337 = vunpack.c.l.b16 %v3202
  %v3338 = vunpack.c.l.b16 %v3203
  %v3339 = vunpack.c.l.b16 %v3204
  %v3340 = vunpack.c.l.b16 %v3205
  %v3341 = vunpack.c.l.b16 %v3206
  %v3342 = vunpack.c.l.b16 %v3207
  %v3343 = vunpack.c.l.b16 %v3208
  %v3344 = vunpack.c.l.b16 %v3209
  %v3345 = vunpack.c.l.b16 %v3210
  %v3346 = vunpack.c.l.b16 %v3211
  %v3347 = vunpack.c.l.b16 %v3212
  %v3348 = vunpack.c.l.b16 %v3213
  %v3349 = vunpack.c.l.b16 %v3214
  %v3350 = vunpack.c.l.b16 %v3215
  %v3351 = vunpack.c.l.b16 %v3216
  %v3352 = vunpack.c.l.b16 %v3217
  %v3353 = vunpack.c.l.b16 %v3218
  %v3354 = vunpack.c.l.b16 %v3219
  %v3355 = vunpack.c.l.b16 %v3220
  %v3356 = vunpack.c.l.b16 %v3221
  %v3357 = vunpack.c.l.b16 %v3222
  %v3358 = vunpack.c.l.b16 %v3223
  %v3359 = vunpack.c.l.b16 %v3224
  %v3360 = vunpack.c.l.b16 %v3225
  %v3361 = vunpack.c.l.b16 %v3226
  %v3362 = vunpack.c.l.b16 %v3227
  %v3363 = vunpack.c.l.b16 %v3228
  %v3364 = vunpack.c.l.b16 %v3229
  %v3365 = vunpack.c.l.b16 %v3230
  %v3366 = vunpack.c.l.b16 %v3231
  %v3367 = vunpack.c.l.b16 %v3232
  %v3368 = vunpack.c.l.b16 %v3233
  %v3369 = vunpack.c.l.b16 %v3234
  %v3370 = vunpack.c.l.b16 %v3235
  %v3371 = vunpack.c.l.b16 %v3236
  %v3372 = vunpack.c.l.b16 %v3237
  %v3373 = vunpack.c.l.b16 %v3238
  %v3374 = vunpack.c.l.b16 %v3239
  %v3375 = vpack.c.b16 %v3312, %v3311
  %v3376 = vpack.c.b16 %v3314, %v3313
  %v3377 = vpack.c.b16 %v3316, %v3315
  %v3378 = vpack.c.b16 %v3318, %v3317
  %v3379 = vpack.c.b16 %v3320, %v3319
  %v3380 = vpack.c.b16 %v3322, %v3321
  %v3381 = vpack.c.b16 %v3324, %v3323
  %v3382 = vpack.c.b16 %v3326, %v3325
  %v3383 = vpack.c.b16 %v3328, %v3327
  %v3384 = vpack.c.b16 %v3330, %v3329
  %v3385 = vpack.c.b16 %v3332, %v3331
  %v3386 = vpack.c.b16 %v3334, %v3333
  %v3387 = vpack.c.b16 %v3336, %v3335
  %v3388 = vpack.c.b16 %v3338, %v3337
  %v3389 = vpack.c.b16 %v3340, %v3339
  %v3390 = vpack.c.b16 %v3342, %v3341
  %v3391 = vpack.c.b16 %v3344, %v3343
  %v3392 = vpack.c.b16 %v3346, %v3345
  %v3393 = vpack.c.b16 %v3348, %v3347
  %v3394 = vpack.c.b16 %v3350, %v3349
  %v3395 = vpack.c.b16 %v3352, %v3351
  %v3396 = vpack.c.b16 %v3354, %v3353
  %v3397 = vpack.c.b16 %v3356, %v3355
  %v3398 = vpack.c.b16 %v3358, %v3357
  %v3399 = vpack.c.b16 %v3360, %v3359
  %v3400 = vpack.c.b16 %v3362, %v3361
  %v3401 = vpack.c.b16 %v3364, %v3363
  %v3402 = vpack.c.b16 %v3366, %v3365
  %v3403 = vpack.c.b16 %v3368, %v3367
  %v3404 = vpack.c.b16 %v3370, %v3369
  %v3405 = vpack.c.b16 %v3372, %v3371
  %v3406 = vpack.c.b16 %v3374, %v3373
  %3439 = vmatprep.subr.bf16.mxu0 0
  %3440 = vmatpush1.bf16.msra.mxu0 %v3375
  %3441 = vmatprep.subr.bf16.mxu0 0
  %3442 = vmatpush1.bf16.msra.mxu0 %v3376
  %3443 = vmatprep.subr.bf16.mxu0 0
  %3444 = vmatpush1.bf16.msra.mxu0 %v3377
  %3445 = vmatprep.subr.bf16.mxu0 0
  %3446 = vmatpush1.bf16.msra.mxu0 %v3378
  %3447 = vmatprep.subr.bf16.mxu0 0
  %3448 = vmatpush1.bf16.msra.mxu0 %v3379
  %3449 = vmatprep.subr.bf16.mxu0 0
  %3450 = vmatpush1.bf16.msra.mxu0 %v3380
  %3451 = vmatprep.subr.bf16.mxu0 0
  %3452 = vmatpush1.bf16.msra.mxu0 %v3381
  %3453 = vmatprep.subr.bf16.mxu0 0
  %3454 = vmatpush1.bf16.msra.mxu0 %v3382
  %3455 = vmatprep.subr.bf16.mxu0 0
  %3456 = vmatpush1.bf16.msra.mxu0 %v3383
  %3457 = vmatprep.subr.bf16.mxu0 0
  %3458 = vmatpush1.bf16.msra.mxu0 %v3384
  %3459 = vmatprep.subr.bf16.mxu0 0
  %3460 = vmatpush1.bf16.msra.mxu0 %v3385
  %3461 = vmatprep.subr.bf16.mxu0 0
  %3462 = vmatpush1.bf16.msra.mxu0 %v3386
  %3463 = vmatprep.subr.bf16.mxu0 0
  %3464 = vmatpush1.bf16.msra.mxu0 %v3387
  %3465 = vmatprep.subr.bf16.mxu0 0
  %3466 = vmatpush1.bf16.msra.mxu0 %v3388
  %3467 = vmatprep.subr.bf16.mxu0 0
  %3468 = vmatpush1.bf16.msra.mxu0 %v3389
  %3469 = vmatprep.subr.bf16.mxu0 0
  %3470 = vmatpush1.bf16.msra.mxu0 %v3390
  %3471 = vmatprep.mubr.bf16.mxu0 %v3173
  %3472 = vmatmul.mubr.bf16.gmra.mrb[0].mxu0 %v3172
  %v3473 = vpop.f32.mrb[0].mxu0
  %v3474 = vadd.f32 %v3245, %v3473
  %v3475 = vpop.f32.mrb[0].mxu0
  %v3476 = vpop.f32.mrb[0].mxu0
  %v3477 = vpop.f32.mrb[0].mxu0
  %3478 = vdwg.mxu0
  %3479 = vmatprep.subr.bf16.mxu0 0
  %3480 = vmatpush1.bf16.msra.mxu0 %v3391
  %3481 = vmatprep.subr.bf16.mxu0 0
  %3482 = vmatpush1.bf16.msra.mxu0 %v3392
  %3483 = vmatprep.subr.bf16.mxu0 0
  %3484 = vmatpush1.bf16.msra.mxu0 %v3393
  %3485 = vmatprep.subr.bf16.mxu0 0
  %3486 = vmatpush1.bf16.msra.mxu0 %v3394
  %3487 = vmatprep.subr.bf16.mxu0 0
  %3488 = vmatpush1.bf16.msra.mxu0 %v3395
  %3489 = vmatprep.subr.bf16.mxu0 0
  %3490 = vmatpush1.bf16.msra.mxu0 %v3396
  %3491 = vmatprep.subr.bf16.mxu0 0
  %3492 = vmatpush1.bf16.msra.mxu0 %v3397
  %3493 = vmatprep.subr.bf16.mxu0 0
  %3494 = vmatpush1.bf16.msra.mxu0 %v3398
  %3495 = vmatprep.subr.bf16.mxu0 0
  %3496 = vmatpush1.bf16.msra.mxu0 %v3399
  %3497 = vmatprep.subr.bf16.mxu0 0
  %3498 = vmatpush1.bf16.msra.mxu0 %v3400
  %3499 = vmatprep.subr.bf16.mxu0 0
  %3500 = vmatpush1.bf16.msra.mxu0 %v3401
  %3501 = vmatprep.subr.bf16.mxu0 0
  %3502 = vmatpush1.bf16.msra.mxu0 %v3402
  %3503 = vmatprep.subr.bf16.mxu0 0
  %3504 = vmatpush1.bf16.msra.mxu0 %v3403
  %3505 = vmatprep.subr.bf16.mxu0 0
  %3506 = vmatpush1.bf16.msra.mxu0 %v3404
  %3507 = vmatprep.subr.bf16.mxu0 0
  %3508 = vmatpush1.bf16.msra.mxu0 %v3405
  %3509 = vmatprep.subr.bf16.mxu0 0
  %3510 = vmatpush1.bf16.msra.mxu0 %v3406
  %3511 = vmatprep.mubr.bf16.mxu0 %v3175
  %3512 = vmatmul.mubr.bf16.gmra.mrb[0].mxu0 %v3174
  %v3513 = vpop.f32.mrb[0].mxu0
  %v3514 = vadd.f32 %v3474, %v3513
  %v3515 = vpop.f32.mrb[0].mxu0
  %v3516 = vpop.f32.mrb[0].mxu0
  %v3517 = vpop.f32.mrb[0].mxu0
  %3518 = vdwg.mxu0
  %3519 = vmax.xlane.f32.xlu0 %v3514
  %v3520 = vpop.xlane.xlu0 %3519
  %v3521 = vsub.f32 %v3514, %v3520
  %v3522 = vmul.f32 %v3521, 1.442695
  %v3523 = vpow.pop %v3522
  %3524 = vadd.xlane.f32.xlu0 %v3523
  %v3525 = vpop.xlane.xlu0 %3524
  %v3526 = vlog2.pop %v3525
  %v3527 = vmul.f32 %v3526, 0.6931472
  %3528 = vst [vmem:[%s6] sm:$0xff] %v3514
  %v3529 = vsub.f32 %v3521, %v3527
  %3530 = vst [vmem:[%s5] sm:$0xff] %v3529
  // Predicated region
  $region22: #{fedavg_cnn_forward.5} parent=0 // pred_check
    _
  $region23: #{fedavg_cnn_forward.5} parent=0 // pred_check_branch
    %3532 = sbr.rel (0) target = $region25
  $region24: #{fedavg_cnn_forward.5} parent=0 // pred_region
    _
  $region25: #{fedavg_cnn_forward.5} parent=0 // pred_fallthru
    _
  // Predicated region
  $region26: #{fedavg_cnn_forward.5} parent=0 // pred_check
    _
  $region27: #{fedavg_cnn_forward.5} parent=0 // pred_check_branch
    %3534 = sbr.rel (0) target = $region29
  $region28: #{fedavg_cnn_forward.5} parent=0 // pred_region
    _
  $region29: #{fedavg_cnn_forward.5} parent=0 // pred_fallthru
    _
  // Predicated region
  $region30: #{fedavg_cnn_forward.5} parent=0 // pred_check
    _
  $region31: #{fedavg_cnn_forward.5} parent=0 // pred_check_branch
    %3536 = sbr.rel (0) target = $region33
  $region32: #{fedavg_cnn_forward.5} parent=0 // pred_region
    _
  $region33: #{fedavg_cnn_forward.5} parent=0 // pred_fallthru
    _
  // Predicated region
  $region34: #{fedavg_cnn_forward.5} parent=0 // pred_check
    _
  $region35: #{fedavg_cnn_forward.5} parent=0 // pred_check_branch
    %3538 = sbr.rel (0) target = $region37
  $region36: #{fedavg_cnn_forward.5} parent=0 // pred_region
    _
  $region37: #{fedavg_cnn_forward.5} parent=0 // pred_fallthru
    _

</llo_original>
